<compile_context>
chip_gen: v7x
topology: tpu7x:2x2x1
jax: 0.10.0
libtpu: 0.0.40
codegen_flags: <defaults>
</compile_context>

<pallas_src>
import functools

import jax
import jax.numpy as jnp
import numpy as np
from jax.experimental import pallas as pl
from jax.experimental.pallas import tpu as pltpu


def _residual_block_kernel(x_ref, mask_ref, w1_ref, g1_ref, be1_ref, a_ref,
                           w2_ref, g2_ref, be2_ref, o_ref, *, W, C, P):
    eps = jnp.float32(0.8)
    inv_count = jnp.float32(1.0 / P)

    x = x_ref[...]                                    # (C, P), lane-dense

    def conv3x3(v, w_ref_):
        # 3x3 "same" conv as 9 per-tap matmuls accumulated into a live value.
        # Tap windows are built with XLU lane rolls on the fused (n,h,w) axis;
        # host-precomputed border masks zero both padding positions and roll
        # wraparound. Center tap (t=4) needs no shift and no mask.
        acc = jnp.dot(w_ref_[4], v, preferred_element_type=jnp.float32)
        m = 0
        for di in range(3):
            for dj in range(3):
                if di == 1 and dj == 1:
                    continue
                t = di * 3 + dj
                off = (di - 1) * W + (dj - 1)
                win = pltpu.roll(v, shift=(-off) % P, axis=1)
                win = win * mask_ref[m:m + 1, :]
                acc = acc + jnp.dot(w_ref_[t], win,
                                    preferred_element_type=jnp.float32)
                m += 1
        return acc

    def batchnorm(h, g_ref_, be_ref_):
        # Training-mode BN: one stats pass (sum + sum of squares), biased variance,
        # applied as a single fused scale + shift. eps=0.8 dominates, so the
        # E[x^2] - mean^2 form is numerically safe here.
        s = jnp.sum(h, axis=1, keepdims=True)         # (C, 1)
        sq = jnp.sum(h * h, axis=1, keepdims=True)    # (C, 1)
        mean = s * inv_count
        var = sq * inv_count - mean * mean
        scale = g_ref_[...] * jax.lax.rsqrt(var + eps)
        shift = be_ref_[...] - mean * scale
        return h * scale + shift

    # conv1 (bias cancelled by BN) + BN1 + PReLU
    h1 = conv3x3(x, w1_ref)
    h1 = batchnorm(h1, g1_ref, be1_ref)
    a = a_ref[0]
    h1 = jnp.where(h1 >= 0, h1, a * h1)

    # conv2 + BN2
    h2 = conv3x3(h1, w2_ref)
    h2 = batchnorm(h2, g2_ref, be2_ref)

    # residual add on the unpadded input, lane-dense output store
    o_ref[...] = x + h2


def residual_block_pallas(x_nchw, params):
    """x_nchw: (N, C, H, W) float32. Returns (N, C, H, W) float32."""
    w1, b1, g1, be1, a, w2, b2, g2, be2 = params
    del b1, b2  # conv biases cancel exactly under training-mode BatchNorm
    N, C, H, W = x_nchw.shape
    P = N * H * W

    # NCHW -> (C, N*H*W): channels on sublanes, flattened spatial on the lane axis.
    x2d = jnp.transpose(x_nchw, (1, 0, 2, 3)).reshape(C, P).astype(jnp.float32)

    # PyTorch conv weight (Cout, Cin, 3, 3) -> (9, Cout, Cin); first index is the
    # tap t = di*3 + dj, matching the kernel's tap loop.
    def prep_w(w):
        return jnp.transpose(w, (2, 3, 0, 1)).reshape(9, C, C).astype(jnp.float32)

    # Host-precomputed border-validity masks for the 8 non-center taps, (8, P) f32.
    p_idx = np.arange(P)
    h_idx = (p_idx % (H * W)) // W
    w_idx = p_idx % W
    mask_rows = []
    for di in range(3):
        for dj in range(3):
            if di == 1 and dj == 1:
                continue
            valid = ((h_idx >= 1 - di) & (h_idx <= H - di) &
                     (w_idx >= 1 - dj) & (w_idx <= W - dj))
            mask_rows.append(valid)
    masks = jnp.asarray(np.stack(mask_rows).astype(np.float32))   # (8, P)

    col = lambda v: v.reshape(C, 1).astype(jnp.float32)
    a_smem = jnp.asarray(a, jnp.float32).reshape(1)

    vmem = pl.BlockSpec(memory_space=pltpu.MemorySpace.VMEM)
    smem = pl.BlockSpec(memory_space=pltpu.MemorySpace.SMEM)

    kernel = functools.partial(_residual_block_kernel, W=W, C=C, P=P)

    out2d = pl.pallas_call(
        kernel,
        out_shape=jax.ShapeDtypeStruct((C, P), jnp.float32),
        in_specs=[vmem, vmem, vmem, vmem, vmem, smem, vmem, vmem, vmem],
        out_specs=vmem,
    )(x2d, masks, prep_w(w1), col(g1), col(be1), a_smem,
      prep_w(w2), col(g2), col(be2))

    return jnp.transpose(out2d.reshape(C, N, H, W), (1, 0, 2, 3))


def residual_block_ref(x, params):
    """Pure-JAX NCHW reference (matches PyTorch training-mode forward, incl. biases)."""
    w1, b1, g1, be1, a, w2, b2, g2, be2 = params

    def conv(h, w, b):
        y = jax.lax.conv_general_dilated(
            h, w, window_strides=(1, 1), padding="SAME",
            dimension_numbers=("NCHW", "OIHW", "NCHW"))
        return y + b[None, :, None, None]

    def bn(h, g, be):
        mean = h.mean(axis=(0, 2, 3), keepdims=True)
        var = ((h - mean) ** 2).mean(axis=(0, 2, 3), keepdims=True)
        return ((h - mean) / jnp.sqrt(var + 0.8)
                * g[None, :, None, None] + be[None, :, None, None])

    h = conv(x, w1, b1)
    h = bn(h, g1, be1)
    h = jnp.where(h >= 0, h, a * h)
    h = conv(h, w2, b2)
    h = bn(h, g2, be2)
    return x + h


if __name__ == "__main__":
    N, C, H, W = 2, 4, 16, 16  # in_features = 4
    key = jax.random.PRNGKey(0)
    kx, kw1, kb1, kw2, kb2 = jax.random.split(key, 5)

    x = jax.random.normal(kx, (N, C, H, W), dtype=jnp.float32)

    # Deterministic synthetic parameters (shapes match nn.Conv2d / BatchNorm2d / PReLU).
    w_scale = 1.0 / jnp.sqrt(jnp.float32(C * 9))
    w1 = jax.random.normal(kw1, (C, C, 3, 3), dtype=jnp.float32) * w_scale
    b1 = jax.random.normal(kb1, (C,), dtype=jnp.float32) * 0.1
    w2 = jax.random.normal(kw2, (C, C, 3, 3), dtype=jnp.float32) * w_scale
    b2 = jax.random.normal(kb2, (C,), dtype=jnp.float32) * 0.1
    g1 = jnp.ones((C,), jnp.float32)     # BN1 weight (default init)
    be1 = jnp.zeros((C,), jnp.float32)   # BN1 bias
    g2 = jnp.ones((C,), jnp.float32)     # BN2 weight
    be2 = jnp.zeros((C,), jnp.float32)   # BN2 bias
    a = jnp.float32(0.25)                # PReLU default

    params = (w1, b1, g1, be1, a, w2, b2, g2, be2)

    out = jax.block_until_ready(residual_block_pallas(x, params))
    ref = jax.block_until_ready(residual_block_ref(x, params))

    assert out.shape == (N, C, H, W)
    err = float(jnp.max(jnp.abs(out - ref)))
    assert jnp.allclose(out, ref, atol=1e-4, rtol=1e-4), err
    print("KERNEL_OK")
</pallas_src>

<mosaic_0001>
module attributes {stable_mosaic.version = 11 : i64} {
  func.func @_residual_block_kernel(%arg0: memref<4x512xf32, #tpu.memory_space<vmem>>, %arg1: memref<8x512xf32, #tpu.memory_space<vmem>>, %arg2: memref<9x4x4xf32, #tpu.memory_space<vmem>>, %arg3: memref<4x1xf32, #tpu.memory_space<vmem>>, %arg4: memref<4x1xf32, #tpu.memory_space<vmem>>, %arg5: memref<1xf32, #tpu.memory_space<smem>>, %arg6: memref<9x4x4xf32, #tpu.memory_space<vmem>>, %arg7: memref<4x1xf32, #tpu.memory_space<vmem>>, %arg8: memref<4x1xf32, #tpu.memory_space<vmem>>, %arg9: memref<4x512xf32, #tpu.memory_space<vmem>>) attributes {dimension_semantics = [], scalar_prefetch = 0 : i64, scratch_operands = 0 : i64, tpu.core_type = #tpu.core_type<tc>} {
    %c0 = arith.constant 0 : index
    %c0_0 = arith.constant 0 : index
    %0 = vector.load %arg0[%c0, %c0_0] : memref<4x512xf32, #tpu.memory_space<vmem>>, vector<4x512xf32>
    %c4 = arith.constant 4 : index
    %c0_1 = arith.constant 0 : index
    %c0_2 = arith.constant 0 : index
    %1 = vector.load %arg2[%c4, %c0_1, %c0_2] : memref<9x4x4xf32, #tpu.memory_space<vmem>>, vector<1x4x4xf32>
    %2 = vector.shape_cast %1 : vector<1x4x4xf32> to vector<4x4xf32>
    %cst = arith.constant dense<0.000000e+00> : vector<4x512xf32>
    %3 = tpu.matmul %2, %0, %cst {dimension_numbers = #tpu.dot_dimension_numbers<[1], [0], [0], [1], [0, 0, 1, 1], [], []>} : vector<4x4xf32>, vector<4x512xf32>, vector<4x512xf32> -> vector<4x512xf32>
    %c17_i32 = arith.constant 17 : i32
    %4 = tpu.dynamic_rotate %0 by %c17_i32 dim 1 : vector<4x512xf32>, i32 -> vector<4x512xf32>
    %c0_3 = arith.constant 0 : index
    %c0_4 = arith.constant 0 : index
    %5 = vector.load %arg1[%c0_3, %c0_4] : memref<8x512xf32, #tpu.memory_space<vmem>>, vector<1x512xf32>
    %6 = vector.broadcast %5 : vector<1x512xf32> to vector<4x512xf32>
    %7 = arith.mulf %4, %6 : vector<4x512xf32>
    %c0_5 = arith.constant 0 : index
    %c0_6 = arith.constant 0 : index
    %c0_7 = arith.constant 0 : index
    %8 = vector.load %arg2[%c0_5, %c0_6, %c0_7] : memref<9x4x4xf32, #tpu.memory_space<vmem>>, vector<1x4x4xf32>
    %9 = vector.shape_cast %8 : vector<1x4x4xf32> to vector<4x4xf32>
    %cst_8 = arith.constant dense<0.000000e+00> : vector<4x512xf32>
    %10 = tpu.matmul %9, %7, %cst_8 {dimension_numbers = #tpu.dot_dimension_numbers<[1], [0], [0], [1], [0, 0, 1, 1], [], []>} : vector<4x4xf32>, vector<4x512xf32>, vector<4x512xf32> -> vector<4x512xf32>
    %11 = arith.addf %3, %10 : vector<4x512xf32>
    %c16_i32 = arith.constant 16 : i32
    %12 = tpu.dynamic_rotate %0 by %c16_i32 dim 1 : vector<4x512xf32>, i32 -> vector<4x512xf32>
    %c1 = arith.constant 1 : index
    %c0_9 = arith.constant 0 : index
    %13 = vector.load %arg1[%c1, %c0_9] : memref<8x512xf32, #tpu.memory_space<vmem>>, vector<1x512xf32>
    %14 = vector.broadcast %13 : vector<1x512xf32> to vector<4x512xf32>
    %15 = arith.mulf %12, %14 : vector<4x512xf32>
    %c1_10 = arith.constant 1 : index
    %c0_11 = arith.constant 0 : index
    %c0_12 = arith.constant 0 : index
    %16 = vector.load %arg2[%c1_10, %c0_11, %c0_12] : memref<9x4x4xf32, #tpu.memory_space<vmem>>, vector<1x4x4xf32>
    %17 = vector.shape_cast %16 : vector<1x4x4xf32> to vector<4x4xf32>
    %cst_13 = arith.constant dense<0.000000e+00> : vector<4x512xf32>
    %18 = tpu.matmul %17, %15, %cst_13 {dimension_numbers = #tpu.dot_dimension_numbers<[1], [0], [0], [1], [0, 0, 1, 1], [], []>} : vector<4x4xf32>, vector<4x512xf32>, vector<4x512xf32> -> vector<4x512xf32>
    %19 = arith.addf %11, %18 : vector<4x512xf32>
    %c15_i32 = arith.constant 15 : i32
    %20 = tpu.dynamic_rotate %0 by %c15_i32 dim 1 : vector<4x512xf32>, i32 -> vector<4x512xf32>
    %c2 = arith.constant 2 : index
    %c0_14 = arith.constant 0 : index
    %21 = vector.load %arg1[%c2, %c0_14] : memref<8x512xf32, #tpu.memory_space<vmem>>, vector<1x512xf32>
    %22 = vector.broadcast %21 : vector<1x512xf32> to vector<4x512xf32>
    %23 = arith.mulf %20, %22 : vector<4x512xf32>
    %c2_15 = arith.constant 2 : index
    %c0_16 = arith.constant 0 : index
    %c0_17 = arith.constant 0 : index
    %24 = vector.load %arg2[%c2_15, %c0_16, %c0_17] : memref<9x4x4xf32, #tpu.memory_space<vmem>>, vector<1x4x4xf32>
    %25 = vector.shape_cast %24 : vector<1x4x4xf32> to vector<4x4xf32>
    %cst_18 = arith.constant dense<0.000000e+00> : vector<4x512xf32>
    %26 = tpu.matmul %25, %23, %cst_18 {dimension_numbers = #tpu.dot_dimension_numbers<[1], [0], [0], [1], [0, 0, 1, 1], [], []>} : vector<4x4xf32>, vector<4x512xf32>, vector<4x512xf32> -> vector<4x512xf32>
    %27 = arith.addf %19, %26 : vector<4x512xf32>
    %c1_i32 = arith.constant 1 : i32
    %28 = tpu.dynamic_rotate %0 by %c1_i32 dim 1 : vector<4x512xf32>, i32 -> vector<4x512xf32>
    %c3 = arith.constant 3 : index
    %c0_19 = arith.constant 0 : index
    %29 = vector.load %arg1[%c3, %c0_19] : memref<8x512xf32, #tpu.memory_space<vmem>>, vector<1x512xf32>
    %30 = vector.broadcast %29 : vector<1x512xf32> to vector<4x512xf32>
    %31 = arith.mulf %28, %30 : vector<4x512xf32>
    %c3_20 = arith.constant 3 : index
    %c0_21 = arith.constant 0 : index
    %c0_22 = arith.constant 0 : index
    %32 = vector.load %arg2[%c3_20, %c0_21, %c0_22] : memref<9x4x4xf32, #tpu.memory_space<vmem>>, vector<1x4x4xf32>
    %33 = vector.shape_cast %32 : vector<1x4x4xf32> to vector<4x4xf32>
    %cst_23 = arith.constant dense<0.000000e+00> : vector<4x512xf32>
    %34 = tpu.matmul %33, %31, %cst_23 {dimension_numbers = #tpu.dot_dimension_numbers<[1], [0], [0], [1], [0, 0, 1, 1], [], []>} : vector<4x4xf32>, vector<4x512xf32>, vector<4x512xf32> -> vector<4x512xf32>
    %35 = arith.addf %27, %34 : vector<4x512xf32>
    %c511_i32 = arith.constant 511 : i32
    %36 = tpu.dynamic_rotate %0 by %c511_i32 dim 1 : vector<4x512xf32>, i32 -> vector<4x512xf32>
    %c4_24 = arith.constant 4 : index
    %c0_25 = arith.constant 0 : index
    %37 = vector.load %arg1[%c4_24, %c0_25] : memref<8x512xf32, #tpu.memory_space<vmem>>, vector<1x512xf32>
    %38 = vector.broadcast %37 : vector<1x512xf32> to vector<4x512xf32>
    %39 = arith.mulf %36, %38 : vector<4x512xf32>
    %c5 = arith.constant 5 : index
    %c0_26 = arith.constant 0 : index
    %c0_27 = arith.constant 0 : index
    %40 = vector.load %arg2[%c5, %c0_26, %c0_27] : memref<9x4x4xf32, #tpu.memory_space<vmem>>, vector<1x4x4xf32>
    %41 = vector.shape_cast %40 : vector<1x4x4xf32> to vector<4x4xf32>
    %cst_28 = arith.constant dense<0.000000e+00> : vector<4x512xf32>
    %42 = tpu.matmul %41, %39, %cst_28 {dimension_numbers = #tpu.dot_dimension_numbers<[1], [0], [0], [1], [0, 0, 1, 1], [], []>} : vector<4x4xf32>, vector<4x512xf32>, vector<4x512xf32> -> vector<4x512xf32>
    %43 = arith.addf %35, %42 : vector<4x512xf32>
    %c497_i32 = arith.constant 497 : i32
    %44 = tpu.dynamic_rotate %0 by %c497_i32 dim 1 : vector<4x512xf32>, i32 -> vector<4x512xf32>
    %c5_29 = arith.constant 5 : index
    %c0_30 = arith.constant 0 : index
    %45 = vector.load %arg1[%c5_29, %c0_30] : memref<8x512xf32, #tpu.memory_space<vmem>>, vector<1x512xf32>
    %46 = vector.broadcast %45 : vector<1x512xf32> to vector<4x512xf32>
    %47 = arith.mulf %44, %46 : vector<4x512xf32>
    %c6 = arith.constant 6 : index
    %c0_31 = arith.constant 0 : index
    %c0_32 = arith.constant 0 : index
    %48 = vector.load %arg2[%c6, %c0_31, %c0_32] : memref<9x4x4xf32, #tpu.memory_space<vmem>>, vector<1x4x4xf32>
    %49 = vector.shape_cast %48 : vector<1x4x4xf32> to vector<4x4xf32>
    %cst_33 = arith.constant dense<0.000000e+00> : vector<4x512xf32>
    %50 = tpu.matmul %49, %47, %cst_33 {dimension_numbers = #tpu.dot_dimension_numbers<[1], [0], [0], [1], [0, 0, 1, 1], [], []>} : vector<4x4xf32>, vector<4x512xf32>, vector<4x512xf32> -> vector<4x512xf32>
    %51 = arith.addf %43, %50 : vector<4x512xf32>
    %c496_i32 = arith.constant 496 : i32
    %52 = tpu.dynamic_rotate %0 by %c496_i32 dim 1 : vector<4x512xf32>, i32 -> vector<4x512xf32>
    %c6_34 = arith.constant 6 : index
    %c0_35 = arith.constant 0 : index
    %53 = vector.load %arg1[%c6_34, %c0_35] : memref<8x512xf32, #tpu.memory_space<vmem>>, vector<1x512xf32>
    %54 = vector.broadcast %53 : vector<1x512xf32> to vector<4x512xf32>
    %55 = arith.mulf %52, %54 : vector<4x512xf32>
    %c7 = arith.constant 7 : index
    %c0_36 = arith.constant 0 : index
    %c0_37 = arith.constant 0 : index
    %56 = vector.load %arg2[%c7, %c0_36, %c0_37] : memref<9x4x4xf32, #tpu.memory_space<vmem>>, vector<1x4x4xf32>
    %57 = vector.shape_cast %56 : vector<1x4x4xf32> to vector<4x4xf32>
    %cst_38 = arith.constant dense<0.000000e+00> : vector<4x512xf32>
    %58 = tpu.matmul %57, %55, %cst_38 {dimension_numbers = #tpu.dot_dimension_numbers<[1], [0], [0], [1], [0, 0, 1, 1], [], []>} : vector<4x4xf32>, vector<4x512xf32>, vector<4x512xf32> -> vector<4x512xf32>
    %59 = arith.addf %51, %58 : vector<4x512xf32>
    %c495_i32 = arith.constant 495 : i32
    %60 = tpu.dynamic_rotate %0 by %c495_i32 dim 1 : vector<4x512xf32>, i32 -> vector<4x512xf32>
    %c7_39 = arith.constant 7 : index
    %c0_40 = arith.constant 0 : index
    %61 = vector.load %arg1[%c7_39, %c0_40] : memref<8x512xf32, #tpu.memory_space<vmem>>, vector<1x512xf32>
    %62 = vector.broadcast %61 : vector<1x512xf32> to vector<4x512xf32>
    %63 = arith.mulf %60, %62 : vector<4x512xf32>
    %c8 = arith.constant 8 : index
    %c0_41 = arith.constant 0 : index
    %c0_42 = arith.constant 0 : index
    %64 = vector.load %arg2[%c8, %c0_41, %c0_42] : memref<9x4x4xf32, #tpu.memory_space<vmem>>, vector<1x4x4xf32>
    %65 = vector.shape_cast %64 : vector<1x4x4xf32> to vector<4x4xf32>
    %cst_43 = arith.constant dense<0.000000e+00> : vector<4x512xf32>
    %66 = tpu.matmul %65, %63, %cst_43 {dimension_numbers = #tpu.dot_dimension_numbers<[1], [0], [0], [1], [0, 0, 1, 1], [], []>} : vector<4x4xf32>, vector<4x512xf32>, vector<4x512xf32> -> vector<4x512xf32>
    %67 = arith.addf %59, %66 : vector<4x512xf32>
    %cst_44 = arith.constant dense<0.000000e+00> : vector<4xf32>
    %68 = vector.multi_reduction <add>, %67, %cst_44 [1] : vector<4x512xf32> to vector<4xf32>
    %69 = vector.shape_cast %68 : vector<4xf32> to vector<4x1xf32>
    %70 = arith.mulf %67, %67 : vector<4x512xf32>
    %cst_45 = arith.constant dense<0.000000e+00> : vector<4xf32>
    %71 = vector.multi_reduction <add>, %70, %cst_45 [1] : vector<4x512xf32> to vector<4xf32>
    %72 = vector.shape_cast %71 : vector<4xf32> to vector<4x1xf32>
    %cst_46 = arith.constant 0.001953125 : f32
    %73 = vector.broadcast %cst_46 : f32 to vector<4x1xf32>
    %74 = arith.mulf %69, %73 : vector<4x1xf32>
    %cst_47 = arith.constant 0.001953125 : f32
    %75 = vector.broadcast %cst_47 : f32 to vector<4x1xf32>
    %76 = arith.mulf %72, %75 : vector<4x1xf32>
    %77 = arith.mulf %74, %74 : vector<4x1xf32>
    %78 = arith.subf %76, %77 : vector<4x1xf32>
    %c0_48 = arith.constant 0 : index
    %c0_49 = arith.constant 0 : index
    %79 = vector.load %arg3[%c0_48, %c0_49] : memref<4x1xf32, #tpu.memory_space<vmem>>, vector<4x1xf32>
    %cst_50 = arith.constant 8.000000e-01 : f32
    %80 = vector.broadcast %cst_50 : f32 to vector<4x1xf32>
    %81 = arith.addf %78, %80 : vector<4x1xf32>
    %82 = math.rsqrt %81 : vector<4x1xf32>
    %83 = arith.mulf %79, %82 : vector<4x1xf32>
    %c0_51 = arith.constant 0 : index
    %c0_52 = arith.constant 0 : index
    %84 = vector.load %arg4[%c0_51, %c0_52] : memref<4x1xf32, #tpu.memory_space<vmem>>, vector<4x1xf32>
    %85 = arith.mulf %74, %83 : vector<4x1xf32>
    %86 = arith.subf %84, %85 : vector<4x1xf32>
    %87 = vector.broadcast %83 : vector<4x1xf32> to vector<4x512xf32>
    %88 = arith.mulf %67, %87 : vector<4x512xf32>
    %89 = vector.broadcast %86 : vector<4x1xf32> to vector<4x512xf32>
    %90 = arith.addf %88, %89 : vector<4x512xf32>
    %c0_53 = arith.constant 0 : index
    %91 = memref.load %arg5[%c0_53] : memref<1xf32, #tpu.memory_space<smem>>
    %cst_54 = arith.constant 0.000000e+00 : f32
    %92 = vector.broadcast %cst_54 : f32 to vector<4x512xf32>
    %93 = arith.cmpf oge, %90, %92 : vector<4x512xf32>
    %94 = vector.broadcast %91 : f32 to vector<4x512xf32>
    %95 = arith.mulf %94, %90 : vector<4x512xf32>
    %96 = arith.select %93, %90, %95 : vector<4x512xi1>, vector<4x512xf32>
    %c4_55 = arith.constant 4 : index
    %c0_56 = arith.constant 0 : index
    %c0_57 = arith.constant 0 : index
    %97 = vector.load %arg6[%c4_55, %c0_56, %c0_57] : memref<9x4x4xf32, #tpu.memory_space<vmem>>, vector<1x4x4xf32>
    %98 = vector.shape_cast %97 : vector<1x4x4xf32> to vector<4x4xf32>
    %cst_58 = arith.constant dense<0.000000e+00> : vector<4x512xf32>
    %99 = tpu.matmul %98, %96, %cst_58 {dimension_numbers = #tpu.dot_dimension_numbers<[1], [0], [0], [1], [0, 0, 1, 1], [], []>} : vector<4x4xf32>, vector<4x512xf32>, vector<4x512xf32> -> vector<4x512xf32>
    %c17_i32_59 = arith.constant 17 : i32
    %100 = tpu.dynamic_rotate %96 by %c17_i32_59 dim 1 : vector<4x512xf32>, i32 -> vector<4x512xf32>
    %c0_60 = arith.constant 0 : index
    %c0_61 = arith.constant 0 : index
    %101 = vector.load %arg1[%c0_60, %c0_61] : memref<8x512xf32, #tpu.memory_space<vmem>>, vector<1x512xf32>
    %102 = vector.broadcast %101 : vector<1x512xf32> to vector<4x512xf32>
    %103 = arith.mulf %100, %102 : vector<4x512xf32>
    %c0_62 = arith.constant 0 : index
    %c0_63 = arith.constant 0 : index
    %c0_64 = arith.constant 0 : index
    %104 = vector.load %arg6[%c0_62, %c0_63, %c0_64] : memref<9x4x4xf32, #tpu.memory_space<vmem>>, vector<1x4x4xf32>
    %105 = vector.shape_cast %104 : vector<1x4x4xf32> to vector<4x4xf32>
    %cst_65 = arith.constant dense<0.000000e+00> : vector<4x512xf32>
    %106 = tpu.matmul %105, %103, %cst_65 {dimension_numbers = #tpu.dot_dimension_numbers<[1], [0], [0], [1], [0, 0, 1, 1], [], []>} : vector<4x4xf32>, vector<4x512xf32>, vector<4x512xf32> -> vector<4x512xf32>
    %107 = arith.addf %99, %106 : vector<4x512xf32>
    %c16_i32_66 = arith.constant 16 : i32
    %108 = tpu.dynamic_rotate %96 by %c16_i32_66 dim 1 : vector<4x512xf32>, i32 -> vector<4x512xf32>
    %c1_67 = arith.constant 1 : index
    %c0_68 = arith.constant 0 : index
    %109 = vector.load %arg1[%c1_67, %c0_68] : memref<8x512xf32, #tpu.memory_space<vmem>>, vector<1x512xf32>
    %110 = vector.broadcast %109 : vector<1x512xf32> to vector<4x512xf32>
    %111 = arith.mulf %108, %110 : vector<4x512xf32>
    %c1_69 = arith.constant 1 : index
    %c0_70 = arith.constant 0 : index
    %c0_71 = arith.constant 0 : index
    %112 = vector.load %arg6[%c1_69, %c0_70, %c0_71] : memref<9x4x4xf32, #tpu.memory_space<vmem>>, vector<1x4x4xf32>
    %113 = vector.shape_cast %112 : vector<1x4x4xf32> to vector<4x4xf32>
    %cst_72 = arith.constant dense<0.000000e+00> : vector<4x512xf32>
    %114 = tpu.matmul %113, %111, %cst_72 {dimension_numbers = #tpu.dot_dimension_numbers<[1], [0], [0], [1], [0, 0, 1, 1], [], []>} : vector<4x4xf32>, vector<4x512xf32>, vector<4x512xf32> -> vector<4x512xf32>
    %115 = arith.addf %107, %114 : vector<4x512xf32>
    %c15_i32_73 = arith.constant 15 : i32
    %116 = tpu.dynamic_rotate %96 by %c15_i32_73 dim 1 : vector<4x512xf32>, i32 -> vector<4x512xf32>
    %c2_74 = arith.constant 2 : index
    %c0_75 = arith.constant 0 : index
    %117 = vector.load %arg1[%c2_74, %c0_75] : memref<8x512xf32, #tpu.memory_space<vmem>>, vector<1x512xf32>
    %118 = vector.broadcast %117 : vector<1x512xf32> to vector<4x512xf32>
    %119 = arith.mulf %116, %118 : vector<4x512xf32>
    %c2_76 = arith.constant 2 : index
    %c0_77 = arith.constant 0 : index
    %c0_78 = arith.constant 0 : index
    %120 = vector.load %arg6[%c2_76, %c0_77, %c0_78] : memref<9x4x4xf32, #tpu.memory_space<vmem>>, vector<1x4x4xf32>
    %121 = vector.shape_cast %120 : vector<1x4x4xf32> to vector<4x4xf32>
    %cst_79 = arith.constant dense<0.000000e+00> : vector<4x512xf32>
    %122 = tpu.matmul %121, %119, %cst_79 {dimension_numbers = #tpu.dot_dimension_numbers<[1], [0], [0], [1], [0, 0, 1, 1], [], []>} : vector<4x4xf32>, vector<4x512xf32>, vector<4x512xf32> -> vector<4x512xf32>
    %123 = arith.addf %115, %122 : vector<4x512xf32>
    %c1_i32_80 = arith.constant 1 : i32
    %124 = tpu.dynamic_rotate %96 by %c1_i32_80 dim 1 : vector<4x512xf32>, i32 -> vector<4x512xf32>
    %c3_81 = arith.constant 3 : index
    %c0_82 = arith.constant 0 : index
    %125 = vector.load %arg1[%c3_81, %c0_82] : memref<8x512xf32, #tpu.memory_space<vmem>>, vector<1x512xf32>
    %126 = vector.broadcast %125 : vector<1x512xf32> to vector<4x512xf32>
    %127 = arith.mulf %124, %126 : vector<4x512xf32>
    %c3_83 = arith.constant 3 : index
    %c0_84 = arith.constant 0 : index
    %c0_85 = arith.constant 0 : index
    %128 = vector.load %arg6[%c3_83, %c0_84, %c0_85] : memref<9x4x4xf32, #tpu.memory_space<vmem>>, vector<1x4x4xf32>
    %129 = vector.shape_cast %128 : vector<1x4x4xf32> to vector<4x4xf32>
    %cst_86 = arith.constant dense<0.000000e+00> : vector<4x512xf32>
    %130 = tpu.matmul %129, %127, %cst_86 {dimension_numbers = #tpu.dot_dimension_numbers<[1], [0], [0], [1], [0, 0, 1, 1], [], []>} : vector<4x4xf32>, vector<4x512xf32>, vector<4x512xf32> -> vector<4x512xf32>
    %131 = arith.addf %123, %130 : vector<4x512xf32>
    %c511_i32_87 = arith.constant 511 : i32
    %132 = tpu.dynamic_rotate %96 by %c511_i32_87 dim 1 : vector<4x512xf32>, i32 -> vector<4x512xf32>
    %c4_88 = arith.constant 4 : index
    %c0_89 = arith.constant 0 : index
    %133 = vector.load %arg1[%c4_88, %c0_89] : memref<8x512xf32, #tpu.memory_space<vmem>>, vector<1x512xf32>
    %134 = vector.broadcast %133 : vector<1x512xf32> to vector<4x512xf32>
    %135 = arith.mulf %132, %134 : vector<4x512xf32>
    %c5_90 = arith.constant 5 : index
    %c0_91 = arith.constant 0 : index
    %c0_92 = arith.constant 0 : index
    %136 = vector.load %arg6[%c5_90, %c0_91, %c0_92] : memref<9x4x4xf32, #tpu.memory_space<vmem>>, vector<1x4x4xf32>
    %137 = vector.shape_cast %136 : vector<1x4x4xf32> to vector<4x4xf32>
    %cst_93 = arith.constant dense<0.000000e+00> : vector<4x512xf32>
    %138 = tpu.matmul %137, %135, %cst_93 {dimension_numbers = #tpu.dot_dimension_numbers<[1], [0], [0], [1], [0, 0, 1, 1], [], []>} : vector<4x4xf32>, vector<4x512xf32>, vector<4x512xf32> -> vector<4x512xf32>
    %139 = arith.addf %131, %138 : vector<4x512xf32>
    %c497_i32_94 = arith.constant 497 : i32
    %140 = tpu.dynamic_rotate %96 by %c497_i32_94 dim 1 : vector<4x512xf32>, i32 -> vector<4x512xf32>
    %c5_95 = arith.constant 5 : index
    %c0_96 = arith.constant 0 : index
    %141 = vector.load %arg1[%c5_95, %c0_96] : memref<8x512xf32, #tpu.memory_space<vmem>>, vector<1x512xf32>
    %142 = vector.broadcast %141 : vector<1x512xf32> to vector<4x512xf32>
    %143 = arith.mulf %140, %142 : vector<4x512xf32>
    %c6_97 = arith.constant 6 : index
    %c0_98 = arith.constant 0 : index
    %c0_99 = arith.constant 0 : index
    %144 = vector.load %arg6[%c6_97, %c0_98, %c0_99] : memref<9x4x4xf32, #tpu.memory_space<vmem>>, vector<1x4x4xf32>
    %145 = vector.shape_cast %144 : vector<1x4x4xf32> to vector<4x4xf32>
    %cst_100 = arith.constant dense<0.000000e+00> : vector<4x512xf32>
    %146 = tpu.matmul %145, %143, %cst_100 {dimension_numbers = #tpu.dot_dimension_numbers<[1], [0], [0], [1], [0, 0, 1, 1], [], []>} : vector<4x4xf32>, vector<4x512xf32>, vector<4x512xf32> -> vector<4x512xf32>
    %147 = arith.addf %139, %146 : vector<4x512xf32>
    %c496_i32_101 = arith.constant 496 : i32
    %148 = tpu.dynamic_rotate %96 by %c496_i32_101 dim 1 : vector<4x512xf32>, i32 -> vector<4x512xf32>
    %c6_102 = arith.constant 6 : index
    %c0_103 = arith.constant 0 : index
    %149 = vector.load %arg1[%c6_102, %c0_103] : memref<8x512xf32, #tpu.memory_space<vmem>>, vector<1x512xf32>
    %150 = vector.broadcast %149 : vector<1x512xf32> to vector<4x512xf32>
    %151 = arith.mulf %148, %150 : vector<4x512xf32>
    %c7_104 = arith.constant 7 : index
    %c0_105 = arith.constant 0 : index
    %c0_106 = arith.constant 0 : index
    %152 = vector.load %arg6[%c7_104, %c0_105, %c0_106] : memref<9x4x4xf32, #tpu.memory_space<vmem>>, vector<1x4x4xf32>
    %153 = vector.shape_cast %152 : vector<1x4x4xf32> to vector<4x4xf32>
    %cst_107 = arith.constant dense<0.000000e+00> : vector<4x512xf32>
    %154 = tpu.matmul %153, %151, %cst_107 {dimension_numbers = #tpu.dot_dimension_numbers<[1], [0], [0], [1], [0, 0, 1, 1], [], []>} : vector<4x4xf32>, vector<4x512xf32>, vector<4x512xf32> -> vector<4x512xf32>
    %155 = arith.addf %147, %154 : vector<4x512xf32>
    %c495_i32_108 = arith.constant 495 : i32
    %156 = tpu.dynamic_rotate %96 by %c495_i32_108 dim 1 : vector<4x512xf32>, i32 -> vector<4x512xf32>
    %c7_109 = arith.constant 7 : index
    %c0_110 = arith.constant 0 : index
    %157 = vector.load %arg1[%c7_109, %c0_110] : memref<8x512xf32, #tpu.memory_space<vmem>>, vector<1x512xf32>
    %158 = vector.broadcast %157 : vector<1x512xf32> to vector<4x512xf32>
    %159 = arith.mulf %156, %158 : vector<4x512xf32>
    %c8_111 = arith.constant 8 : index
    %c0_112 = arith.constant 0 : index
    %c0_113 = arith.constant 0 : index
    %160 = vector.load %arg6[%c8_111, %c0_112, %c0_113] : memref<9x4x4xf32, #tpu.memory_space<vmem>>, vector<1x4x4xf32>
    %161 = vector.shape_cast %160 : vector<1x4x4xf32> to vector<4x4xf32>
    %cst_114 = arith.constant dense<0.000000e+00> : vector<4x512xf32>
    %162 = tpu.matmul %161, %159, %cst_114 {dimension_numbers = #tpu.dot_dimension_numbers<[1], [0], [0], [1], [0, 0, 1, 1], [], []>} : vector<4x4xf32>, vector<4x512xf32>, vector<4x512xf32> -> vector<4x512xf32>
    %163 = arith.addf %155, %162 : vector<4x512xf32>
    %cst_115 = arith.constant dense<0.000000e+00> : vector<4xf32>
    %164 = vector.multi_reduction <add>, %163, %cst_115 [1] : vector<4x512xf32> to vector<4xf32>
    %165 = vector.shape_cast %164 : vector<4xf32> to vector<4x1xf32>
    %166 = arith.mulf %163, %163 : vector<4x512xf32>
    %cst_116 = arith.constant dense<0.000000e+00> : vector<4xf32>
    %167 = vector.multi_reduction <add>, %166, %cst_116 [1] : vector<4x512xf32> to vector<4xf32>
    %168 = vector.shape_cast %167 : vector<4xf32> to vector<4x1xf32>
    %cst_117 = arith.constant 0.001953125 : f32
    %169 = vector.broadcast %cst_117 : f32 to vector<4x1xf32>
    %170 = arith.mulf %165, %169 : vector<4x1xf32>
    %cst_118 = arith.constant 0.001953125 : f32
    %171 = vector.broadcast %cst_118 : f32 to vector<4x1xf32>
    %172 = arith.mulf %168, %171 : vector<4x1xf32>
    %173 = arith.mulf %170, %170 : vector<4x1xf32>
    %174 = arith.subf %172, %173 : vector<4x1xf32>
    %c0_119 = arith.constant 0 : index
    %c0_120 = arith.constant 0 : index
    %175 = vector.load %arg7[%c0_119, %c0_120] : memref<4x1xf32, #tpu.memory_space<vmem>>, vector<4x1xf32>
    %cst_121 = arith.constant 8.000000e-01 : f32
    %176 = vector.broadcast %cst_121 : f32 to vector<4x1xf32>
    %177 = arith.addf %174, %176 : vector<4x1xf32>
    %178 = math.rsqrt %177 : vector<4x1xf32>
    %179 = arith.mulf %175, %178 : vector<4x1xf32>
    %c0_122 = arith.constant 0 : index
    %c0_123 = arith.constant 0 : index
    %180 = vector.load %arg8[%c0_122, %c0_123] : memref<4x1xf32, #tpu.memory_space<vmem>>, vector<4x1xf32>
    %181 = arith.mulf %170, %179 : vector<4x1xf32>
    %182 = arith.subf %180, %181 : vector<4x1xf32>
    %183 = vector.broadcast %179 : vector<4x1xf32> to vector<4x512xf32>
    %184 = arith.mulf %163, %183 : vector<4x512xf32>
    %185 = vector.broadcast %182 : vector<4x1xf32> to vector<4x512xf32>
    %186 = arith.addf %184, %185 : vector<4x512xf32>
    %187 = arith.addf %0, %186 : vector<4x512xf32>
    %c0_124 = arith.constant 0 : index
    %c0_125 = arith.constant 0 : index
    %188 = vector.load %arg9[%c0_124, %c0_125] : memref<4x512xf32, #tpu.memory_space<vmem>>, vector<4x512xf32>
    tpu.vector_store %arg9[%c0_124, %c0_125], %187 {strides = array<i32>} : memref<4x512xf32, #tpu.memory_space<vmem>>, vector<4x512xf32>,
    return
  }
}

</mosaic_0001>

<llo_original>
// kernel: tpu_custom_call.1
$region0: #{tpu_custom_call.1}
  #allocation0 [shape = 'u32[]', space=smem, size = 0x4, offset = 0x4, fixed_abs, tag = 'smem constant byte address 0x4 - core index']
  #allocation1 [shape = 'u32[144,128]{1,0:T(1,128)}', space=vmem, size = 0x12000, scoped, tag = 'internal scratch']
  #allocation2 [shape = 'f32[1]{0:T(128)S(6)}', space=smem, size = 0x200, scoped, tag = 'scoped memory for tpu_custom_call.1']
  %s0 = inlined_call_operand.vmem [shape: f32[4,512], index: 0, kind: input, shape index: {}]
  %s1 = inlined_call_operand.vmem [shape: f32[8,512], index: 1, kind: input, shape index: {}]
  %s2 = inlined_call_operand.vmem [shape: f32[9,4,4], index: 2, kind: input, shape index: {}]
  %s3 = inlined_call_operand.vmem [shape: f32[4,1], index: 3, kind: input, shape index: {}]
  %s4 = inlined_call_operand.vmem [shape: f32[4,1], index: 4, kind: input, shape index: {}]
  %s5 = inlined_call_operand.<no memory space> [shape: f32[1], index: 5, kind: input, shape index: {}]
  %s6 = inlined_call_operand.vmem [shape: f32[9,4,4], index: 6, kind: input, shape index: {}]
  %s7 = inlined_call_operand.vmem [shape: f32[4,1], index: 7, kind: input, shape index: {}]
  %s8 = inlined_call_operand.vmem [shape: f32[4,1], index: 8, kind: input, shape index: {}]
  %s9 = inlined_call_operand.hbm [shape: f32[4,512], index: 9, kind: output, shape index: {}]
  %s10 = sld [smem:[#allocation0]]
  $region46: #{tpu_custom_call.1} parent=0
    _
  %s12 = ssub.s32 1, %s10
  %s13 = scalar_select 0, %s12, %s10
  %14 = sst [smem:[#allocation2]] %s5
  $region1: #{tpu_custom_call.1} parent=0
    #allocation3 [shape = 'u8[8192]{0}', space=vmem, size = 0x2000, scoped, tag = 'output window, operand 0, single buffered']
    #allocation4 [shape = 's32[1]{0}', space=sflag, size = 0x4, scoped, tag = 'scoped memory for tpu_custom_call.1']
    %15 = vsyncpa [#allocation4], 0
    // Predicated region
    $region2: #{tpu_custom_call.1} parent=1 // pred_check
      _
    $region3: #{tpu_custom_call.1} parent=1 // pred_check_branch
      %17 = sbr.rel (0) target = $region5
    $region4: #{tpu_custom_call.1} parent=1 // pred_region
      _
    $region5: #{tpu_custom_call.1} parent=1 // pred_fallthru
      _
    // Predicated region
    $region6: #{tpu_custom_call.1} parent=1 // pred_check
      _
    $region7: #{tpu_custom_call.1} parent=1 // pred_check_branch
      %19 = sbr.rel (0) target = $region9
    $region8: #{tpu_custom_call.1} parent=1 // pred_region
      _
    $region9: #{tpu_custom_call.1} parent=1 // pred_fallthru
      _
    // Predicated region
    $region10: #{tpu_custom_call.1} parent=1 // pred_check
      _
    $region11: #{tpu_custom_call.1} parent=1 // pred_check_branch
      %21 = sbr.rel (0) target = $region13
    $region12: #{tpu_custom_call.1} parent=1 // pred_region
      _
    $region13: #{tpu_custom_call.1} parent=1 // pred_fallthru
      _
    // Predicated region
    $region14: #{tpu_custom_call.1} parent=1 // pred_check
      _
    $region15: #{tpu_custom_call.1} parent=1 // pred_check_branch
      %23 = sbr.rel (0) target = $region17
    $region16: #{tpu_custom_call.1} parent=1 // pred_region
      _
    $region17: #{tpu_custom_call.1} parent=1 // pred_fallthru
      _
    // Predicated region
    $region18: #{tpu_custom_call.1} parent=1 // pred_check
      _
    $region19: #{tpu_custom_call.1} parent=1 // pred_check_branch
      %25 = sbr.rel (0) target = $region21
    $region20: #{tpu_custom_call.1} parent=1 // pred_region
      _
    $region21: #{tpu_custom_call.1} parent=1 // pred_fallthru
      _
    // Predicated region
    $region22: #{tpu_custom_call.1} parent=1 // pred_check
      _
    $region23: #{tpu_custom_call.1} parent=1 // pred_check_branch
      %27 = sbr.rel (0) target = $region25
    $region24: #{tpu_custom_call.1} parent=1 // pred_region
      _
    $region25: #{tpu_custom_call.1} parent=1 // pred_fallthru
      _
    // Predicated region
    $region26: #{tpu_custom_call.1} parent=1 // pred_check
      _
    $region27: #{tpu_custom_call.1} parent=1 // pred_check_branch
      %29 = sbr.rel (0) target = $region29
    $region28: #{tpu_custom_call.1} parent=1 // pred_region
      _
    $region29: #{tpu_custom_call.1} parent=1 // pred_fallthru
      _
    // Predicated region
    $region30: #{tpu_custom_call.1} parent=1 // pred_check
      _
    $region31: #{tpu_custom_call.1} parent=1 // pred_check_branch
      %31 = sbr.rel (0) target = $region33
    $region32: #{tpu_custom_call.1} parent=1 // pred_region
      _
    $region33: #{tpu_custom_call.1} parent=1 // pred_fallthru
      _
    // Predicated region
    $region34: #{tpu_custom_call.1} parent=1 // pred_check
      _
    $region35: #{tpu_custom_call.1} parent=1 // pred_check_branch
      %33 = sbr.rel (0) target = $region37
    $region36: #{tpu_custom_call.1} parent=1 // pred_region
      _
    $region37: #{tpu_custom_call.1} parent=1 // pred_fallthru
      _
    %v34 = vld [vmem:[%s0] sm:$0xff]
    %v35 = vld [vmem:[%s0 + $0x8] sm:$0xff]
    %s36 = scalar_lea.vmem %s2, 16
    %v37 = vld [vmem:[%s36] sm:$0xf]
    %v40 = vcombine.high %v34, %v34
    %v41 = vcombine.high %v35, %v35
    %44 = vrot.lane.b32.xlu0 %v34, 17
    %v45 = vpop.permute.xlu0 %44
    %46 = vrot.lane.b32.xlu0 %v40, 17
    %v47 = vpop.permute.xlu0 %46
    %48 = vrot.lane.b32.xlu0 %v35, 17
    %v49 = vpop.permute.xlu0 %48
    %50 = vrot.lane.b32.xlu0 %v41, 17
    %v51 = vpop.permute.xlu0 %50
    %v52 = vlaneseq
    %v53 = vand.u32 %v52, 127
    %vm54 = vcmp.lt.s32.totalorder %v53, 17
    %v55 = vsel %vm54, %v49, %v51
    %v56 = vsel %vm54, %v47, %v49
    %v57 = vsel %vm54, %v45, %v47
    %v58 = vsel %vm54, %v51, %v45
    %v59 = vld [vmem:[%s1] ss:$8 sm:$0xf]
    %v61 = vlaneseq
    %v62 = vshrl.u32 %v61, 7
    %v63 = vsub.s32 0, %v62
    %v64 = vrot.slane %v59, %v63
    %v65 = vlaneseq
    %v66 = vshrl.u32 %v65, 7
    %v67 = vsub.s32 1, %v66
    %v68 = vrot.slane %v59, %v67
    %v69 = vlaneseq
    %v70 = vshrl.u32 %v69, 7
    %v71 = vsub.s32 2, %v70
    %v72 = vrot.slane %v59, %v71
    %v73 = vlaneseq
    %v74 = vshrl.u32 %v73, 7
    %v75 = vsub.s32 3, %v74
    %v76 = vrot.slane %v59, %v75
    %v81 = vmul.f32 %v58, %v64
    %v82 = vmul.f32 %v57, %v68
    %v83 = vmul.f32 %v56, %v72
    %v84 = vmul.f32 %v55, %v76
    %v85 = vld [vmem:[%s2] sm:$0xf]
    %vm86 = vcmask 31744
    %v88 = vsel %vm86, %v85, 0
    %vm90 = vcmask 1043456
    %v92 = vsel %vm90, %v81, 0
    %v95 = vsel %vm90, %v82, 0
    %v98 = vsel %vm90, %v83, 0
    %v101 = vsel %vm90, %v84, 0
    %103 = vmatprep.subr.mxu0 %v95
    %104 = vmatpush1.msra.mxu0 %v92
    %105 = vmatprep.subr.mxu0 0.0
    %106 = vmatpush1.msra.mxu0 0.0
    %107 = vmatprep.subr.mxu0 0.0
    %108 = vmatpush1.msra.mxu0 0.0
    %109 = vmatprep.subr.mxu0 0.0
    %110 = vmatpush1.msra.mxu0 0.0
    %111 = vmatprep.subr.mxu0 0.0
    %112 = vmatpush1.msra.mxu0 0.0
    %113 = vmatprep.subr.mxu0 0.0
    %114 = vmatpush1.msra.mxu0 0.0
    %115 = vmatprep.subr.mxu0 0.0
    %116 = vmatpush1.msra.mxu0 0.0
    %117 = vmatprep.subr.mxu0 0.0
    %118 = vmatpush1.msra.mxu0 0.0
    %119 = vmatprep.subr.mxu0 0.0
    %120 = vmatpush1.msra.mxu0 0.0
    %121 = vmatprep.subr.mxu0 0.0
    %122 = vmatpush1.msra.mxu0 0.0
    %123 = vmatprep.subr.mxu0 0.0
    %124 = vmatpush1.msra.mxu0 0.0
    %125 = vmatprep.subr.mxu0 0.0
    %126 = vmatpush1.msra.mxu0 0.0
    %127 = vmatprep.subr.mxu0 0.0
    %128 = vmatpush1.msra.mxu0 0.0
    %129 = vmatprep.subr.mxu0 0.0
    %130 = vmatpush1.msra.mxu0 0.0
    %131 = vmatprep.subr.mxu0 0.0
    %132 = vmatpush1.msra.mxu0 0.0
    %133 = vmatprep.subr.mxu0 0.0
    %134 = vmatpush1.msra.mxu0 0.0
    %135 = vmatprep.subr.mxu0 0.0
    %136 = vmatpush1.msra.mxu0 0.0
    %137 = vmatprep.subr.mxu0 0.0
    %138 = vmatpush1.msra.mxu0 0.0
    %139 = vmatprep.subr.mxu0 0.0
    %140 = vmatpush1.msra.mxu0 0.0
    %141 = vmatprep.subr.mxu0 0.0
    %142 = vmatpush1.msra.mxu0 0.0
    %143 = vmatprep.subr.mxu0 0.0
    %144 = vmatpush1.msra.mxu0 0.0
    %145 = vmatprep.subr.mxu0 0.0
    %146 = vmatpush1.msra.mxu0 0.0
    %147 = vmatprep.subr.mxu0 0.0
    %148 = vmatpush1.msra.mxu0 0.0
    %149 = vmatprep.subr.mxu0 0.0
    %150 = vmatpush1.msra.mxu0 0.0
    %151 = vmatprep.subr.mxu0 0.0
    %152 = vmatpush1.msra.mxu0 0.0
    %153 = vmatprep.subr.mxu0 0.0
    %154 = vmatpush1.msra.mxu0 0.0
    %155 = vmatprep.subr.mxu0 0.0
    %156 = vmatpush1.msra.mxu0 0.0
    %157 = vmatprep.subr.mxu0 0.0
    %158 = vmatpush1.msra.mxu0 0.0
    %159 = vmatprep.subr.mxu0 0.0
    %160 = vmatpush1.msra.mxu0 0.0
    %161 = vmatprep.subr.mxu0 0.0
    %162 = vmatpush1.msra.mxu0 0.0
    %163 = vmatprep.subr.mxu0 0.0
    %164 = vmatpush1.msra.mxu0 0.0
    %165 = vmatprep.subr.mxu0 0.0
    %166 = vmatpush1.msra.mxu0 0.0
    %167 = vmatprep.mubr.f32.mxu0 0.0
    %168 = vmatmul.mubr.f32.gmra.mrb[0].mxu0 %v88
    %v169 = vpop.f32.mrb[0].mxu0
    %v170 = vadd.f32 0.0, %v169
    %v171 = vpop.f32.mrb[0].mxu0
    %v172 = vadd.f32 0.0, %v171
    %173 = vdwg.mxu0
    %174 = vmatprep.subr.mxu0 %v101
    %175 = vmatpush1.msra.mxu0 %v98
    %176 = vmatprep.subr.mxu0 0.0
    %177 = vmatpush1.msra.mxu0 0.0
    %178 = vmatprep.subr.mxu0 0.0
    %179 = vmatpush1.msra.mxu0 0.0
    %180 = vmatprep.subr.mxu0 0.0
    %181 = vmatpush1.msra.mxu0 0.0
    %182 = vmatprep.subr.mxu0 0.0
    %183 = vmatpush1.msra.mxu0 0.0
    %184 = vmatprep.subr.mxu0 0.0
    %185 = vmatpush1.msra.mxu0 0.0
    %186 = vmatprep.subr.mxu0 0.0
    %187 = vmatpush1.msra.mxu0 0.0
    %188 = vmatprep.subr.mxu0 0.0
    %189 = vmatpush1.msra.mxu0 0.0
    %190 = vmatprep.subr.mxu0 0.0
    %191 = vmatpush1.msra.mxu0 0.0
    %192 = vmatprep.subr.mxu0 0.0
    %193 = vmatpush1.msra.mxu0 0.0
    %194 = vmatprep.subr.mxu0 0.0
    %195 = vmatpush1.msra.mxu0 0.0
    %196 = vmatprep.subr.mxu0 0.0
    %197 = vmatpush1.msra.mxu0 0.0
    %198 = vmatprep.subr.mxu0 0.0
    %199 = vmatpush1.msra.mxu0 0.0
    %200 = vmatprep.subr.mxu0 0.0
    %201 = vmatpush1.msra.mxu0 0.0
    %202 = vmatprep.subr.mxu0 0.0
    %203 = vmatpush1.msra.mxu0 0.0
    %204 = vmatprep.subr.mxu0 0.0
    %205 = vmatpush1.msra.mxu0 0.0
    %206 = vmatprep.subr.mxu0 0.0
    %207 = vmatpush1.msra.mxu0 0.0
    %208 = vmatprep.subr.mxu0 0.0
    %209 = vmatpush1.msra.mxu0 0.0
    %210 = vmatprep.subr.mxu0 0.0
    %211 = vmatpush1.msra.mxu0 0.0
    %212 = vmatprep.subr.mxu0 0.0
    %213 = vmatpush1.msra.mxu0 0.0
    %214 = vmatprep.subr.mxu0 0.0
    %215 = vmatpush1.msra.mxu0 0.0
    %216 = vmatprep.subr.mxu0 0.0
    %217 = vmatpush1.msra.mxu0 0.0
    %218 = vmatprep.subr.mxu0 0.0
    %219 = vmatpush1.msra.mxu0 0.0
    %220 = vmatprep.subr.mxu0 0.0
    %221 = vmatpush1.msra.mxu0 0.0
    %222 = vmatprep.subr.mxu0 0.0
    %223 = vmatpush1.msra.mxu0 0.0
    %224 = vmatprep.subr.mxu0 0.0
    %225 = vmatpush1.msra.mxu0 0.0
    %226 = vmatprep.subr.mxu0 0.0
    %227 = vmatpush1.msra.mxu0 0.0
    %228 = vmatprep.subr.mxu0 0.0
    %229 = vmatpush1.msra.mxu0 0.0
    %230 = vmatprep.subr.mxu0 0.0
    %231 = vmatpush1.msra.mxu0 0.0
    %232 = vmatprep.subr.mxu0 0.0
    %233 = vmatpush1.msra.mxu0 0.0
    %234 = vmatprep.subr.mxu0 0.0
    %235 = vmatpush1.msra.mxu0 0.0
    %236 = vmatprep.subr.mxu0 0.0
    %237 = vmatpush1.msra.mxu0 0.0
    %238 = vmatprep.mubr.f32.mxu0 0.0
    %239 = vmatmul.mubr.f32.gmra.mrb[0].mxu0 %v88
    %v240 = vpop.f32.mrb[0].mxu0
    %v241 = vadd.f32 0.0, %v240
    %v242 = vpop.f32.mrb[0].mxu0
    %v243 = vadd.f32 0.0, %v242
    %244 = vdwg.mxu0
    %v246 = vsel %vm86, %v37, 0
    %v248 = vsel %vm90, %v34, 0
    %v250 = vsel %vm90, %v40, 0
    %v252 = vsel %vm90, %v35, 0
    %v254 = vsel %vm90, %v41, 0
    %256 = vmatprep.subr.mxu0 %v250
    %257 = vmatpush1.msra.mxu0 %v248
    %258 = vmatprep.subr.mxu0 0.0
    %259 = vmatpush1.msra.mxu0 0.0
    %260 = vmatprep.subr.mxu0 0.0
    %261 = vmatpush1.msra.mxu0 0.0
    %262 = vmatprep.subr.mxu0 0.0
    %263 = vmatpush1.msra.mxu0 0.0
    %264 = vmatprep.subr.mxu0 0.0
    %265 = vmatpush1.msra.mxu0 0.0
    %266 = vmatprep.subr.mxu0 0.0
    %267 = vmatpush1.msra.mxu0 0.0
    %268 = vmatprep.subr.mxu0 0.0
    %269 = vmatpush1.msra.mxu0 0.0
    %270 = vmatprep.subr.mxu0 0.0
    %271 = vmatpush1.msra.mxu0 0.0
    %272 = vmatprep.subr.mxu0 0.0
    %273 = vmatpush1.msra.mxu0 0.0
    %274 = vmatprep.subr.mxu0 0.0
    %275 = vmatpush1.msra.mxu0 0.0
    %276 = vmatprep.subr.mxu0 0.0
    %277 = vmatpush1.msra.mxu0 0.0
    %278 = vmatprep.subr.mxu0 0.0
    %279 = vmatpush1.msra.mxu0 0.0
    %280 = vmatprep.subr.mxu0 0.0
    %281 = vmatpush1.msra.mxu0 0.0
    %282 = vmatprep.subr.mxu0 0.0
    %283 = vmatpush1.msra.mxu0 0.0
    %284 = vmatprep.subr.mxu0 0.0
    %285 = vmatpush1.msra.mxu0 0.0
    %286 = vmatprep.subr.mxu0 0.0
    %287 = vmatpush1.msra.mxu0 0.0
    %288 = vmatprep.subr.mxu0 0.0
    %289 = vmatpush1.msra.mxu0 0.0
    %290 = vmatprep.subr.mxu0 0.0
    %291 = vmatpush1.msra.mxu0 0.0
    %292 = vmatprep.subr.mxu0 0.0
    %293 = vmatpush1.msra.mxu0 0.0
    %294 = vmatprep.subr.mxu0 0.0
    %295 = vmatpush1.msra.mxu0 0.0
    %296 = vmatprep.subr.mxu0 0.0
    %297 = vmatpush1.msra.mxu0 0.0
    %298 = vmatprep.subr.mxu0 0.0
    %299 = vmatpush1.msra.mxu0 0.0
    %300 = vmatprep.subr.mxu0 0.0
    %301 = vmatpush1.msra.mxu0 0.0
    %302 = vmatprep.subr.mxu0 0.0
    %303 = vmatpush1.msra.mxu0 0.0
    %304 = vmatprep.subr.mxu0 0.0
    %305 = vmatpush1.msra.mxu0 0.0
    %306 = vmatprep.subr.mxu0 0.0
    %307 = vmatpush1.msra.mxu0 0.0
    %308 = vmatprep.subr.mxu0 0.0
    %309 = vmatpush1.msra.mxu0 0.0
    %310 = vmatprep.subr.mxu0 0.0
    %311 = vmatpush1.msra.mxu0 0.0
    %312 = vmatprep.subr.mxu0 0.0
    %313 = vmatpush1.msra.mxu0 0.0
    %314 = vmatprep.subr.mxu0 0.0
    %315 = vmatpush1.msra.mxu0 0.0
    %316 = vmatprep.subr.mxu0 0.0
    %317 = vmatpush1.msra.mxu0 0.0
    %318 = vmatprep.subr.mxu0 0.0
    %319 = vmatpush1.msra.mxu0 0.0
    %320 = vmatprep.mubr.f32.mxu0 0.0
    %321 = vmatmul.mubr.f32.gmra.mrb[0].mxu0 %v246
    %v322 = vpop.f32.mrb[0].mxu0
    %v323 = vadd.f32 %v170, %v322
    %v324 = vpop.f32.mrb[0].mxu0
    %v325 = vadd.f32 %v172, %v324
    %326 = vdwg.mxu0
    %327 = vmatprep.subr.mxu0 %v254
    %328 = vmatpush1.msra.mxu0 %v252
    %329 = vmatprep.subr.mxu0 0.0
    %330 = vmatpush1.msra.mxu0 0.0
    %331 = vmatprep.subr.mxu0 0.0
    %332 = vmatpush1.msra.mxu0 0.0
    %333 = vmatprep.subr.mxu0 0.0
    %334 = vmatpush1.msra.mxu0 0.0
    %335 = vmatprep.subr.mxu0 0.0
    %336 = vmatpush1.msra.mxu0 0.0
    %337 = vmatprep.subr.mxu0 0.0
    %338 = vmatpush1.msra.mxu0 0.0
    %339 = vmatprep.subr.mxu0 0.0
    %340 = vmatpush1.msra.mxu0 0.0
    %341 = vmatprep.subr.mxu0 0.0
    %342 = vmatpush1.msra.mxu0 0.0
    %343 = vmatprep.subr.mxu0 0.0
    %344 = vmatpush1.msra.mxu0 0.0
    %345 = vmatprep.subr.mxu0 0.0
    %346 = vmatpush1.msra.mxu0 0.0
    %347 = vmatprep.subr.mxu0 0.0
    %348 = vmatpush1.msra.mxu0 0.0
    %349 = vmatprep.subr.mxu0 0.0
    %350 = vmatpush1.msra.mxu0 0.0
    %351 = vmatprep.subr.mxu0 0.0
    %352 = vmatpush1.msra.mxu0 0.0
    %353 = vmatprep.subr.mxu0 0.0
    %354 = vmatpush1.msra.mxu0 0.0
    %355 = vmatprep.subr.mxu0 0.0
    %356 = vmatpush1.msra.mxu0 0.0
    %357 = vmatprep.subr.mxu0 0.0
    %358 = vmatpush1.msra.mxu0 0.0
    %359 = vmatprep.subr.mxu0 0.0
    %360 = vmatpush1.msra.mxu0 0.0
    %361 = vmatprep.subr.mxu0 0.0
    %362 = vmatpush1.msra.mxu0 0.0
    %363 = vmatprep.subr.mxu0 0.0
    %364 = vmatpush1.msra.mxu0 0.0
    %365 = vmatprep.subr.mxu0 0.0
    %366 = vmatpush1.msra.mxu0 0.0
    %367 = vmatprep.subr.mxu0 0.0
    %368 = vmatpush1.msra.mxu0 0.0
    %369 = vmatprep.subr.mxu0 0.0
    %370 = vmatpush1.msra.mxu0 0.0
    %371 = vmatprep.subr.mxu0 0.0
    %372 = vmatpush1.msra.mxu0 0.0
    %373 = vmatprep.subr.mxu0 0.0
    %374 = vmatpush1.msra.mxu0 0.0
    %375 = vmatprep.subr.mxu0 0.0
    %376 = vmatpush1.msra.mxu0 0.0
    %377 = vmatprep.subr.mxu0 0.0
    %378 = vmatpush1.msra.mxu0 0.0
    %379 = vmatprep.subr.mxu0 0.0
    %380 = vmatpush1.msra.mxu0 0.0
    %381 = vmatprep.subr.mxu0 0.0
    %382 = vmatpush1.msra.mxu0 0.0
    %383 = vmatprep.subr.mxu0 0.0
    %384 = vmatpush1.msra.mxu0 0.0
    %385 = vmatprep.subr.mxu0 0.0
    %386 = vmatpush1.msra.mxu0 0.0
    %387 = vmatprep.subr.mxu0 0.0
    %388 = vmatpush1.msra.mxu0 0.0
    %389 = vmatprep.subr.mxu0 0.0
    %390 = vmatpush1.msra.mxu0 0.0
    %391 = vmatprep.mubr.f32.mxu0 0.0
    %392 = vmatmul.mubr.f32.gmra.mrb[0].mxu0 %v246
    %v393 = vpop.f32.mrb[0].mxu0
    %v394 = vadd.f32 %v241, %v393
    %v395 = vpop.f32.mrb[0].mxu0
    %v396 = vadd.f32 %v243, %v395
    %397 = vdwg.mxu0
    %398 = vrot.lane.b32.xlu0 %v34, 16
    %v399 = vpop.permute.xlu0 %398
    %400 = vrot.lane.b32.xlu0 %v40, 16
    %v401 = vpop.permute.xlu0 %400
    %402 = vrot.lane.b32.xlu0 %v35, 16
    %v403 = vpop.permute.xlu0 %402
    %404 = vrot.lane.b32.xlu0 %v41, 16
    %v405 = vpop.permute.xlu0 %404
    %vm406 = vcmp.lt.s32.totalorder %v53, 16
    %v407 = vsel %vm406, %v403, %v405
    %v408 = vsel %vm406, %v401, %v403
    %v409 = vsel %vm406, %v399, %v401
    %v410 = vsel %vm406, %v405, %v399
    %s411 = scalar_lea.vmem %s1, 1
    %v412 = vld [vmem:[%s411] ss:$8 sm:$0xf]
    %v414 = vlaneseq
    %v415 = vshrl.u32 %v414, 7
    %v416 = vsub.s32 0, %v415
    %v417 = vrot.slane %v412, %v416
    %v418 = vlaneseq
    %v419 = vshrl.u32 %v418, 7
    %v420 = vsub.s32 1, %v419
    %v421 = vrot.slane %v412, %v420
    %v422 = vlaneseq
    %v423 = vshrl.u32 %v422, 7
    %v424 = vsub.s32 2, %v423
    %v425 = vrot.slane %v412, %v424
    %v426 = vlaneseq
    %v427 = vshrl.u32 %v426, 7
    %v428 = vsub.s32 3, %v427
    %v429 = vrot.slane %v412, %v428
    %v434 = vmul.f32 %v410, %v417
    %v435 = vmul.f32 %v409, %v421
    %v436 = vmul.f32 %v408, %v425
    %v437 = vmul.f32 %v407, %v429
    %s438 = scalar_lea.vmem %s2, 4
    %v439 = vld [vmem:[%s438] sm:$0xf]
    %v441 = vsel %vm86, %v439, 0
    %v444 = vsel %vm90, %v434, 0
    %v447 = vsel %vm90, %v435, 0
    %v450 = vsel %vm90, %v436, 0
    %v453 = vsel %vm90, %v437, 0
    %455 = vmatprep.subr.mxu0 %v447
    %456 = vmatpush1.msra.mxu0 %v444
    %457 = vmatprep.subr.mxu0 0.0
    %458 = vmatpush1.msra.mxu0 0.0
    %459 = vmatprep.subr.mxu0 0.0
    %460 = vmatpush1.msra.mxu0 0.0
    %461 = vmatprep.subr.mxu0 0.0
    %462 = vmatpush1.msra.mxu0 0.0
    %463 = vmatprep.subr.mxu0 0.0
    %464 = vmatpush1.msra.mxu0 0.0
    %465 = vmatprep.subr.mxu0 0.0
    %466 = vmatpush1.msra.mxu0 0.0
    %467 = vmatprep.subr.mxu0 0.0
    %468 = vmatpush1.msra.mxu0 0.0
    %469 = vmatprep.subr.mxu0 0.0
    %470 = vmatpush1.msra.mxu0 0.0
    %471 = vmatprep.subr.mxu0 0.0
    %472 = vmatpush1.msra.mxu0 0.0
    %473 = vmatprep.subr.mxu0 0.0
    %474 = vmatpush1.msra.mxu0 0.0
    %475 = vmatprep.subr.mxu0 0.0
    %476 = vmatpush1.msra.mxu0 0.0
    %477 = vmatprep.subr.mxu0 0.0
    %478 = vmatpush1.msra.mxu0 0.0
    %479 = vmatprep.subr.mxu0 0.0
    %480 = vmatpush1.msra.mxu0 0.0
    %481 = vmatprep.subr.mxu0 0.0
    %482 = vmatpush1.msra.mxu0 0.0
    %483 = vmatprep.subr.mxu0 0.0
    %484 = vmatpush1.msra.mxu0 0.0
    %485 = vmatprep.subr.mxu0 0.0
    %486 = vmatpush1.msra.mxu0 0.0
    %487 = vmatprep.subr.mxu0 0.0
    %488 = vmatpush1.msra.mxu0 0.0
    %489 = vmatprep.subr.mxu0 0.0
    %490 = vmatpush1.msra.mxu0 0.0
    %491 = vmatprep.subr.mxu0 0.0
    %492 = vmatpush1.msra.mxu0 0.0
    %493 = vmatprep.subr.mxu0 0.0
    %494 = vmatpush1.msra.mxu0 0.0
    %495 = vmatprep.subr.mxu0 0.0
    %496 = vmatpush1.msra.mxu0 0.0
    %497 = vmatprep.subr.mxu0 0.0
    %498 = vmatpush1.msra.mxu0 0.0
    %499 = vmatprep.subr.mxu0 0.0
    %500 = vmatpush1.msra.mxu0 0.0
    %501 = vmatprep.subr.mxu0 0.0
    %502 = vmatpush1.msra.mxu0 0.0
    %503 = vmatprep.subr.mxu0 0.0
    %504 = vmatpush1.msra.mxu0 0.0
    %505 = vmatprep.subr.mxu0 0.0
    %506 = vmatpush1.msra.mxu0 0.0
    %507 = vmatprep.subr.mxu0 0.0
    %508 = vmatpush1.msra.mxu0 0.0
    %509 = vmatprep.subr.mxu0 0.0
    %510 = vmatpush1.msra.mxu0 0.0
    %511 = vmatprep.subr.mxu0 0.0
    %512 = vmatpush1.msra.mxu0 0.0
    %513 = vmatprep.subr.mxu0 0.0
    %514 = vmatpush1.msra.mxu0 0.0
    %515 = vmatprep.subr.mxu0 0.0
    %516 = vmatpush1.msra.mxu0 0.0
    %517 = vmatprep.subr.mxu0 0.0
    %518 = vmatpush1.msra.mxu0 0.0
    %519 = vmatprep.mubr.f32.mxu0 0.0
    %520 = vmatmul.mubr.f32.gmra.mrb[0].mxu0 %v441
    %v521 = vpop.f32.mrb[0].mxu0
    %v522 = vadd.f32 0.0, %v521
    %v523 = vpop.f32.mrb[0].mxu0
    %v524 = vadd.f32 0.0, %v523
    %525 = vdwg.mxu0
    %526 = vmatprep.subr.mxu0 %v453
    %527 = vmatpush1.msra.mxu0 %v450
    %528 = vmatprep.subr.mxu0 0.0
    %529 = vmatpush1.msra.mxu0 0.0
    %530 = vmatprep.subr.mxu0 0.0
    %531 = vmatpush1.msra.mxu0 0.0
    %532 = vmatprep.subr.mxu0 0.0
    %533 = vmatpush1.msra.mxu0 0.0
    %534 = vmatprep.subr.mxu0 0.0
    %535 = vmatpush1.msra.mxu0 0.0
    %536 = vmatprep.subr.mxu0 0.0
    %537 = vmatpush1.msra.mxu0 0.0
    %538 = vmatprep.subr.mxu0 0.0
    %539 = vmatpush1.msra.mxu0 0.0
    %540 = vmatprep.subr.mxu0 0.0
    %541 = vmatpush1.msra.mxu0 0.0
    %542 = vmatprep.subr.mxu0 0.0
    %543 = vmatpush1.msra.mxu0 0.0
    %544 = vmatprep.subr.mxu0 0.0
    %545 = vmatpush1.msra.mxu0 0.0
    %546 = vmatprep.subr.mxu0 0.0
    %547 = vmatpush1.msra.mxu0 0.0
    %548 = vmatprep.subr.mxu0 0.0
    %549 = vmatpush1.msra.mxu0 0.0
    %550 = vmatprep.subr.mxu0 0.0
    %551 = vmatpush1.msra.mxu0 0.0
    %552 = vmatprep.subr.mxu0 0.0
    %553 = vmatpush1.msra.mxu0 0.0
    %554 = vmatprep.subr.mxu0 0.0
    %555 = vmatpush1.msra.mxu0 0.0
    %556 = vmatprep.subr.mxu0 0.0
    %557 = vmatpush1.msra.mxu0 0.0
    %558 = vmatprep.subr.mxu0 0.0
    %559 = vmatpush1.msra.mxu0 0.0
    %560 = vmatprep.subr.mxu0 0.0
    %561 = vmatpush1.msra.mxu0 0.0
    %562 = vmatprep.subr.mxu0 0.0
    %563 = vmatpush1.msra.mxu0 0.0
    %564 = vmatprep.subr.mxu0 0.0
    %565 = vmatpush1.msra.mxu0 0.0
    %566 = vmatprep.subr.mxu0 0.0
    %567 = vmatpush1.msra.mxu0 0.0
    %568 = vmatprep.subr.mxu0 0.0
    %569 = vmatpush1.msra.mxu0 0.0
    %570 = vmatprep.subr.mxu0 0.0
    %571 = vmatpush1.msra.mxu0 0.0
    %572 = vmatprep.subr.mxu0 0.0
    %573 = vmatpush1.msra.mxu0 0.0
    %574 = vmatprep.subr.mxu0 0.0
    %575 = vmatpush1.msra.mxu0 0.0
    %576 = vmatprep.subr.mxu0 0.0
    %577 = vmatpush1.msra.mxu0 0.0
    %578 = vmatprep.subr.mxu0 0.0
    %579 = vmatpush1.msra.mxu0 0.0
    %580 = vmatprep.subr.mxu0 0.0
    %581 = vmatpush1.msra.mxu0 0.0
    %582 = vmatprep.subr.mxu0 0.0
    %583 = vmatpush1.msra.mxu0 0.0
    %584 = vmatprep.subr.mxu0 0.0
    %585 = vmatpush1.msra.mxu0 0.0
    %586 = vmatprep.subr.mxu0 0.0
    %587 = vmatpush1.msra.mxu0 0.0
    %588 = vmatprep.subr.mxu0 0.0
    %589 = vmatpush1.msra.mxu0 0.0
    %590 = vmatprep.mubr.f32.mxu0 0.0
    %591 = vmatmul.mubr.f32.gmra.mrb[0].mxu0 %v441
    %v592 = vpop.f32.mrb[0].mxu0
    %v593 = vadd.f32 0.0, %v592
    %v594 = vpop.f32.mrb[0].mxu0
    %v595 = vadd.f32 0.0, %v594
    %596 = vdwg.mxu0
    %v597 = vadd.f32 %v323, %v522
    %v598 = vadd.f32 %v325, %v524
    %v599 = vadd.f32 %v394, %v593
    %v600 = vadd.f32 %v396, %v595
    %601 = vrot.lane.b32.xlu0 %v34, 15
    %v602 = vpop.permute.xlu0 %601
    %603 = vrot.lane.b32.xlu0 %v40, 15
    %v604 = vpop.permute.xlu0 %603
    %605 = vrot.lane.b32.xlu0 %v35, 15
    %v606 = vpop.permute.xlu0 %605
    %607 = vrot.lane.b32.xlu0 %v41, 15
    %v608 = vpop.permute.xlu0 %607
    %vm609 = vcmp.lt.s32.totalorder %v53, 15
    %v610 = vsel %vm609, %v606, %v608
    %v611 = vsel %vm609, %v604, %v606
    %v612 = vsel %vm609, %v602, %v604
    %v613 = vsel %vm609, %v608, %v602
    %s614 = scalar_lea.vmem %s1, 2
    %v615 = vld [vmem:[%s614] ss:$8 sm:$0xf]
    %v617 = vlaneseq
    %v618 = vshrl.u32 %v617, 7
    %v619 = vsub.s32 0, %v618
    %v620 = vrot.slane %v615, %v619
    %v621 = vlaneseq
    %v622 = vshrl.u32 %v621, 7
    %v623 = vsub.s32 1, %v622
    %v624 = vrot.slane %v615, %v623
    %v625 = vlaneseq
    %v626 = vshrl.u32 %v625, 7
    %v627 = vsub.s32 2, %v626
    %v628 = vrot.slane %v615, %v627
    %v629 = vlaneseq
    %v630 = vshrl.u32 %v629, 7
    %v631 = vsub.s32 3, %v630
    %v632 = vrot.slane %v615, %v631
    %v637 = vmul.f32 %v613, %v620
    %v638 = vmul.f32 %v612, %v624
    %v639 = vmul.f32 %v611, %v628
    %v640 = vmul.f32 %v610, %v632
    %s641 = scalar_lea.vmem %s2, 8
    %v642 = vld [vmem:[%s641] sm:$0xf]
    %v644 = vsel %vm86, %v642, 0
    %v647 = vsel %vm90, %v637, 0
    %v650 = vsel %vm90, %v638, 0
    %v653 = vsel %vm90, %v639, 0
    %v656 = vsel %vm90, %v640, 0
    %658 = vmatprep.subr.mxu0 %v650
    %659 = vmatpush1.msra.mxu0 %v647
    %660 = vmatprep.subr.mxu0 0.0
    %661 = vmatpush1.msra.mxu0 0.0
    %662 = vmatprep.subr.mxu0 0.0
    %663 = vmatpush1.msra.mxu0 0.0
    %664 = vmatprep.subr.mxu0 0.0
    %665 = vmatpush1.msra.mxu0 0.0
    %666 = vmatprep.subr.mxu0 0.0
    %667 = vmatpush1.msra.mxu0 0.0
    %668 = vmatprep.subr.mxu0 0.0
    %669 = vmatpush1.msra.mxu0 0.0
    %670 = vmatprep.subr.mxu0 0.0
    %671 = vmatpush1.msra.mxu0 0.0
    %672 = vmatprep.subr.mxu0 0.0
    %673 = vmatpush1.msra.mxu0 0.0
    %674 = vmatprep.subr.mxu0 0.0
    %675 = vmatpush1.msra.mxu0 0.0
    %676 = vmatprep.subr.mxu0 0.0
    %677 = vmatpush1.msra.mxu0 0.0
    %678 = vmatprep.subr.mxu0 0.0
    %679 = vmatpush1.msra.mxu0 0.0
    %680 = vmatprep.subr.mxu0 0.0
    %681 = vmatpush1.msra.mxu0 0.0
    %682 = vmatprep.subr.mxu0 0.0
    %683 = vmatpush1.msra.mxu0 0.0
    %684 = vmatprep.subr.mxu0 0.0
    %685 = vmatpush1.msra.mxu0 0.0
    %686 = vmatprep.subr.mxu0 0.0
    %687 = vmatpush1.msra.mxu0 0.0
    %688 = vmatprep.subr.mxu0 0.0
    %689 = vmatpush1.msra.mxu0 0.0
    %690 = vmatprep.subr.mxu0 0.0
    %691 = vmatpush1.msra.mxu0 0.0
    %692 = vmatprep.subr.mxu0 0.0
    %693 = vmatpush1.msra.mxu0 0.0
    %694 = vmatprep.subr.mxu0 0.0
    %695 = vmatpush1.msra.mxu0 0.0
    %696 = vmatprep.subr.mxu0 0.0
    %697 = vmatpush1.msra.mxu0 0.0
    %698 = vmatprep.subr.mxu0 0.0
    %699 = vmatpush1.msra.mxu0 0.0
    %700 = vmatprep.subr.mxu0 0.0
    %701 = vmatpush1.msra.mxu0 0.0
    %702 = vmatprep.subr.mxu0 0.0
    %703 = vmatpush1.msra.mxu0 0.0
    %704 = vmatprep.subr.mxu0 0.0
    %705 = vmatpush1.msra.mxu0 0.0
    %706 = vmatprep.subr.mxu0 0.0
    %707 = vmatpush1.msra.mxu0 0.0
    %708 = vmatprep.subr.mxu0 0.0
    %709 = vmatpush1.msra.mxu0 0.0
    %710 = vmatprep.subr.mxu0 0.0
    %711 = vmatpush1.msra.mxu0 0.0
    %712 = vmatprep.subr.mxu0 0.0
    %713 = vmatpush1.msra.mxu0 0.0
    %714 = vmatprep.subr.mxu0 0.0
    %715 = vmatpush1.msra.mxu0 0.0
    %716 = vmatprep.subr.mxu0 0.0
    %717 = vmatpush1.msra.mxu0 0.0
    %718 = vmatprep.subr.mxu0 0.0
    %719 = vmatpush1.msra.mxu0 0.0
    %720 = vmatprep.subr.mxu0 0.0
    %721 = vmatpush1.msra.mxu0 0.0
    %722 = vmatprep.mubr.f32.mxu0 0.0
    %723 = vmatmul.mubr.f32.gmra.mrb[0].mxu0 %v644
    %v724 = vpop.f32.mrb[0].mxu0
    %v725 = vadd.f32 0.0, %v724
    %v726 = vpop.f32.mrb[0].mxu0
    %v727 = vadd.f32 0.0, %v726
    %728 = vdwg.mxu0
    %729 = vmatprep.subr.mxu0 %v656
    %730 = vmatpush1.msra.mxu0 %v653
    %731 = vmatprep.subr.mxu0 0.0
    %732 = vmatpush1.msra.mxu0 0.0
    %733 = vmatprep.subr.mxu0 0.0
    %734 = vmatpush1.msra.mxu0 0.0
    %735 = vmatprep.subr.mxu0 0.0
    %736 = vmatpush1.msra.mxu0 0.0
    %737 = vmatprep.subr.mxu0 0.0
    %738 = vmatpush1.msra.mxu0 0.0
    %739 = vmatprep.subr.mxu0 0.0
    %740 = vmatpush1.msra.mxu0 0.0
    %741 = vmatprep.subr.mxu0 0.0
    %742 = vmatpush1.msra.mxu0 0.0
    %743 = vmatprep.subr.mxu0 0.0
    %744 = vmatpush1.msra.mxu0 0.0
    %745 = vmatprep.subr.mxu0 0.0
    %746 = vmatpush1.msra.mxu0 0.0
    %747 = vmatprep.subr.mxu0 0.0
    %748 = vmatpush1.msra.mxu0 0.0
    %749 = vmatprep.subr.mxu0 0.0
    %750 = vmatpush1.msra.mxu0 0.0
    %751 = vmatprep.subr.mxu0 0.0
    %752 = vmatpush1.msra.mxu0 0.0
    %753 = vmatprep.subr.mxu0 0.0
    %754 = vmatpush1.msra.mxu0 0.0
    %755 = vmatprep.subr.mxu0 0.0
    %756 = vmatpush1.msra.mxu0 0.0
    %757 = vmatprep.subr.mxu0 0.0
    %758 = vmatpush1.msra.mxu0 0.0
    %759 = vmatprep.subr.mxu0 0.0
    %760 = vmatpush1.msra.mxu0 0.0
    %761 = vmatprep.subr.mxu0 0.0
    %762 = vmatpush1.msra.mxu0 0.0
    %763 = vmatprep.subr.mxu0 0.0
    %764 = vmatpush1.msra.mxu0 0.0
    %765 = vmatprep.subr.mxu0 0.0
    %766 = vmatpush1.msra.mxu0 0.0
    %767 = vmatprep.subr.mxu0 0.0
    %768 = vmatpush1.msra.mxu0 0.0
    %769 = vmatprep.subr.mxu0 0.0
    %770 = vmatpush1.msra.mxu0 0.0
    %771 = vmatprep.subr.mxu0 0.0
    %772 = vmatpush1.msra.mxu0 0.0
    %773 = vmatprep.subr.mxu0 0.0
    %774 = vmatpush1.msra.mxu0 0.0
    %775 = vmatprep.subr.mxu0 0.0
    %776 = vmatpush1.msra.mxu0 0.0
    %777 = vmatprep.subr.mxu0 0.0
    %778 = vmatpush1.msra.mxu0 0.0
    %779 = vmatprep.subr.mxu0 0.0
    %780 = vmatpush1.msra.mxu0 0.0
    %781 = vmatprep.subr.mxu0 0.0
    %782 = vmatpush1.msra.mxu0 0.0
    %783 = vmatprep.subr.mxu0 0.0
    %784 = vmatpush1.msra.mxu0 0.0
    %785 = vmatprep.subr.mxu0 0.0
    %786 = vmatpush1.msra.mxu0 0.0
    %787 = vmatprep.subr.mxu0 0.0
    %788 = vmatpush1.msra.mxu0 0.0
    %789 = vmatprep.subr.mxu0 0.0
    %790 = vmatpush1.msra.mxu0 0.0
    %791 = vmatprep.subr.mxu0 0.0
    %792 = vmatpush1.msra.mxu0 0.0
    %793 = vmatprep.mubr.f32.mxu0 0.0
    %794 = vmatmul.mubr.f32.gmra.mrb[0].mxu0 %v644
    %v795 = vpop.f32.mrb[0].mxu0
    %v796 = vadd.f32 0.0, %v795
    %v797 = vpop.f32.mrb[0].mxu0
    %v798 = vadd.f32 0.0, %v797
    %799 = vdwg.mxu0
    %v800 = vadd.f32 %v597, %v725
    %v801 = vadd.f32 %v598, %v727
    %v802 = vadd.f32 %v599, %v796
    %v803 = vadd.f32 %v600, %v798
    %804 = vrot.lane.b32.xlu0 %v34, 1
    %v805 = vpop.permute.xlu0 %804
    %806 = vrot.lane.b32.xlu0 %v40, 1
    %v807 = vpop.permute.xlu0 %806
    %808 = vrot.lane.b32.xlu0 %v35, 1
    %v809 = vpop.permute.xlu0 %808
    %810 = vrot.lane.b32.xlu0 %v41, 1
    %v811 = vpop.permute.xlu0 %810
    %vm812 = vcmp.lt.s32.totalorder %v53, 1
    %v813 = vsel %vm812, %v809, %v811
    %v814 = vsel %vm812, %v807, %v809
    %v815 = vsel %vm812, %v805, %v807
    %v816 = vsel %vm812, %v811, %v805
    %s817 = scalar_lea.vmem %s1, 3
    %v818 = vld [vmem:[%s817] ss:$8 sm:$0xf]
    %v820 = vlaneseq
    %v821 = vshrl.u32 %v820, 7
    %v822 = vsub.s32 0, %v821
    %v823 = vrot.slane %v818, %v822
    %v824 = vlaneseq
    %v825 = vshrl.u32 %v824, 7
    %v826 = vsub.s32 1, %v825
    %v827 = vrot.slane %v818, %v826
    %v828 = vlaneseq
    %v829 = vshrl.u32 %v828, 7
    %v830 = vsub.s32 2, %v829
    %v831 = vrot.slane %v818, %v830
    %v832 = vlaneseq
    %v833 = vshrl.u32 %v832, 7
    %v834 = vsub.s32 3, %v833
    %v835 = vrot.slane %v818, %v834
    %v840 = vmul.f32 %v816, %v823
    %v841 = vmul.f32 %v815, %v827
    %v842 = vmul.f32 %v814, %v831
    %v843 = vmul.f32 %v813, %v835
    %s844 = scalar_lea.vmem %s2, 12
    %v845 = vld [vmem:[%s844] sm:$0xf]
    %v847 = vsel %vm86, %v845, 0
    %v850 = vsel %vm90, %v840, 0
    %v853 = vsel %vm90, %v841, 0
    %v856 = vsel %vm90, %v842, 0
    %v859 = vsel %vm90, %v843, 0
    %861 = vmatprep.subr.mxu0 %v853
    %862 = vmatpush1.msra.mxu0 %v850
    %863 = vmatprep.subr.mxu0 0.0
    %864 = vmatpush1.msra.mxu0 0.0
    %865 = vmatprep.subr.mxu0 0.0
    %866 = vmatpush1.msra.mxu0 0.0
    %867 = vmatprep.subr.mxu0 0.0
    %868 = vmatpush1.msra.mxu0 0.0
    %869 = vmatprep.subr.mxu0 0.0
    %870 = vmatpush1.msra.mxu0 0.0
    %871 = vmatprep.subr.mxu0 0.0
    %872 = vmatpush1.msra.mxu0 0.0
    %873 = vmatprep.subr.mxu0 0.0
    %874 = vmatpush1.msra.mxu0 0.0
    %875 = vmatprep.subr.mxu0 0.0
    %876 = vmatpush1.msra.mxu0 0.0
    %877 = vmatprep.subr.mxu0 0.0
    %878 = vmatpush1.msra.mxu0 0.0
    %879 = vmatprep.subr.mxu0 0.0
    %880 = vmatpush1.msra.mxu0 0.0
    %881 = vmatprep.subr.mxu0 0.0
    %882 = vmatpush1.msra.mxu0 0.0
    %883 = vmatprep.subr.mxu0 0.0
    %884 = vmatpush1.msra.mxu0 0.0
    %885 = vmatprep.subr.mxu0 0.0
    %886 = vmatpush1.msra.mxu0 0.0
    %887 = vmatprep.subr.mxu0 0.0
    %888 = vmatpush1.msra.mxu0 0.0
    %889 = vmatprep.subr.mxu0 0.0
    %890 = vmatpush1.msra.mxu0 0.0
    %891 = vmatprep.subr.mxu0 0.0
    %892 = vmatpush1.msra.mxu0 0.0
    %893 = vmatprep.subr.mxu0 0.0
    %894 = vmatpush1.msra.mxu0 0.0
    %895 = vmatprep.subr.mxu0 0.0
    %896 = vmatpush1.msra.mxu0 0.0
    %897 = vmatprep.subr.mxu0 0.0
    %898 = vmatpush1.msra.mxu0 0.0
    %899 = vmatprep.subr.mxu0 0.0
    %900 = vmatpush1.msra.mxu0 0.0
    %901 = vmatprep.subr.mxu0 0.0
    %902 = vmatpush1.msra.mxu0 0.0
    %903 = vmatprep.subr.mxu0 0.0
    %904 = vmatpush1.msra.mxu0 0.0
    %905 = vmatprep.subr.mxu0 0.0
    %906 = vmatpush1.msra.mxu0 0.0
    %907 = vmatprep.subr.mxu0 0.0
    %908 = vmatpush1.msra.mxu0 0.0
    %909 = vmatprep.subr.mxu0 0.0
    %910 = vmatpush1.msra.mxu0 0.0
    %911 = vmatprep.subr.mxu0 0.0
    %912 = vmatpush1.msra.mxu0 0.0
    %913 = vmatprep.subr.mxu0 0.0
    %914 = vmatpush1.msra.mxu0 0.0
    %915 = vmatprep.subr.mxu0 0.0
    %916 = vmatpush1.msra.mxu0 0.0
    %917 = vmatprep.subr.mxu0 0.0
    %918 = vmatpush1.msra.mxu0 0.0
    %919 = vmatprep.subr.mxu0 0.0
    %920 = vmatpush1.msra.mxu0 0.0
    %921 = vmatprep.subr.mxu0 0.0
    %922 = vmatpush1.msra.mxu0 0.0
    %923 = vmatprep.subr.mxu0 0.0
    %924 = vmatpush1.msra.mxu0 0.0
    %925 = vmatprep.mubr.f32.mxu0 0.0
    %926 = vmatmul.mubr.f32.gmra.mrb[0].mxu0 %v847
    %v927 = vpop.f32.mrb[0].mxu0
    %v928 = vadd.f32 0.0, %v927
    %v929 = vpop.f32.mrb[0].mxu0
    %v930 = vadd.f32 0.0, %v929
    %931 = vdwg.mxu0
    %932 = vmatprep.subr.mxu0 %v859
    %933 = vmatpush1.msra.mxu0 %v856
    %934 = vmatprep.subr.mxu0 0.0
    %935 = vmatpush1.msra.mxu0 0.0
    %936 = vmatprep.subr.mxu0 0.0
    %937 = vmatpush1.msra.mxu0 0.0
    %938 = vmatprep.subr.mxu0 0.0
    %939 = vmatpush1.msra.mxu0 0.0
    %940 = vmatprep.subr.mxu0 0.0
    %941 = vmatpush1.msra.mxu0 0.0
    %942 = vmatprep.subr.mxu0 0.0
    %943 = vmatpush1.msra.mxu0 0.0
    %944 = vmatprep.subr.mxu0 0.0
    %945 = vmatpush1.msra.mxu0 0.0
    %946 = vmatprep.subr.mxu0 0.0
    %947 = vmatpush1.msra.mxu0 0.0
    %948 = vmatprep.subr.mxu0 0.0
    %949 = vmatpush1.msra.mxu0 0.0
    %950 = vmatprep.subr.mxu0 0.0
    %951 = vmatpush1.msra.mxu0 0.0
    %952 = vmatprep.subr.mxu0 0.0
    %953 = vmatpush1.msra.mxu0 0.0
    %954 = vmatprep.subr.mxu0 0.0
    %955 = vmatpush1.msra.mxu0 0.0
    %956 = vmatprep.subr.mxu0 0.0
    %957 = vmatpush1.msra.mxu0 0.0
    %958 = vmatprep.subr.mxu0 0.0
    %959 = vmatpush1.msra.mxu0 0.0
    %960 = vmatprep.subr.mxu0 0.0
    %961 = vmatpush1.msra.mxu0 0.0
    %962 = vmatprep.subr.mxu0 0.0
    %963 = vmatpush1.msra.mxu0 0.0
    %964 = vmatprep.subr.mxu0 0.0
    %965 = vmatpush1.msra.mxu0 0.0
    %966 = vmatprep.subr.mxu0 0.0
    %967 = vmatpush1.msra.mxu0 0.0
    %968 = vmatprep.subr.mxu0 0.0
    %969 = vmatpush1.msra.mxu0 0.0
    %970 = vmatprep.subr.mxu0 0.0
    %971 = vmatpush1.msra.mxu0 0.0
    %972 = vmatprep.subr.mxu0 0.0
    %973 = vmatpush1.msra.mxu0 0.0
    %974 = vmatprep.subr.mxu0 0.0
    %975 = vmatpush1.msra.mxu0 0.0
    %976 = vmatprep.subr.mxu0 0.0
    %977 = vmatpush1.msra.mxu0 0.0
    %978 = vmatprep.subr.mxu0 0.0
    %979 = vmatpush1.msra.mxu0 0.0
    %980 = vmatprep.subr.mxu0 0.0
    %981 = vmatpush1.msra.mxu0 0.0
    %982 = vmatprep.subr.mxu0 0.0
    %983 = vmatpush1.msra.mxu0 0.0
    %984 = vmatprep.subr.mxu0 0.0
    %985 = vmatpush1.msra.mxu0 0.0
    %986 = vmatprep.subr.mxu0 0.0
    %987 = vmatpush1.msra.mxu0 0.0
    %988 = vmatprep.subr.mxu0 0.0
    %989 = vmatpush1.msra.mxu0 0.0
    %990 = vmatprep.subr.mxu0 0.0
    %991 = vmatpush1.msra.mxu0 0.0
    %992 = vmatprep.subr.mxu0 0.0
    %993 = vmatpush1.msra.mxu0 0.0
    %994 = vmatprep.subr.mxu0 0.0
    %995 = vmatpush1.msra.mxu0 0.0
    %996 = vmatprep.mubr.f32.mxu0 0.0
    %997 = vmatmul.mubr.f32.gmra.mrb[0].mxu0 %v847
    %v998 = vpop.f32.mrb[0].mxu0
    %v999 = vadd.f32 0.0, %v998
    %v1000 = vpop.f32.mrb[0].mxu0
    %v1001 = vadd.f32 0.0, %v1000
    %1002 = vdwg.mxu0
    %v1003 = vadd.f32 %v800, %v928
    %v1004 = vadd.f32 %v801, %v930
    %v1005 = vadd.f32 %v802, %v999
    %v1006 = vadd.f32 %v803, %v1001
    %1007 = vrot.lane.b32.xlu0 %v34, 127
    %v1008 = vpop.permute.xlu0 %1007
    %1009 = vrot.lane.b32.xlu0 %v40, 127
    %v1010 = vpop.permute.xlu0 %1009
    %1011 = vrot.lane.b32.xlu0 %v35, 127
    %v1012 = vpop.permute.xlu0 %1011
    %1013 = vrot.lane.b32.xlu0 %v41, 127
    %v1014 = vpop.permute.xlu0 %1013
    %vm1015 = vcmp.lt.s32.totalorder %v53, 127
    %v1016 = vsel %vm1015, %v1012, %v1014
    %v1017 = vsel %vm1015, %v1010, %v1012
    %v1018 = vsel %vm1015, %v1008, %v1010
    %v1019 = vsel %vm1015, %v1014, %v1008
    %s1020 = scalar_lea.vmem %s1, 4
    %v1021 = vld [vmem:[%s1020] ss:$8 sm:$0xf]
    %v1023 = vlaneseq
    %v1024 = vshrl.u32 %v1023, 7
    %v1025 = vsub.s32 0, %v1024
    %v1026 = vrot.slane %v1021, %v1025
    %v1027 = vlaneseq
    %v1028 = vshrl.u32 %v1027, 7
    %v1029 = vsub.s32 1, %v1028
    %v1030 = vrot.slane %v1021, %v1029
    %v1031 = vlaneseq
    %v1032 = vshrl.u32 %v1031, 7
    %v1033 = vsub.s32 2, %v1032
    %v1034 = vrot.slane %v1021, %v1033
    %v1035 = vlaneseq
    %v1036 = vshrl.u32 %v1035, 7
    %v1037 = vsub.s32 3, %v1036
    %v1038 = vrot.slane %v1021, %v1037
    %v1043 = vmul.f32 %v1018, %v1026
    %v1044 = vmul.f32 %v1017, %v1030
    %v1045 = vmul.f32 %v1016, %v1034
    %v1046 = vmul.f32 %v1019, %v1038
    %s1047 = scalar_lea.vmem %s2, 20
    %v1048 = vld [vmem:[%s1047] sm:$0xf]
    %v1050 = vsel %vm86, %v1048, 0
    %v1053 = vsel %vm90, %v1043, 0
    %v1056 = vsel %vm90, %v1044, 0
    %v1059 = vsel %vm90, %v1045, 0
    %v1062 = vsel %vm90, %v1046, 0
    %1064 = vmatprep.subr.mxu0 %v1056
    %1065 = vmatpush1.msra.mxu0 %v1053
    %1066 = vmatprep.subr.mxu0 0.0
    %1067 = vmatpush1.msra.mxu0 0.0
    %1068 = vmatprep.subr.mxu0 0.0
    %1069 = vmatpush1.msra.mxu0 0.0
    %1070 = vmatprep.subr.mxu0 0.0
    %1071 = vmatpush1.msra.mxu0 0.0
    %1072 = vmatprep.subr.mxu0 0.0
    %1073 = vmatpush1.msra.mxu0 0.0
    %1074 = vmatprep.subr.mxu0 0.0
    %1075 = vmatpush1.msra.mxu0 0.0
    %1076 = vmatprep.subr.mxu0 0.0
    %1077 = vmatpush1.msra.mxu0 0.0
    %1078 = vmatprep.subr.mxu0 0.0
    %1079 = vmatpush1.msra.mxu0 0.0
    %1080 = vmatprep.subr.mxu0 0.0
    %1081 = vmatpush1.msra.mxu0 0.0
    %1082 = vmatprep.subr.mxu0 0.0
    %1083 = vmatpush1.msra.mxu0 0.0
    %1084 = vmatprep.subr.mxu0 0.0
    %1085 = vmatpush1.msra.mxu0 0.0
    %1086 = vmatprep.subr.mxu0 0.0
    %1087 = vmatpush1.msra.mxu0 0.0
    %1088 = vmatprep.subr.mxu0 0.0
    %1089 = vmatpush1.msra.mxu0 0.0
    %1090 = vmatprep.subr.mxu0 0.0
    %1091 = vmatpush1.msra.mxu0 0.0
    %1092 = vmatprep.subr.mxu0 0.0
    %1093 = vmatpush1.msra.mxu0 0.0
    %1094 = vmatprep.subr.mxu0 0.0
    %1095 = vmatpush1.msra.mxu0 0.0
    %1096 = vmatprep.subr.mxu0 0.0
    %1097 = vmatpush1.msra.mxu0 0.0
    %1098 = vmatprep.subr.mxu0 0.0
    %1099 = vmatpush1.msra.mxu0 0.0
    %1100 = vmatprep.subr.mxu0 0.0
    %1101 = vmatpush1.msra.mxu0 0.0
    %1102 = vmatprep.subr.mxu0 0.0
    %1103 = vmatpush1.msra.mxu0 0.0
    %1104 = vmatprep.subr.mxu0 0.0
    %1105 = vmatpush1.msra.mxu0 0.0
    %1106 = vmatprep.subr.mxu0 0.0
    %1107 = vmatpush1.msra.mxu0 0.0
    %1108 = vmatprep.subr.mxu0 0.0
    %1109 = vmatpush1.msra.mxu0 0.0
    %1110 = vmatprep.subr.mxu0 0.0
    %1111 = vmatpush1.msra.mxu0 0.0
    %1112 = vmatprep.subr.mxu0 0.0
    %1113 = vmatpush1.msra.mxu0 0.0
    %1114 = vmatprep.subr.mxu0 0.0
    %1115 = vmatpush1.msra.mxu0 0.0
    %1116 = vmatprep.subr.mxu0 0.0
    %1117 = vmatpush1.msra.mxu0 0.0
    %1118 = vmatprep.subr.mxu0 0.0
    %1119 = vmatpush1.msra.mxu0 0.0
    %1120 = vmatprep.subr.mxu0 0.0
    %1121 = vmatpush1.msra.mxu0 0.0
    %1122 = vmatprep.subr.mxu0 0.0
    %1123 = vmatpush1.msra.mxu0 0.0
    %1124 = vmatprep.subr.mxu0 0.0
    %1125 = vmatpush1.msra.mxu0 0.0
    %1126 = vmatprep.subr.mxu0 0.0
    %1127 = vmatpush1.msra.mxu0 0.0
    %1128 = vmatprep.mubr.f32.mxu0 0.0
    %1129 = vmatmul.mubr.f32.gmra.mrb[0].mxu0 %v1050
    %v1130 = vpop.f32.mrb[0].mxu0
    %v1131 = vadd.f32 0.0, %v1130
    %v1132 = vpop.f32.mrb[0].mxu0
    %v1133 = vadd.f32 0.0, %v1132
    %1134 = vdwg.mxu0
    %1135 = vmatprep.subr.mxu0 %v1062
    %1136 = vmatpush1.msra.mxu0 %v1059
    %1137 = vmatprep.subr.mxu0 0.0
    %1138 = vmatpush1.msra.mxu0 0.0
    %1139 = vmatprep.subr.mxu0 0.0
    %1140 = vmatpush1.msra.mxu0 0.0
    %1141 = vmatprep.subr.mxu0 0.0
    %1142 = vmatpush1.msra.mxu0 0.0
    %1143 = vmatprep.subr.mxu0 0.0
    %1144 = vmatpush1.msra.mxu0 0.0
    %1145 = vmatprep.subr.mxu0 0.0
    %1146 = vmatpush1.msra.mxu0 0.0
    %1147 = vmatprep.subr.mxu0 0.0
    %1148 = vmatpush1.msra.mxu0 0.0
    %1149 = vmatprep.subr.mxu0 0.0
    %1150 = vmatpush1.msra.mxu0 0.0
    %1151 = vmatprep.subr.mxu0 0.0
    %1152 = vmatpush1.msra.mxu0 0.0
    %1153 = vmatprep.subr.mxu0 0.0
    %1154 = vmatpush1.msra.mxu0 0.0
    %1155 = vmatprep.subr.mxu0 0.0
    %1156 = vmatpush1.msra.mxu0 0.0
    %1157 = vmatprep.subr.mxu0 0.0
    %1158 = vmatpush1.msra.mxu0 0.0
    %1159 = vmatprep.subr.mxu0 0.0
    %1160 = vmatpush1.msra.mxu0 0.0
    %1161 = vmatprep.subr.mxu0 0.0
    %1162 = vmatpush1.msra.mxu0 0.0
    %1163 = vmatprep.subr.mxu0 0.0
    %1164 = vmatpush1.msra.mxu0 0.0
    %1165 = vmatprep.subr.mxu0 0.0
    %1166 = vmatpush1.msra.mxu0 0.0
    %1167 = vmatprep.subr.mxu0 0.0
    %1168 = vmatpush1.msra.mxu0 0.0
    %1169 = vmatprep.subr.mxu0 0.0
    %1170 = vmatpush1.msra.mxu0 0.0
    %1171 = vmatprep.subr.mxu0 0.0
    %1172 = vmatpush1.msra.mxu0 0.0
    %1173 = vmatprep.subr.mxu0 0.0
    %1174 = vmatpush1.msra.mxu0 0.0
    %1175 = vmatprep.subr.mxu0 0.0
    %1176 = vmatpush1.msra.mxu0 0.0
    %1177 = vmatprep.subr.mxu0 0.0
    %1178 = vmatpush1.msra.mxu0 0.0
    %1179 = vmatprep.subr.mxu0 0.0
    %1180 = vmatpush1.msra.mxu0 0.0
    %1181 = vmatprep.subr.mxu0 0.0
    %1182 = vmatpush1.msra.mxu0 0.0
    %1183 = vmatprep.subr.mxu0 0.0
    %1184 = vmatpush1.msra.mxu0 0.0
    %1185 = vmatprep.subr.mxu0 0.0
    %1186 = vmatpush1.msra.mxu0 0.0
    %1187 = vmatprep.subr.mxu0 0.0
    %1188 = vmatpush1.msra.mxu0 0.0
    %1189 = vmatprep.subr.mxu0 0.0
    %1190 = vmatpush1.msra.mxu0 0.0
    %1191 = vmatprep.subr.mxu0 0.0
    %1192 = vmatpush1.msra.mxu0 0.0
    %1193 = vmatprep.subr.mxu0 0.0
    %1194 = vmatpush1.msra.mxu0 0.0
    %1195 = vmatprep.subr.mxu0 0.0
    %1196 = vmatpush1.msra.mxu0 0.0
    %1197 = vmatprep.subr.mxu0 0.0
    %1198 = vmatpush1.msra.mxu0 0.0
    %1199 = vmatprep.mubr.f32.mxu0 0.0
    %1200 = vmatmul.mubr.f32.gmra.mrb[0].mxu0 %v1050
    %v1201 = vpop.f32.mrb[0].mxu0
    %v1202 = vadd.f32 0.0, %v1201
    %v1203 = vpop.f32.mrb[0].mxu0
    %v1204 = vadd.f32 0.0, %v1203
    %1205 = vdwg.mxu0
    %v1206 = vadd.f32 %v1003, %v1131
    %v1207 = vadd.f32 %v1004, %v1133
    %v1208 = vadd.f32 %v1005, %v1202
    %v1209 = vadd.f32 %v1006, %v1204
    %1210 = vrot.lane.b32.xlu0 %v34, 113
    %v1211 = vpop.permute.xlu0 %1210
    %1212 = vrot.lane.b32.xlu0 %v40, 113
    %v1213 = vpop.permute.xlu0 %1212
    %1214 = vrot.lane.b32.xlu0 %v35, 113
    %v1215 = vpop.permute.xlu0 %1214
    %1216 = vrot.lane.b32.xlu0 %v41, 113
    %v1217 = vpop.permute.xlu0 %1216
    %vm1218 = vcmp.lt.s32.totalorder %v53, 113
    %v1219 = vsel %vm1218, %v1215, %v1217
    %v1220 = vsel %vm1218, %v1213, %v1215
    %v1221 = vsel %vm1218, %v1211, %v1213
    %v1222 = vsel %vm1218, %v1217, %v1211
    %s1223 = scalar_lea.vmem %s1, 5
    %v1224 = vld [vmem:[%s1223] ss:$8 sm:$0xf]
    %v1226 = vlaneseq
    %v1227 = vshrl.u32 %v1226, 7
    %v1228 = vsub.s32 0, %v1227
    %v1229 = vrot.slane %v1224, %v1228
    %v1230 = vlaneseq
    %v1231 = vshrl.u32 %v1230, 7
    %v1232 = vsub.s32 1, %v1231
    %v1233 = vrot.slane %v1224, %v1232
    %v1234 = vlaneseq
    %v1235 = vshrl.u32 %v1234, 7
    %v1236 = vsub.s32 2, %v1235
    %v1237 = vrot.slane %v1224, %v1236
    %v1238 = vlaneseq
    %v1239 = vshrl.u32 %v1238, 7
    %v1240 = vsub.s32 3, %v1239
    %v1241 = vrot.slane %v1224, %v1240
    %v1246 = vmul.f32 %v1221, %v1229
    %v1247 = vmul.f32 %v1220, %v1233
    %v1248 = vmul.f32 %v1219, %v1237
    %v1249 = vmul.f32 %v1222, %v1241
    %s1250 = scalar_lea.vmem %s2, 24
    %v1251 = vld [vmem:[%s1250] sm:$0xf]
    %v1253 = vsel %vm86, %v1251, 0
    %v1256 = vsel %vm90, %v1246, 0
    %v1259 = vsel %vm90, %v1247, 0
    %v1262 = vsel %vm90, %v1248, 0
    %v1265 = vsel %vm90, %v1249, 0
    %1267 = vmatprep.subr.mxu0 %v1259
    %1268 = vmatpush1.msra.mxu0 %v1256
    %1269 = vmatprep.subr.mxu0 0.0
    %1270 = vmatpush1.msra.mxu0 0.0
    %1271 = vmatprep.subr.mxu0 0.0
    %1272 = vmatpush1.msra.mxu0 0.0
    %1273 = vmatprep.subr.mxu0 0.0
    %1274 = vmatpush1.msra.mxu0 0.0
    %1275 = vmatprep.subr.mxu0 0.0
    %1276 = vmatpush1.msra.mxu0 0.0
    %1277 = vmatprep.subr.mxu0 0.0
    %1278 = vmatpush1.msra.mxu0 0.0
    %1279 = vmatprep.subr.mxu0 0.0
    %1280 = vmatpush1.msra.mxu0 0.0
    %1281 = vmatprep.subr.mxu0 0.0
    %1282 = vmatpush1.msra.mxu0 0.0
    %1283 = vmatprep.subr.mxu0 0.0
    %1284 = vmatpush1.msra.mxu0 0.0
    %1285 = vmatprep.subr.mxu0 0.0
    %1286 = vmatpush1.msra.mxu0 0.0
    %1287 = vmatprep.subr.mxu0 0.0
    %1288 = vmatpush1.msra.mxu0 0.0
    %1289 = vmatprep.subr.mxu0 0.0
    %1290 = vmatpush1.msra.mxu0 0.0
    %1291 = vmatprep.subr.mxu0 0.0
    %1292 = vmatpush1.msra.mxu0 0.0
    %1293 = vmatprep.subr.mxu0 0.0
    %1294 = vmatpush1.msra.mxu0 0.0
    %1295 = vmatprep.subr.mxu0 0.0
    %1296 = vmatpush1.msra.mxu0 0.0
    %1297 = vmatprep.subr.mxu0 0.0
    %1298 = vmatpush1.msra.mxu0 0.0
    %1299 = vmatprep.subr.mxu0 0.0
    %1300 = vmatpush1.msra.mxu0 0.0
    %1301 = vmatprep.subr.mxu0 0.0
    %1302 = vmatpush1.msra.mxu0 0.0
    %1303 = vmatprep.subr.mxu0 0.0
    %1304 = vmatpush1.msra.mxu0 0.0
    %1305 = vmatprep.subr.mxu0 0.0
    %1306 = vmatpush1.msra.mxu0 0.0
    %1307 = vmatprep.subr.mxu0 0.0
    %1308 = vmatpush1.msra.mxu0 0.0
    %1309 = vmatprep.subr.mxu0 0.0
    %1310 = vmatpush1.msra.mxu0 0.0
    %1311 = vmatprep.subr.mxu0 0.0
    %1312 = vmatpush1.msra.mxu0 0.0
    %1313 = vmatprep.subr.mxu0 0.0
    %1314 = vmatpush1.msra.mxu0 0.0
    %1315 = vmatprep.subr.mxu0 0.0
    %1316 = vmatpush1.msra.mxu0 0.0
    %1317 = vmatprep.subr.mxu0 0.0
    %1318 = vmatpush1.msra.mxu0 0.0
    %1319 = vmatprep.subr.mxu0 0.0
    %1320 = vmatpush1.msra.mxu0 0.0
    %1321 = vmatprep.subr.mxu0 0.0
    %1322 = vmatpush1.msra.mxu0 0.0
    %1323 = vmatprep.subr.mxu0 0.0
    %1324 = vmatpush1.msra.mxu0 0.0
    %1325 = vmatprep.subr.mxu0 0.0
    %1326 = vmatpush1.msra.mxu0 0.0
    %1327 = vmatprep.subr.mxu0 0.0
    %1328 = vmatpush1.msra.mxu0 0.0
    %1329 = vmatprep.subr.mxu0 0.0
    %1330 = vmatpush1.msra.mxu0 0.0
    %1331 = vmatprep.mubr.f32.mxu0 0.0
    %1332 = vmatmul.mubr.f32.gmra.mrb[0].mxu0 %v1253
    %v1333 = vpop.f32.mrb[0].mxu0
    %v1334 = vadd.f32 0.0, %v1333
    %v1335 = vpop.f32.mrb[0].mxu0
    %v1336 = vadd.f32 0.0, %v1335
    %1337 = vdwg.mxu0
    %1338 = vmatprep.subr.mxu0 %v1265
    %1339 = vmatpush1.msra.mxu0 %v1262
    %1340 = vmatprep.subr.mxu0 0.0
    %1341 = vmatpush1.msra.mxu0 0.0
    %1342 = vmatprep.subr.mxu0 0.0
    %1343 = vmatpush1.msra.mxu0 0.0
    %1344 = vmatprep.subr.mxu0 0.0
    %1345 = vmatpush1.msra.mxu0 0.0
    %1346 = vmatprep.subr.mxu0 0.0
    %1347 = vmatpush1.msra.mxu0 0.0
    %1348 = vmatprep.subr.mxu0 0.0
    %1349 = vmatpush1.msra.mxu0 0.0
    %1350 = vmatprep.subr.mxu0 0.0
    %1351 = vmatpush1.msra.mxu0 0.0
    %1352 = vmatprep.subr.mxu0 0.0
    %1353 = vmatpush1.msra.mxu0 0.0
    %1354 = vmatprep.subr.mxu0 0.0
    %1355 = vmatpush1.msra.mxu0 0.0
    %1356 = vmatprep.subr.mxu0 0.0
    %1357 = vmatpush1.msra.mxu0 0.0
    %1358 = vmatprep.subr.mxu0 0.0
    %1359 = vmatpush1.msra.mxu0 0.0
    %1360 = vmatprep.subr.mxu0 0.0
    %1361 = vmatpush1.msra.mxu0 0.0
    %1362 = vmatprep.subr.mxu0 0.0
    %1363 = vmatpush1.msra.mxu0 0.0
    %1364 = vmatprep.subr.mxu0 0.0
    %1365 = vmatpush1.msra.mxu0 0.0
    %1366 = vmatprep.subr.mxu0 0.0
    %1367 = vmatpush1.msra.mxu0 0.0
    %1368 = vmatprep.subr.mxu0 0.0
    %1369 = vmatpush1.msra.mxu0 0.0
    %1370 = vmatprep.subr.mxu0 0.0
    %1371 = vmatpush1.msra.mxu0 0.0
    %1372 = vmatprep.subr.mxu0 0.0
    %1373 = vmatpush1.msra.mxu0 0.0
    %1374 = vmatprep.subr.mxu0 0.0
    %1375 = vmatpush1.msra.mxu0 0.0
    %1376 = vmatprep.subr.mxu0 0.0
    %1377 = vmatpush1.msra.mxu0 0.0
    %1378 = vmatprep.subr.mxu0 0.0
    %1379 = vmatpush1.msra.mxu0 0.0
    %1380 = vmatprep.subr.mxu0 0.0
    %1381 = vmatpush1.msra.mxu0 0.0
    %1382 = vmatprep.subr.mxu0 0.0
    %1383 = vmatpush1.msra.mxu0 0.0
    %1384 = vmatprep.subr.mxu0 0.0
    %1385 = vmatpush1.msra.mxu0 0.0
    %1386 = vmatprep.subr.mxu0 0.0
    %1387 = vmatpush1.msra.mxu0 0.0
    %1388 = vmatprep.subr.mxu0 0.0
    %1389 = vmatpush1.msra.mxu0 0.0
    %1390 = vmatprep.subr.mxu0 0.0
    %1391 = vmatpush1.msra.mxu0 0.0
    %1392 = vmatprep.subr.mxu0 0.0
    %1393 = vmatpush1.msra.mxu0 0.0
    %1394 = vmatprep.subr.mxu0 0.0
    %1395 = vmatpush1.msra.mxu0 0.0
    %1396 = vmatprep.subr.mxu0 0.0
    %1397 = vmatpush1.msra.mxu0 0.0
    %1398 = vmatprep.subr.mxu0 0.0
    %1399 = vmatpush1.msra.mxu0 0.0
    %1400 = vmatprep.subr.mxu0 0.0
    %1401 = vmatpush1.msra.mxu0 0.0
    %1402 = vmatprep.mubr.f32.mxu0 0.0
    %1403 = vmatmul.mubr.f32.gmra.mrb[0].mxu0 %v1253
    %v1404 = vpop.f32.mrb[0].mxu0
    %v1405 = vadd.f32 0.0, %v1404
    %v1406 = vpop.f32.mrb[0].mxu0
    %v1407 = vadd.f32 0.0, %v1406
    %1408 = vdwg.mxu0
    %v1409 = vadd.f32 %v1206, %v1334
    %v1410 = vadd.f32 %v1207, %v1336
    %v1411 = vadd.f32 %v1208, %v1405
    %v1412 = vadd.f32 %v1209, %v1407
    %1413 = vrot.lane.b32.xlu0 %v34, 112
    %v1414 = vpop.permute.xlu0 %1413
    %1415 = vrot.lane.b32.xlu0 %v40, 112
    %v1416 = vpop.permute.xlu0 %1415
    %1417 = vrot.lane.b32.xlu0 %v35, 112
    %v1418 = vpop.permute.xlu0 %1417
    %1419 = vrot.lane.b32.xlu0 %v41, 112
    %v1420 = vpop.permute.xlu0 %1419
    %vm1421 = vcmp.lt.s32.totalorder %v53, 112
    %v1422 = vsel %vm1421, %v1418, %v1420
    %v1423 = vsel %vm1421, %v1416, %v1418
    %v1424 = vsel %vm1421, %v1414, %v1416
    %v1425 = vsel %vm1421, %v1420, %v1414
    %s1426 = scalar_lea.vmem %s1, 6
    %v1427 = vld [vmem:[%s1426] ss:$8 sm:$0xf]
    %v1429 = vlaneseq
    %v1430 = vshrl.u32 %v1429, 7
    %v1431 = vsub.s32 0, %v1430
    %v1432 = vrot.slane %v1427, %v1431
    %v1433 = vlaneseq
    %v1434 = vshrl.u32 %v1433, 7
    %v1435 = vsub.s32 1, %v1434
    %v1436 = vrot.slane %v1427, %v1435
    %v1437 = vlaneseq
    %v1438 = vshrl.u32 %v1437, 7
    %v1439 = vsub.s32 2, %v1438
    %v1440 = vrot.slane %v1427, %v1439
    %v1441 = vlaneseq
    %v1442 = vshrl.u32 %v1441, 7
    %v1443 = vsub.s32 3, %v1442
    %v1444 = vrot.slane %v1427, %v1443
    %v1449 = vmul.f32 %v1424, %v1432
    %v1450 = vmul.f32 %v1423, %v1436
    %v1451 = vmul.f32 %v1422, %v1440
    %v1452 = vmul.f32 %v1425, %v1444
    %s1453 = scalar_lea.vmem %s2, 28
    %v1454 = vld [vmem:[%s1453] sm:$0xf]
    %v1456 = vsel %vm86, %v1454, 0
    %v1459 = vsel %vm90, %v1449, 0
    %v1462 = vsel %vm90, %v1450, 0
    %v1465 = vsel %vm90, %v1451, 0
    %v1468 = vsel %vm90, %v1452, 0
    %1470 = vmatprep.subr.mxu0 %v1462
    %1471 = vmatpush1.msra.mxu0 %v1459
    %1472 = vmatprep.subr.mxu0 0.0
    %1473 = vmatpush1.msra.mxu0 0.0
    %1474 = vmatprep.subr.mxu0 0.0
    %1475 = vmatpush1.msra.mxu0 0.0
    %1476 = vmatprep.subr.mxu0 0.0
    %1477 = vmatpush1.msra.mxu0 0.0
    %1478 = vmatprep.subr.mxu0 0.0
    %1479 = vmatpush1.msra.mxu0 0.0
    %1480 = vmatprep.subr.mxu0 0.0
    %1481 = vmatpush1.msra.mxu0 0.0
    %1482 = vmatprep.subr.mxu0 0.0
    %1483 = vmatpush1.msra.mxu0 0.0
    %1484 = vmatprep.subr.mxu0 0.0
    %1485 = vmatpush1.msra.mxu0 0.0
    %1486 = vmatprep.subr.mxu0 0.0
    %1487 = vmatpush1.msra.mxu0 0.0
    %1488 = vmatprep.subr.mxu0 0.0
    %1489 = vmatpush1.msra.mxu0 0.0
    %1490 = vmatprep.subr.mxu0 0.0
    %1491 = vmatpush1.msra.mxu0 0.0
    %1492 = vmatprep.subr.mxu0 0.0
    %1493 = vmatpush1.msra.mxu0 0.0
    %1494 = vmatprep.subr.mxu0 0.0
    %1495 = vmatpush1.msra.mxu0 0.0
    %1496 = vmatprep.subr.mxu0 0.0
    %1497 = vmatpush1.msra.mxu0 0.0
    %1498 = vmatprep.subr.mxu0 0.0
    %1499 = vmatpush1.msra.mxu0 0.0
    %1500 = vmatprep.subr.mxu0 0.0
    %1501 = vmatpush1.msra.mxu0 0.0
    %1502 = vmatprep.subr.mxu0 0.0
    %1503 = vmatpush1.msra.mxu0 0.0
    %1504 = vmatprep.subr.mxu0 0.0
    %1505 = vmatpush1.msra.mxu0 0.0
    %1506 = vmatprep.subr.mxu0 0.0
    %1507 = vmatpush1.msra.mxu0 0.0
    %1508 = vmatprep.subr.mxu0 0.0
    %1509 = vmatpush1.msra.mxu0 0.0
    %1510 = vmatprep.subr.mxu0 0.0
    %1511 = vmatpush1.msra.mxu0 0.0
    %1512 = vmatprep.subr.mxu0 0.0
    %1513 = vmatpush1.msra.mxu0 0.0
    %1514 = vmatprep.subr.mxu0 0.0
    %1515 = vmatpush1.msra.mxu0 0.0
    %1516 = vmatprep.subr.mxu0 0.0
    %1517 = vmatpush1.msra.mxu0 0.0
    %1518 = vmatprep.subr.mxu0 0.0
    %1519 = vmatpush1.msra.mxu0 0.0
    %1520 = vmatprep.subr.mxu0 0.0
    %1521 = vmatpush1.msra.mxu0 0.0
    %1522 = vmatprep.subr.mxu0 0.0
    %1523 = vmatpush1.msra.mxu0 0.0
    %1524 = vmatprep.subr.mxu0 0.0
    %1525 = vmatpush1.msra.mxu0 0.0
    %1526 = vmatprep.subr.mxu0 0.0
    %1527 = vmatpush1.msra.mxu0 0.0
    %1528 = vmatprep.subr.mxu0 0.0
    %1529 = vmatpush1.msra.mxu0 0.0
    %1530 = vmatprep.subr.mxu0 0.0
    %1531 = vmatpush1.msra.mxu0 0.0
    %1532 = vmatprep.subr.mxu0 0.0
    %1533 = vmatpush1.msra.mxu0 0.0
    %1534 = vmatprep.mubr.f32.mxu0 0.0
    %1535 = vmatmul.mubr.f32.gmra.mrb[0].mxu0 %v1456
    %v1536 = vpop.f32.mrb[0].mxu0
    %v1537 = vadd.f32 0.0, %v1536
    %v1538 = vpop.f32.mrb[0].mxu0
    %v1539 = vadd.f32 0.0, %v1538
    %1540 = vdwg.mxu0
    %1541 = vmatprep.subr.mxu0 %v1468
    %1542 = vmatpush1.msra.mxu0 %v1465
    %1543 = vmatprep.subr.mxu0 0.0
    %1544 = vmatpush1.msra.mxu0 0.0
    %1545 = vmatprep.subr.mxu0 0.0
    %1546 = vmatpush1.msra.mxu0 0.0
    %1547 = vmatprep.subr.mxu0 0.0
    %1548 = vmatpush1.msra.mxu0 0.0
    %1549 = vmatprep.subr.mxu0 0.0
    %1550 = vmatpush1.msra.mxu0 0.0
    %1551 = vmatprep.subr.mxu0 0.0
    %1552 = vmatpush1.msra.mxu0 0.0
    %1553 = vmatprep.subr.mxu0 0.0
    %1554 = vmatpush1.msra.mxu0 0.0
    %1555 = vmatprep.subr.mxu0 0.0
    %1556 = vmatpush1.msra.mxu0 0.0
    %1557 = vmatprep.subr.mxu0 0.0
    %1558 = vmatpush1.msra.mxu0 0.0
    %1559 = vmatprep.subr.mxu0 0.0
    %1560 = vmatpush1.msra.mxu0 0.0
    %1561 = vmatprep.subr.mxu0 0.0
    %1562 = vmatpush1.msra.mxu0 0.0
    %1563 = vmatprep.subr.mxu0 0.0
    %1564 = vmatpush1.msra.mxu0 0.0
    %1565 = vmatprep.subr.mxu0 0.0
    %1566 = vmatpush1.msra.mxu0 0.0
    %1567 = vmatprep.subr.mxu0 0.0
    %1568 = vmatpush1.msra.mxu0 0.0
    %1569 = vmatprep.subr.mxu0 0.0
    %1570 = vmatpush1.msra.mxu0 0.0
    %1571 = vmatprep.subr.mxu0 0.0
    %1572 = vmatpush1.msra.mxu0 0.0
    %1573 = vmatprep.subr.mxu0 0.0
    %1574 = vmatpush1.msra.mxu0 0.0
    %1575 = vmatprep.subr.mxu0 0.0
    %1576 = vmatpush1.msra.mxu0 0.0
    %1577 = vmatprep.subr.mxu0 0.0
    %1578 = vmatpush1.msra.mxu0 0.0
    %1579 = vmatprep.subr.mxu0 0.0
    %1580 = vmatpush1.msra.mxu0 0.0
    %1581 = vmatprep.subr.mxu0 0.0
    %1582 = vmatpush1.msra.mxu0 0.0
    %1583 = vmatprep.subr.mxu0 0.0
    %1584 = vmatpush1.msra.mxu0 0.0
    %1585 = vmatprep.subr.mxu0 0.0
    %1586 = vmatpush1.msra.mxu0 0.0
    %1587 = vmatprep.subr.mxu0 0.0
    %1588 = vmatpush1.msra.mxu0 0.0
    %1589 = vmatprep.subr.mxu0 0.0
    %1590 = vmatpush1.msra.mxu0 0.0
    %1591 = vmatprep.subr.mxu0 0.0
    %1592 = vmatpush1.msra.mxu0 0.0
    %1593 = vmatprep.subr.mxu0 0.0
    %1594 = vmatpush1.msra.mxu0 0.0
    %1595 = vmatprep.subr.mxu0 0.0
    %1596 = vmatpush1.msra.mxu0 0.0
    %1597 = vmatprep.subr.mxu0 0.0
    %1598 = vmatpush1.msra.mxu0 0.0
    %1599 = vmatprep.subr.mxu0 0.0
    %1600 = vmatpush1.msra.mxu0 0.0
    %1601 = vmatprep.subr.mxu0 0.0
    %1602 = vmatpush1.msra.mxu0 0.0
    %1603 = vmatprep.subr.mxu0 0.0
    %1604 = vmatpush1.msra.mxu0 0.0
    %1605 = vmatprep.mubr.f32.mxu0 0.0
    %1606 = vmatmul.mubr.f32.gmra.mrb[0].mxu0 %v1456
    %v1607 = vpop.f32.mrb[0].mxu0
    %v1608 = vadd.f32 0.0, %v1607
    %v1609 = vpop.f32.mrb[0].mxu0
    %v1610 = vadd.f32 0.0, %v1609
    %1611 = vdwg.mxu0
    %v1612 = vadd.f32 %v1409, %v1537
    %v1613 = vadd.f32 %v1410, %v1539
    %v1614 = vadd.f32 %v1411, %v1608
    %v1615 = vadd.f32 %v1412, %v1610
    %1616 = vrot.lane.b32.xlu0 %v34, 111
    %v1617 = vpop.permute.xlu0 %1616
    %1618 = vrot.lane.b32.xlu0 %v40, 111
    %v1619 = vpop.permute.xlu0 %1618
    %1620 = vrot.lane.b32.xlu0 %v35, 111
    %v1621 = vpop.permute.xlu0 %1620
    %1622 = vrot.lane.b32.xlu0 %v41, 111
    %v1623 = vpop.permute.xlu0 %1622
    %vm1624 = vcmp.lt.s32.totalorder %v53, 111
    %v1625 = vsel %vm1624, %v1621, %v1623
    %v1626 = vsel %vm1624, %v1619, %v1621
    %v1627 = vsel %vm1624, %v1617, %v1619
    %v1628 = vsel %vm1624, %v1623, %v1617
    %s1629 = scalar_lea.vmem %s1, 7
    %v1630 = vld [vmem:[%s1629] ss:$8 sm:$0xf]
    %v1632 = vlaneseq
    %v1633 = vshrl.u32 %v1632, 7
    %v1634 = vsub.s32 0, %v1633
    %v1635 = vrot.slane %v1630, %v1634
    %v1636 = vlaneseq
    %v1637 = vshrl.u32 %v1636, 7
    %v1638 = vsub.s32 1, %v1637
    %v1639 = vrot.slane %v1630, %v1638
    %v1640 = vlaneseq
    %v1641 = vshrl.u32 %v1640, 7
    %v1642 = vsub.s32 2, %v1641
    %v1643 = vrot.slane %v1630, %v1642
    %v1644 = vlaneseq
    %v1645 = vshrl.u32 %v1644, 7
    %v1646 = vsub.s32 3, %v1645
    %v1647 = vrot.slane %v1630, %v1646
    %v1652 = vmul.f32 %v1627, %v1635
    %v1653 = vmul.f32 %v1626, %v1639
    %v1654 = vmul.f32 %v1625, %v1643
    %v1655 = vmul.f32 %v1628, %v1647
    %s1656 = scalar_lea.vmem %s2, 32
    %v1657 = vld [vmem:[%s1656] sm:$0xf]
    %v1659 = vsel %vm86, %v1657, 0
    %v1662 = vsel %vm90, %v1652, 0
    %v1665 = vsel %vm90, %v1653, 0
    %v1668 = vsel %vm90, %v1654, 0
    %v1671 = vsel %vm90, %v1655, 0
    %1673 = vmatprep.subr.mxu0 %v1665
    %1674 = vmatpush1.msra.mxu0 %v1662
    %1675 = vmatprep.subr.mxu0 0.0
    %1676 = vmatpush1.msra.mxu0 0.0
    %1677 = vmatprep.subr.mxu0 0.0
    %1678 = vmatpush1.msra.mxu0 0.0
    %1679 = vmatprep.subr.mxu0 0.0
    %1680 = vmatpush1.msra.mxu0 0.0
    %1681 = vmatprep.subr.mxu0 0.0
    %1682 = vmatpush1.msra.mxu0 0.0
    %1683 = vmatprep.subr.mxu0 0.0
    %1684 = vmatpush1.msra.mxu0 0.0
    %1685 = vmatprep.subr.mxu0 0.0
    %1686 = vmatpush1.msra.mxu0 0.0
    %1687 = vmatprep.subr.mxu0 0.0
    %1688 = vmatpush1.msra.mxu0 0.0
    %1689 = vmatprep.subr.mxu0 0.0
    %1690 = vmatpush1.msra.mxu0 0.0
    %1691 = vmatprep.subr.mxu0 0.0
    %1692 = vmatpush1.msra.mxu0 0.0
    %1693 = vmatprep.subr.mxu0 0.0
    %1694 = vmatpush1.msra.mxu0 0.0
    %1695 = vmatprep.subr.mxu0 0.0
    %1696 = vmatpush1.msra.mxu0 0.0
    %1697 = vmatprep.subr.mxu0 0.0
    %1698 = vmatpush1.msra.mxu0 0.0
    %1699 = vmatprep.subr.mxu0 0.0
    %1700 = vmatpush1.msra.mxu0 0.0
    %1701 = vmatprep.subr.mxu0 0.0
    %1702 = vmatpush1.msra.mxu0 0.0
    %1703 = vmatprep.subr.mxu0 0.0
    %1704 = vmatpush1.msra.mxu0 0.0
    %1705 = vmatprep.subr.mxu0 0.0
    %1706 = vmatpush1.msra.mxu0 0.0
    %1707 = vmatprep.subr.mxu0 0.0
    %1708 = vmatpush1.msra.mxu0 0.0
    %1709 = vmatprep.subr.mxu0 0.0
    %1710 = vmatpush1.msra.mxu0 0.0
    %1711 = vmatprep.subr.mxu0 0.0
    %1712 = vmatpush1.msra.mxu0 0.0
    %1713 = vmatprep.subr.mxu0 0.0
    %1714 = vmatpush1.msra.mxu0 0.0
    %1715 = vmatprep.subr.mxu0 0.0
    %1716 = vmatpush1.msra.mxu0 0.0
    %1717 = vmatprep.subr.mxu0 0.0
    %1718 = vmatpush1.msra.mxu0 0.0
    %1719 = vmatprep.subr.mxu0 0.0
    %1720 = vmatpush1.msra.mxu0 0.0
    %1721 = vmatprep.subr.mxu0 0.0
    %1722 = vmatpush1.msra.mxu0 0.0
    %1723 = vmatprep.subr.mxu0 0.0
    %1724 = vmatpush1.msra.mxu0 0.0
    %1725 = vmatprep.subr.mxu0 0.0
    %1726 = vmatpush1.msra.mxu0 0.0
    %1727 = vmatprep.subr.mxu0 0.0
    %1728 = vmatpush1.msra.mxu0 0.0
    %1729 = vmatprep.subr.mxu0 0.0
    %1730 = vmatpush1.msra.mxu0 0.0
    %1731 = vmatprep.subr.mxu0 0.0
    %1732 = vmatpush1.msra.mxu0 0.0
    %1733 = vmatprep.subr.mxu0 0.0
    %1734 = vmatpush1.msra.mxu0 0.0
    %1735 = vmatprep.subr.mxu0 0.0
    %1736 = vmatpush1.msra.mxu0 0.0
    %1737 = vmatprep.mubr.f32.mxu0 0.0
    %1738 = vmatmul.mubr.f32.gmra.mrb[0].mxu0 %v1659
    %v1739 = vpop.f32.mrb[0].mxu0
    %v1740 = vadd.f32 0.0, %v1739
    %v1741 = vpop.f32.mrb[0].mxu0
    %v1742 = vadd.f32 0.0, %v1741
    %1743 = vdwg.mxu0
    %1744 = vmatprep.subr.mxu0 %v1671
    %1745 = vmatpush1.msra.mxu0 %v1668
    %1746 = vmatprep.subr.mxu0 0.0
    %1747 = vmatpush1.msra.mxu0 0.0
    %1748 = vmatprep.subr.mxu0 0.0
    %1749 = vmatpush1.msra.mxu0 0.0
    %1750 = vmatprep.subr.mxu0 0.0
    %1751 = vmatpush1.msra.mxu0 0.0
    %1752 = vmatprep.subr.mxu0 0.0
    %1753 = vmatpush1.msra.mxu0 0.0
    %1754 = vmatprep.subr.mxu0 0.0
    %1755 = vmatpush1.msra.mxu0 0.0
    %1756 = vmatprep.subr.mxu0 0.0
    %1757 = vmatpush1.msra.mxu0 0.0
    %1758 = vmatprep.subr.mxu0 0.0
    %1759 = vmatpush1.msra.mxu0 0.0
    %1760 = vmatprep.subr.mxu0 0.0
    %1761 = vmatpush1.msra.mxu0 0.0
    %1762 = vmatprep.subr.mxu0 0.0
    %1763 = vmatpush1.msra.mxu0 0.0
    %1764 = vmatprep.subr.mxu0 0.0
    %1765 = vmatpush1.msra.mxu0 0.0
    %1766 = vmatprep.subr.mxu0 0.0
    %1767 = vmatpush1.msra.mxu0 0.0
    %1768 = vmatprep.subr.mxu0 0.0
    %1769 = vmatpush1.msra.mxu0 0.0
    %1770 = vmatprep.subr.mxu0 0.0
    %1771 = vmatpush1.msra.mxu0 0.0
    %1772 = vmatprep.subr.mxu0 0.0
    %1773 = vmatpush1.msra.mxu0 0.0
    %1774 = vmatprep.subr.mxu0 0.0
    %1775 = vmatpush1.msra.mxu0 0.0
    %1776 = vmatprep.subr.mxu0 0.0
    %1777 = vmatpush1.msra.mxu0 0.0
    %1778 = vmatprep.subr.mxu0 0.0
    %1779 = vmatpush1.msra.mxu0 0.0
    %1780 = vmatprep.subr.mxu0 0.0
    %1781 = vmatpush1.msra.mxu0 0.0
    %1782 = vmatprep.subr.mxu0 0.0
    %1783 = vmatpush1.msra.mxu0 0.0
    %1784 = vmatprep.subr.mxu0 0.0
    %1785 = vmatpush1.msra.mxu0 0.0
    %1786 = vmatprep.subr.mxu0 0.0
    %1787 = vmatpush1.msra.mxu0 0.0
    %1788 = vmatprep.subr.mxu0 0.0
    %1789 = vmatpush1.msra.mxu0 0.0
    %1790 = vmatprep.subr.mxu0 0.0
    %1791 = vmatpush1.msra.mxu0 0.0
    %1792 = vmatprep.subr.mxu0 0.0
    %1793 = vmatpush1.msra.mxu0 0.0
    %1794 = vmatprep.subr.mxu0 0.0
    %1795 = vmatpush1.msra.mxu0 0.0
    %1796 = vmatprep.subr.mxu0 0.0
    %1797 = vmatpush1.msra.mxu0 0.0
    %1798 = vmatprep.subr.mxu0 0.0
    %1799 = vmatpush1.msra.mxu0 0.0
    %1800 = vmatprep.subr.mxu0 0.0
    %1801 = vmatpush1.msra.mxu0 0.0
    %1802 = vmatprep.subr.mxu0 0.0
    %1803 = vmatpush1.msra.mxu0 0.0
    %1804 = vmatprep.subr.mxu0 0.0
    %1805 = vmatpush1.msra.mxu0 0.0
    %1806 = vmatprep.subr.mxu0 0.0
    %1807 = vmatpush1.msra.mxu0 0.0
    %1808 = vmatprep.mubr.f32.mxu0 0.0
    %1809 = vmatmul.mubr.f32.gmra.mrb[0].mxu0 %v1659
    %v1810 = vpop.f32.mrb[0].mxu0
    %v1811 = vadd.f32 0.0, %v1810
    %v1812 = vpop.f32.mrb[0].mxu0
    %v1813 = vadd.f32 0.0, %v1812
    %1814 = vdwg.mxu0
    %v1815 = vadd.f32 %v1612, %v1740
    %v1816 = vadd.f32 %v1613, %v1742
    %v1817 = vadd.f32 %v1614, %v1811
    %v1818 = vadd.f32 %v1615, %v1813
    %v1819 = vsel %vm90, %v1815, 0.0
    %v1820 = vsel %vm90, %v1816, 0.0
    %v1821 = vadd.f32 %v1819, %v1820
    %v1822 = vsel %vm90, %v1817, 0.0
    %v1823 = vadd.f32 %v1821, %v1822
    %v1824 = vsel %vm90, %v1818, 0.0
    %v1825 = vadd.f32 %v1823, %v1824
    %1826 = vadd.xlane.f32.xlu0 %v1825
    %v1827 = vpop.xlane.xlu0 %1826
    %v1828 = vmul.f32 %v1815, %v1815
    %v1829 = vmul.f32 %v1816, %v1816
    %v1830 = vmul.f32 %v1817, %v1817
    %v1831 = vmul.f32 %v1818, %v1818
    %v1832 = vsel %vm90, %v1828, 0.0
    %v1833 = vsel %vm90, %v1829, 0.0
    %v1834 = vadd.f32 %v1832, %v1833
    %v1835 = vsel %vm90, %v1830, 0.0
    %v1836 = vadd.f32 %v1834, %v1835
    %v1837 = vsel %vm90, %v1831, 0.0
    %v1838 = vadd.f32 %v1836, %v1837
    %1839 = vadd.xlane.f32.xlu0 %v1838
    %v1840 = vpop.xlane.xlu0 %1839
    %v1841 = vmul.f32 %v1827, 0.001953125
    %v1842 = vmul.f32 %v1840, 0.001953125
    %v1843 = vmul.f32 %v1841, %v1841
    %v1844 = vsub.f32 %v1842, %v1843
    %v1845 = vld [vmem:[%s3] sm:$0xf]
    %v1846 = vadd.f32 %v1844, 0.8
    %v1847 = vrsqrt.pop %v1846
    %v1848 = vmul.f32 %v1845, %v1847
    %v1849 = vld [vmem:[%s4] sm:$0xf]
    %v1850 = vmul.f32 %v1841, %v1848
    %v1851 = vsub.f32 %v1849, %v1850
    %1853 = vset.pattern.permute.xlu0 0
    %1854 = vperm.xlu0 %1853, %v1848
    %v1855 = vpop.permute.xlu0 %1854
    %v1857 = vmul.f32 %v1815, %v1855
    %v1858 = vmul.f32 %v1816, %v1855
    %v1859 = vmul.f32 %v1817, %v1855
    %v1860 = vmul.f32 %v1818, %v1855
    %1862 = vset.pattern.permute.xlu0 0
    %1863 = vperm.xlu0 %1862, %v1851
    %v1864 = vpop.permute.xlu0 %1863
    %v1866 = vadd.f32 %v1857, %v1864
    %v1867 = vadd.f32 %v1858, %v1864
    %v1868 = vadd.f32 %v1859, %v1864
    %v1869 = vadd.f32 %v1860, %v1864
    %s1870 = sld [smem:[#allocation2]]
    %vm1871 = vcmp.ge.f32.partialorder %v1866, 0.0
    %vm1872 = vcmp.ge.f32.partialorder %v1867, 0.0
    %vm1873 = vcmp.ge.f32.partialorder %v1868, 0.0
    %vm1874 = vcmp.ge.f32.partialorder %v1869, 0.0
    %v1875 = vstv %s1870
    %v1876 = vmul.f32 %v1875, %v1866
    %v1877 = vmul.f32 %v1875, %v1867
    %v1878 = vmul.f32 %v1875, %v1868
    %v1879 = vmul.f32 %v1875, %v1869
    %v1880 = vsel %vm1871, %v1866, %v1876
    %v1881 = vsel %vm1872, %v1867, %v1877
    %v1882 = vsel %vm1873, %v1868, %v1878
    %v1883 = vsel %vm1874, %v1869, %v1879
    %s1884 = scalar_lea.vmem %s6, 16
    %v1885 = vld [vmem:[%s1884] sm:$0xf]
    %1886 = vrot.lane.b32.xlu0 %v1880, 17
    %v1887 = vpop.permute.xlu0 %1886
    %1888 = vrot.lane.b32.xlu0 %v1881, 17
    %v1889 = vpop.permute.xlu0 %1888
    %1890 = vrot.lane.b32.xlu0 %v1882, 17
    %v1891 = vpop.permute.xlu0 %1890
    %1892 = vrot.lane.b32.xlu0 %v1883, 17
    %v1893 = vpop.permute.xlu0 %1892
    %v1894 = vsel %vm54, %v1891, %v1893
    %v1895 = vsel %vm54, %v1889, %v1891
    %v1896 = vsel %vm54, %v1887, %v1889
    %v1897 = vsel %vm54, %v1893, %v1887
    %v1898 = vmul.f32 %v1897, %v64
    %v1899 = vmul.f32 %v1896, %v68
    %v1900 = vmul.f32 %v1895, %v72
    %v1901 = vmul.f32 %v1894, %v76
    %v1902 = vld [vmem:[%s6] sm:$0xf]
    %v1904 = vsel %vm86, %v1902, 0
    %v1907 = vsel %vm90, %v1898, 0
    %v1910 = vsel %vm90, %v1899, 0
    %v1913 = vsel %vm90, %v1900, 0
    %v1916 = vsel %vm90, %v1901, 0
    %1918 = vmatprep.subr.mxu0 %v1910
    %1919 = vmatpush1.msra.mxu0 %v1907
    %1920 = vmatprep.subr.mxu0 0.0
    %1921 = vmatpush1.msra.mxu0 0.0
    %1922 = vmatprep.subr.mxu0 0.0
    %1923 = vmatpush1.msra.mxu0 0.0
    %1924 = vmatprep.subr.mxu0 0.0
    %1925 = vmatpush1.msra.mxu0 0.0
    %1926 = vmatprep.subr.mxu0 0.0
    %1927 = vmatpush1.msra.mxu0 0.0
    %1928 = vmatprep.subr.mxu0 0.0
    %1929 = vmatpush1.msra.mxu0 0.0
    %1930 = vmatprep.subr.mxu0 0.0
    %1931 = vmatpush1.msra.mxu0 0.0
    %1932 = vmatprep.subr.mxu0 0.0
    %1933 = vmatpush1.msra.mxu0 0.0
    %1934 = vmatprep.subr.mxu0 0.0
    %1935 = vmatpush1.msra.mxu0 0.0
    %1936 = vmatprep.subr.mxu0 0.0
    %1937 = vmatpush1.msra.mxu0 0.0
    %1938 = vmatprep.subr.mxu0 0.0
    %1939 = vmatpush1.msra.mxu0 0.0
    %1940 = vmatprep.subr.mxu0 0.0
    %1941 = vmatpush1.msra.mxu0 0.0
    %1942 = vmatprep.subr.mxu0 0.0
    %1943 = vmatpush1.msra.mxu0 0.0
    %1944 = vmatprep.subr.mxu0 0.0
    %1945 = vmatpush1.msra.mxu0 0.0
    %1946 = vmatprep.subr.mxu0 0.0
    %1947 = vmatpush1.msra.mxu0 0.0
    %1948 = vmatprep.subr.mxu0 0.0
    %1949 = vmatpush1.msra.mxu0 0.0
    %1950 = vmatprep.subr.mxu0 0.0
    %1951 = vmatpush1.msra.mxu0 0.0
    %1952 = vmatprep.subr.mxu0 0.0
    %1953 = vmatpush1.msra.mxu0 0.0
    %1954 = vmatprep.subr.mxu0 0.0
    %1955 = vmatpush1.msra.mxu0 0.0
    %1956 = vmatprep.subr.mxu0 0.0
    %1957 = vmatpush1.msra.mxu0 0.0
    %1958 = vmatprep.subr.mxu0 0.0
    %1959 = vmatpush1.msra.mxu0 0.0
    %1960 = vmatprep.subr.mxu0 0.0
    %1961 = vmatpush1.msra.mxu0 0.0
    %1962 = vmatprep.subr.mxu0 0.0
    %1963 = vmatpush1.msra.mxu0 0.0
    %1964 = vmatprep.subr.mxu0 0.0
    %1965 = vmatpush1.msra.mxu0 0.0
    %1966 = vmatprep.subr.mxu0 0.0
    %1967 = vmatpush1.msra.mxu0 0.0
    %1968 = vmatprep.subr.mxu0 0.0
    %1969 = vmatpush1.msra.mxu0 0.0
    %1970 = vmatprep.subr.mxu0 0.0
    %1971 = vmatpush1.msra.mxu0 0.0
    %1972 = vmatprep.subr.mxu0 0.0
    %1973 = vmatpush1.msra.mxu0 0.0
    %1974 = vmatprep.subr.mxu0 0.0
    %1975 = vmatpush1.msra.mxu0 0.0
    %1976 = vmatprep.subr.mxu0 0.0
    %1977 = vmatpush1.msra.mxu0 0.0
    %1978 = vmatprep.subr.mxu0 0.0
    %1979 = vmatpush1.msra.mxu0 0.0
    %1980 = vmatprep.subr.mxu0 0.0
    %1981 = vmatpush1.msra.mxu0 0.0
    %1982 = vmatprep.mubr.f32.mxu0 0.0
    %1983 = vmatmul.mubr.f32.gmra.mrb[0].mxu0 %v1904
    %v1984 = vpop.f32.mrb[0].mxu0
    %v1985 = vadd.f32 0.0, %v1984
    %v1986 = vpop.f32.mrb[0].mxu0
    %v1987 = vadd.f32 0.0, %v1986
    %1988 = vdwg.mxu0
    %1989 = vmatprep.subr.mxu0 %v1916
    %1990 = vmatpush1.msra.mxu0 %v1913
    %1991 = vmatprep.subr.mxu0 0.0
    %1992 = vmatpush1.msra.mxu0 0.0
    %1993 = vmatprep.subr.mxu0 0.0
    %1994 = vmatpush1.msra.mxu0 0.0
    %1995 = vmatprep.subr.mxu0 0.0
    %1996 = vmatpush1.msra.mxu0 0.0
    %1997 = vmatprep.subr.mxu0 0.0
    %1998 = vmatpush1.msra.mxu0 0.0
    %1999 = vmatprep.subr.mxu0 0.0
    %2000 = vmatpush1.msra.mxu0 0.0
    %2001 = vmatprep.subr.mxu0 0.0
    %2002 = vmatpush1.msra.mxu0 0.0
    %2003 = vmatprep.subr.mxu0 0.0
    %2004 = vmatpush1.msra.mxu0 0.0
    %2005 = vmatprep.subr.mxu0 0.0
    %2006 = vmatpush1.msra.mxu0 0.0
    %2007 = vmatprep.subr.mxu0 0.0
    %2008 = vmatpush1.msra.mxu0 0.0
    %2009 = vmatprep.subr.mxu0 0.0
    %2010 = vmatpush1.msra.mxu0 0.0
    %2011 = vmatprep.subr.mxu0 0.0
    %2012 = vmatpush1.msra.mxu0 0.0
    %2013 = vmatprep.subr.mxu0 0.0
    %2014 = vmatpush1.msra.mxu0 0.0
    %2015 = vmatprep.subr.mxu0 0.0
    %2016 = vmatpush1.msra.mxu0 0.0
    %2017 = vmatprep.subr.mxu0 0.0
    %2018 = vmatpush1.msra.mxu0 0.0
    %2019 = vmatprep.subr.mxu0 0.0
    %2020 = vmatpush1.msra.mxu0 0.0
    %2021 = vmatprep.subr.mxu0 0.0
    %2022 = vmatpush1.msra.mxu0 0.0
    %2023 = vmatprep.subr.mxu0 0.0
    %2024 = vmatpush1.msra.mxu0 0.0
    %2025 = vmatprep.subr.mxu0 0.0
    %2026 = vmatpush1.msra.mxu0 0.0
    %2027 = vmatprep.subr.mxu0 0.0
    %2028 = vmatpush1.msra.mxu0 0.0
    %2029 = vmatprep.subr.mxu0 0.0
    %2030 = vmatpush1.msra.mxu0 0.0
    %2031 = vmatprep.subr.mxu0 0.0
    %2032 = vmatpush1.msra.mxu0 0.0
    %2033 = vmatprep.subr.mxu0 0.0
    %2034 = vmatpush1.msra.mxu0 0.0
    %2035 = vmatprep.subr.mxu0 0.0
    %2036 = vmatpush1.msra.mxu0 0.0
    %2037 = vmatprep.subr.mxu0 0.0
    %2038 = vmatpush1.msra.mxu0 0.0
    %2039 = vmatprep.subr.mxu0 0.0
    %2040 = vmatpush1.msra.mxu0 0.0
    %2041 = vmatprep.subr.mxu0 0.0
    %2042 = vmatpush1.msra.mxu0 0.0
    %2043 = vmatprep.subr.mxu0 0.0
    %2044 = vmatpush1.msra.mxu0 0.0
    %2045 = vmatprep.subr.mxu0 0.0
    %2046 = vmatpush1.msra.mxu0 0.0
    %2047 = vmatprep.subr.mxu0 0.0
    %2048 = vmatpush1.msra.mxu0 0.0
    %2049 = vmatprep.subr.mxu0 0.0
    %2050 = vmatpush1.msra.mxu0 0.0
    %2051 = vmatprep.subr.mxu0 0.0
    %2052 = vmatpush1.msra.mxu0 0.0
    %2053 = vmatprep.mubr.f32.mxu0 0.0
    %2054 = vmatmul.mubr.f32.gmra.mrb[0].mxu0 %v1904
    %v2055 = vpop.f32.mrb[0].mxu0
    %v2056 = vadd.f32 0.0, %v2055
    %v2057 = vpop.f32.mrb[0].mxu0
    %v2058 = vadd.f32 0.0, %v2057
    %2059 = vdwg.mxu0
    %v2061 = vsel %vm86, %v1885, 0
    %v2064 = vsel %vm90, %v1880, 0
    %v2067 = vsel %vm90, %v1881, 0
    %v2070 = vsel %vm90, %v1882, 0
    %v2073 = vsel %vm90, %v1883, 0
    %2075 = vmatprep.subr.mxu0 %v2067
    %2076 = vmatpush1.msra.mxu0 %v2064
    %2077 = vmatprep.subr.mxu0 0.0
    %2078 = vmatpush1.msra.mxu0 0.0
    %2079 = vmatprep.subr.mxu0 0.0
    %2080 = vmatpush1.msra.mxu0 0.0
    %2081 = vmatprep.subr.mxu0 0.0
    %2082 = vmatpush1.msra.mxu0 0.0
    %2083 = vmatprep.subr.mxu0 0.0
    %2084 = vmatpush1.msra.mxu0 0.0
    %2085 = vmatprep.subr.mxu0 0.0
    %2086 = vmatpush1.msra.mxu0 0.0
    %2087 = vmatprep.subr.mxu0 0.0
    %2088 = vmatpush1.msra.mxu0 0.0
    %2089 = vmatprep.subr.mxu0 0.0
    %2090 = vmatpush1.msra.mxu0 0.0
    %2091 = vmatprep.subr.mxu0 0.0
    %2092 = vmatpush1.msra.mxu0 0.0
    %2093 = vmatprep.subr.mxu0 0.0
    %2094 = vmatpush1.msra.mxu0 0.0
    %2095 = vmatprep.subr.mxu0 0.0
    %2096 = vmatpush1.msra.mxu0 0.0
    %2097 = vmatprep.subr.mxu0 0.0
    %2098 = vmatpush1.msra.mxu0 0.0
    %2099 = vmatprep.subr.mxu0 0.0
    %2100 = vmatpush1.msra.mxu0 0.0
    %2101 = vmatprep.subr.mxu0 0.0
    %2102 = vmatpush1.msra.mxu0 0.0
    %2103 = vmatprep.subr.mxu0 0.0
    %2104 = vmatpush1.msra.mxu0 0.0
    %2105 = vmatprep.subr.mxu0 0.0
    %2106 = vmatpush1.msra.mxu0 0.0
    %2107 = vmatprep.subr.mxu0 0.0
    %2108 = vmatpush1.msra.mxu0 0.0
    %2109 = vmatprep.subr.mxu0 0.0
    %2110 = vmatpush1.msra.mxu0 0.0
    %2111 = vmatprep.subr.mxu0 0.0
    %2112 = vmatpush1.msra.mxu0 0.0
    %2113 = vmatprep.subr.mxu0 0.0
    %2114 = vmatpush1.msra.mxu0 0.0
    %2115 = vmatprep.subr.mxu0 0.0
    %2116 = vmatpush1.msra.mxu0 0.0
    %2117 = vmatprep.subr.mxu0 0.0
    %2118 = vmatpush1.msra.mxu0 0.0
    %2119 = vmatprep.subr.mxu0 0.0
    %2120 = vmatpush1.msra.mxu0 0.0
    %2121 = vmatprep.subr.mxu0 0.0
    %2122 = vmatpush1.msra.mxu0 0.0
    %2123 = vmatprep.subr.mxu0 0.0
    %2124 = vmatpush1.msra.mxu0 0.0
    %2125 = vmatprep.subr.mxu0 0.0
    %2126 = vmatpush1.msra.mxu0 0.0
    %2127 = vmatprep.subr.mxu0 0.0
    %2128 = vmatpush1.msra.mxu0 0.0
    %2129 = vmatprep.subr.mxu0 0.0
    %2130 = vmatpush1.msra.mxu0 0.0
    %2131 = vmatprep.subr.mxu0 0.0
    %2132 = vmatpush1.msra.mxu0 0.0
    %2133 = vmatprep.subr.mxu0 0.0
    %2134 = vmatpush1.msra.mxu0 0.0
    %2135 = vmatprep.subr.mxu0 0.0
    %2136 = vmatpush1.msra.mxu0 0.0
    %2137 = vmatprep.subr.mxu0 0.0
    %2138 = vmatpush1.msra.mxu0 0.0
    %2139 = vmatprep.mubr.f32.mxu0 0.0
    %2140 = vmatmul.mubr.f32.gmra.mrb[0].mxu0 %v2061
    %v2141 = vpop.f32.mrb[0].mxu0
    %v2142 = vadd.f32 %v1985, %v2141
    %v2143 = vpop.f32.mrb[0].mxu0
    %v2144 = vadd.f32 %v1987, %v2143
    %2145 = vdwg.mxu0
    %2146 = vmatprep.subr.mxu0 %v2073
    %2147 = vmatpush1.msra.mxu0 %v2070
    %2148 = vmatprep.subr.mxu0 0.0
    %2149 = vmatpush1.msra.mxu0 0.0
    %2150 = vmatprep.subr.mxu0 0.0
    %2151 = vmatpush1.msra.mxu0 0.0
    %2152 = vmatprep.subr.mxu0 0.0
    %2153 = vmatpush1.msra.mxu0 0.0
    %2154 = vmatprep.subr.mxu0 0.0
    %2155 = vmatpush1.msra.mxu0 0.0
    %2156 = vmatprep.subr.mxu0 0.0
    %2157 = vmatpush1.msra.mxu0 0.0
    %2158 = vmatprep.subr.mxu0 0.0
    %2159 = vmatpush1.msra.mxu0 0.0
    %2160 = vmatprep.subr.mxu0 0.0
    %2161 = vmatpush1.msra.mxu0 0.0
    %2162 = vmatprep.subr.mxu0 0.0
    %2163 = vmatpush1.msra.mxu0 0.0
    %2164 = vmatprep.subr.mxu0 0.0
    %2165 = vmatpush1.msra.mxu0 0.0
    %2166 = vmatprep.subr.mxu0 0.0
    %2167 = vmatpush1.msra.mxu0 0.0
    %2168 = vmatprep.subr.mxu0 0.0
    %2169 = vmatpush1.msra.mxu0 0.0
    %2170 = vmatprep.subr.mxu0 0.0
    %2171 = vmatpush1.msra.mxu0 0.0
    %2172 = vmatprep.subr.mxu0 0.0
    %2173 = vmatpush1.msra.mxu0 0.0
    %2174 = vmatprep.subr.mxu0 0.0
    %2175 = vmatpush1.msra.mxu0 0.0
    %2176 = vmatprep.subr.mxu0 0.0
    %2177 = vmatpush1.msra.mxu0 0.0
    %2178 = vmatprep.subr.mxu0 0.0
    %2179 = vmatpush1.msra.mxu0 0.0
    %2180 = vmatprep.subr.mxu0 0.0
    %2181 = vmatpush1.msra.mxu0 0.0
    %2182 = vmatprep.subr.mxu0 0.0
    %2183 = vmatpush1.msra.mxu0 0.0
    %2184 = vmatprep.subr.mxu0 0.0
    %2185 = vmatpush1.msra.mxu0 0.0
    %2186 = vmatprep.subr.mxu0 0.0
    %2187 = vmatpush1.msra.mxu0 0.0
    %2188 = vmatprep.subr.mxu0 0.0
    %2189 = vmatpush1.msra.mxu0 0.0
    %2190 = vmatprep.subr.mxu0 0.0
    %2191 = vmatpush1.msra.mxu0 0.0
    %2192 = vmatprep.subr.mxu0 0.0
    %2193 = vmatpush1.msra.mxu0 0.0
    %2194 = vmatprep.subr.mxu0 0.0
    %2195 = vmatpush1.msra.mxu0 0.0
    %2196 = vmatprep.subr.mxu0 0.0
    %2197 = vmatpush1.msra.mxu0 0.0
    %2198 = vmatprep.subr.mxu0 0.0
    %2199 = vmatpush1.msra.mxu0 0.0
    %2200 = vmatprep.subr.mxu0 0.0
    %2201 = vmatpush1.msra.mxu0 0.0
    %2202 = vmatprep.subr.mxu0 0.0
    %2203 = vmatpush1.msra.mxu0 0.0
    %2204 = vmatprep.subr.mxu0 0.0
    %2205 = vmatpush1.msra.mxu0 0.0
    %2206 = vmatprep.subr.mxu0 0.0
    %2207 = vmatpush1.msra.mxu0 0.0
    %2208 = vmatprep.subr.mxu0 0.0
    %2209 = vmatpush1.msra.mxu0 0.0
    %2210 = vmatprep.mubr.f32.mxu0 0.0
    %2211 = vmatmul.mubr.f32.gmra.mrb[0].mxu0 %v2061
    %v2212 = vpop.f32.mrb[0].mxu0
    %v2213 = vadd.f32 %v2056, %v2212
    %v2214 = vpop.f32.mrb[0].mxu0
    %v2215 = vadd.f32 %v2058, %v2214
    %2216 = vdwg.mxu0
    %2217 = vrot.lane.b32.xlu0 %v1880, 16
    %v2218 = vpop.permute.xlu0 %2217
    %2219 = vrot.lane.b32.xlu0 %v1881, 16
    %v2220 = vpop.permute.xlu0 %2219
    %2221 = vrot.lane.b32.xlu0 %v1882, 16
    %v2222 = vpop.permute.xlu0 %2221
    %2223 = vrot.lane.b32.xlu0 %v1883, 16
    %v2224 = vpop.permute.xlu0 %2223
    %v2225 = vsel %vm406, %v2222, %v2224
    %v2226 = vsel %vm406, %v2220, %v2222
    %v2227 = vsel %vm406, %v2218, %v2220
    %v2228 = vsel %vm406, %v2224, %v2218
    %v2229 = vmul.f32 %v2228, %v417
    %v2230 = vmul.f32 %v2227, %v421
    %v2231 = vmul.f32 %v2226, %v425
    %v2232 = vmul.f32 %v2225, %v429
    %s2233 = scalar_lea.vmem %s6, 4
    %v2234 = vld [vmem:[%s2233] sm:$0xf]
    %v2236 = vsel %vm86, %v2234, 0
    %v2239 = vsel %vm90, %v2229, 0
    %v2242 = vsel %vm90, %v2230, 0
    %v2245 = vsel %vm90, %v2231, 0
    %v2248 = vsel %vm90, %v2232, 0
    %2250 = vmatprep.subr.mxu0 %v2242
    %2251 = vmatpush1.msra.mxu0 %v2239
    %2252 = vmatprep.subr.mxu0 0.0
    %2253 = vmatpush1.msra.mxu0 0.0
    %2254 = vmatprep.subr.mxu0 0.0
    %2255 = vmatpush1.msra.mxu0 0.0
    %2256 = vmatprep.subr.mxu0 0.0
    %2257 = vmatpush1.msra.mxu0 0.0
    %2258 = vmatprep.subr.mxu0 0.0
    %2259 = vmatpush1.msra.mxu0 0.0
    %2260 = vmatprep.subr.mxu0 0.0
    %2261 = vmatpush1.msra.mxu0 0.0
    %2262 = vmatprep.subr.mxu0 0.0
    %2263 = vmatpush1.msra.mxu0 0.0
    %2264 = vmatprep.subr.mxu0 0.0
    %2265 = vmatpush1.msra.mxu0 0.0
    %2266 = vmatprep.subr.mxu0 0.0
    %2267 = vmatpush1.msra.mxu0 0.0
    %2268 = vmatprep.subr.mxu0 0.0
    %2269 = vmatpush1.msra.mxu0 0.0
    %2270 = vmatprep.subr.mxu0 0.0
    %2271 = vmatpush1.msra.mxu0 0.0
    %2272 = vmatprep.subr.mxu0 0.0
    %2273 = vmatpush1.msra.mxu0 0.0
    %2274 = vmatprep.subr.mxu0 0.0
    %2275 = vmatpush1.msra.mxu0 0.0
    %2276 = vmatprep.subr.mxu0 0.0
    %2277 = vmatpush1.msra.mxu0 0.0
    %2278 = vmatprep.subr.mxu0 0.0
    %2279 = vmatpush1.msra.mxu0 0.0
    %2280 = vmatprep.subr.mxu0 0.0
    %2281 = vmatpush1.msra.mxu0 0.0
    %2282 = vmatprep.subr.mxu0 0.0
    %2283 = vmatpush1.msra.mxu0 0.0
    %2284 = vmatprep.subr.mxu0 0.0
    %2285 = vmatpush1.msra.mxu0 0.0
    %2286 = vmatprep.subr.mxu0 0.0
    %2287 = vmatpush1.msra.mxu0 0.0
    %2288 = vmatprep.subr.mxu0 0.0
    %2289 = vmatpush1.msra.mxu0 0.0
    %2290 = vmatprep.subr.mxu0 0.0
    %2291 = vmatpush1.msra.mxu0 0.0
    %2292 = vmatprep.subr.mxu0 0.0
    %2293 = vmatpush1.msra.mxu0 0.0
    %2294 = vmatprep.subr.mxu0 0.0
    %2295 = vmatpush1.msra.mxu0 0.0
    %2296 = vmatprep.subr.mxu0 0.0
    %2297 = vmatpush1.msra.mxu0 0.0
    %2298 = vmatprep.subr.mxu0 0.0
    %2299 = vmatpush1.msra.mxu0 0.0
    %2300 = vmatprep.subr.mxu0 0.0
    %2301 = vmatpush1.msra.mxu0 0.0
    %2302 = vmatprep.subr.mxu0 0.0
    %2303 = vmatpush1.msra.mxu0 0.0
    %2304 = vmatprep.subr.mxu0 0.0
    %2305 = vmatpush1.msra.mxu0 0.0
    %2306 = vmatprep.subr.mxu0 0.0
    %2307 = vmatpush1.msra.mxu0 0.0
    %2308 = vmatprep.subr.mxu0 0.0
    %2309 = vmatpush1.msra.mxu0 0.0
    %2310 = vmatprep.subr.mxu0 0.0
    %2311 = vmatpush1.msra.mxu0 0.0
    %2312 = vmatprep.subr.mxu0 0.0
    %2313 = vmatpush1.msra.mxu0 0.0
    %2314 = vmatprep.mubr.f32.mxu0 0.0
    %2315 = vmatmul.mubr.f32.gmra.mrb[0].mxu0 %v2236
    %v2316 = vpop.f32.mrb[0].mxu0
    %v2317 = vadd.f32 0.0, %v2316
    %v2318 = vpop.f32.mrb[0].mxu0
    %v2319 = vadd.f32 0.0, %v2318
    %2320 = vdwg.mxu0
    %2321 = vmatprep.subr.mxu0 %v2248
    %2322 = vmatpush1.msra.mxu0 %v2245
    %2323 = vmatprep.subr.mxu0 0.0
    %2324 = vmatpush1.msra.mxu0 0.0
    %2325 = vmatprep.subr.mxu0 0.0
    %2326 = vmatpush1.msra.mxu0 0.0
    %2327 = vmatprep.subr.mxu0 0.0
    %2328 = vmatpush1.msra.mxu0 0.0
    %2329 = vmatprep.subr.mxu0 0.0
    %2330 = vmatpush1.msra.mxu0 0.0
    %2331 = vmatprep.subr.mxu0 0.0
    %2332 = vmatpush1.msra.mxu0 0.0
    %2333 = vmatprep.subr.mxu0 0.0
    %2334 = vmatpush1.msra.mxu0 0.0
    %2335 = vmatprep.subr.mxu0 0.0
    %2336 = vmatpush1.msra.mxu0 0.0
    %2337 = vmatprep.subr.mxu0 0.0
    %2338 = vmatpush1.msra.mxu0 0.0
    %2339 = vmatprep.subr.mxu0 0.0
    %2340 = vmatpush1.msra.mxu0 0.0
    %2341 = vmatprep.subr.mxu0 0.0
    %2342 = vmatpush1.msra.mxu0 0.0
    %2343 = vmatprep.subr.mxu0 0.0
    %2344 = vmatpush1.msra.mxu0 0.0
    %2345 = vmatprep.subr.mxu0 0.0
    %2346 = vmatpush1.msra.mxu0 0.0
    %2347 = vmatprep.subr.mxu0 0.0
    %2348 = vmatpush1.msra.mxu0 0.0
    %2349 = vmatprep.subr.mxu0 0.0
    %2350 = vmatpush1.msra.mxu0 0.0
    %2351 = vmatprep.subr.mxu0 0.0
    %2352 = vmatpush1.msra.mxu0 0.0
    %2353 = vmatprep.subr.mxu0 0.0
    %2354 = vmatpush1.msra.mxu0 0.0
    %2355 = vmatprep.subr.mxu0 0.0
    %2356 = vmatpush1.msra.mxu0 0.0
    %2357 = vmatprep.subr.mxu0 0.0
    %2358 = vmatpush1.msra.mxu0 0.0
    %2359 = vmatprep.subr.mxu0 0.0
    %2360 = vmatpush1.msra.mxu0 0.0
    %2361 = vmatprep.subr.mxu0 0.0
    %2362 = vmatpush1.msra.mxu0 0.0
    %2363 = vmatprep.subr.mxu0 0.0
    %2364 = vmatpush1.msra.mxu0 0.0
    %2365 = vmatprep.subr.mxu0 0.0
    %2366 = vmatpush1.msra.mxu0 0.0
    %2367 = vmatprep.subr.mxu0 0.0
    %2368 = vmatpush1.msra.mxu0 0.0
    %2369 = vmatprep.subr.mxu0 0.0
    %2370 = vmatpush1.msra.mxu0 0.0
    %2371 = vmatprep.subr.mxu0 0.0
    %2372 = vmatpush1.msra.mxu0 0.0
    %2373 = vmatprep.subr.mxu0 0.0
    %2374 = vmatpush1.msra.mxu0 0.0
    %2375 = vmatprep.subr.mxu0 0.0
    %2376 = vmatpush1.msra.mxu0 0.0
    %2377 = vmatprep.subr.mxu0 0.0
    %2378 = vmatpush1.msra.mxu0 0.0
    %2379 = vmatprep.subr.mxu0 0.0
    %2380 = vmatpush1.msra.mxu0 0.0
    %2381 = vmatprep.subr.mxu0 0.0
    %2382 = vmatpush1.msra.mxu0 0.0
    %2383 = vmatprep.subr.mxu0 0.0
    %2384 = vmatpush1.msra.mxu0 0.0
    %2385 = vmatprep.mubr.f32.mxu0 0.0
    %2386 = vmatmul.mubr.f32.gmra.mrb[0].mxu0 %v2236
    %v2387 = vpop.f32.mrb[0].mxu0
    %v2388 = vadd.f32 0.0, %v2387
    %v2389 = vpop.f32.mrb[0].mxu0
    %v2390 = vadd.f32 0.0, %v2389
    %2391 = vdwg.mxu0
    %v2392 = vadd.f32 %v2142, %v2317
    %v2393 = vadd.f32 %v2144, %v2319
    %v2394 = vadd.f32 %v2213, %v2388
    %v2395 = vadd.f32 %v2215, %v2390
    %2396 = vrot.lane.b32.xlu0 %v1880, 15
    %v2397 = vpop.permute.xlu0 %2396
    %2398 = vrot.lane.b32.xlu0 %v1881, 15
    %v2399 = vpop.permute.xlu0 %2398
    %2400 = vrot.lane.b32.xlu0 %v1882, 15
    %v2401 = vpop.permute.xlu0 %2400
    %2402 = vrot.lane.b32.xlu0 %v1883, 15
    %v2403 = vpop.permute.xlu0 %2402
    %v2404 = vsel %vm609, %v2401, %v2403
    %v2405 = vsel %vm609, %v2399, %v2401
    %v2406 = vsel %vm609, %v2397, %v2399
    %v2407 = vsel %vm609, %v2403, %v2397
    %v2408 = vmul.f32 %v2407, %v620
    %v2409 = vmul.f32 %v2406, %v624
    %v2410 = vmul.f32 %v2405, %v628
    %v2411 = vmul.f32 %v2404, %v632
    %s2412 = scalar_lea.vmem %s6, 8
    %v2413 = vld [vmem:[%s2412] sm:$0xf]
    %v2415 = vsel %vm86, %v2413, 0
    %v2418 = vsel %vm90, %v2408, 0
    %v2421 = vsel %vm90, %v2409, 0
    %v2424 = vsel %vm90, %v2410, 0
    %v2427 = vsel %vm90, %v2411, 0
    %2429 = vmatprep.subr.mxu0 %v2421
    %2430 = vmatpush1.msra.mxu0 %v2418
    %2431 = vmatprep.subr.mxu0 0.0
    %2432 = vmatpush1.msra.mxu0 0.0
    %2433 = vmatprep.subr.mxu0 0.0
    %2434 = vmatpush1.msra.mxu0 0.0
    %2435 = vmatprep.subr.mxu0 0.0
    %2436 = vmatpush1.msra.mxu0 0.0
    %2437 = vmatprep.subr.mxu0 0.0
    %2438 = vmatpush1.msra.mxu0 0.0
    %2439 = vmatprep.subr.mxu0 0.0
    %2440 = vmatpush1.msra.mxu0 0.0
    %2441 = vmatprep.subr.mxu0 0.0
    %2442 = vmatpush1.msra.mxu0 0.0
    %2443 = vmatprep.subr.mxu0 0.0
    %2444 = vmatpush1.msra.mxu0 0.0
    %2445 = vmatprep.subr.mxu0 0.0
    %2446 = vmatpush1.msra.mxu0 0.0
    %2447 = vmatprep.subr.mxu0 0.0
    %2448 = vmatpush1.msra.mxu0 0.0
    %2449 = vmatprep.subr.mxu0 0.0
    %2450 = vmatpush1.msra.mxu0 0.0
    %2451 = vmatprep.subr.mxu0 0.0
    %2452 = vmatpush1.msra.mxu0 0.0
    %2453 = vmatprep.subr.mxu0 0.0
    %2454 = vmatpush1.msra.mxu0 0.0
    %2455 = vmatprep.subr.mxu0 0.0
    %2456 = vmatpush1.msra.mxu0 0.0
    %2457 = vmatprep.subr.mxu0 0.0
    %2458 = vmatpush1.msra.mxu0 0.0
    %2459 = vmatprep.subr.mxu0 0.0
    %2460 = vmatpush1.msra.mxu0 0.0
    %2461 = vmatprep.subr.mxu0 0.0
    %2462 = vmatpush1.msra.mxu0 0.0
    %2463 = vmatprep.subr.mxu0 0.0
    %2464 = vmatpush1.msra.mxu0 0.0
    %2465 = vmatprep.subr.mxu0 0.0
    %2466 = vmatpush1.msra.mxu0 0.0
    %2467 = vmatprep.subr.mxu0 0.0
    %2468 = vmatpush1.msra.mxu0 0.0
    %2469 = vmatprep.subr.mxu0 0.0
    %2470 = vmatpush1.msra.mxu0 0.0
    %2471 = vmatprep.subr.mxu0 0.0
    %2472 = vmatpush1.msra.mxu0 0.0
    %2473 = vmatprep.subr.mxu0 0.0
    %2474 = vmatpush1.msra.mxu0 0.0
    %2475 = vmatprep.subr.mxu0 0.0
    %2476 = vmatpush1.msra.mxu0 0.0
    %2477 = vmatprep.subr.mxu0 0.0
    %2478 = vmatpush1.msra.mxu0 0.0
    %2479 = vmatprep.subr.mxu0 0.0
    %2480 = vmatpush1.msra.mxu0 0.0
    %2481 = vmatprep.subr.mxu0 0.0
    %2482 = vmatpush1.msra.mxu0 0.0
    %2483 = vmatprep.subr.mxu0 0.0
    %2484 = vmatpush1.msra.mxu0 0.0
    %2485 = vmatprep.subr.mxu0 0.0
    %2486 = vmatpush1.msra.mxu0 0.0
    %2487 = vmatprep.subr.mxu0 0.0
    %2488 = vmatpush1.msra.mxu0 0.0
    %2489 = vmatprep.subr.mxu0 0.0
    %2490 = vmatpush1.msra.mxu0 0.0
    %2491 = vmatprep.subr.mxu0 0.0
    %2492 = vmatpush1.msra.mxu0 0.0
    %2493 = vmatprep.mubr.f32.mxu0 0.0
    %2494 = vmatmul.mubr.f32.gmra.mrb[0].mxu0 %v2415
    %v2495 = vpop.f32.mrb[0].mxu0
    %v2496 = vadd.f32 0.0, %v2495
    %v2497 = vpop.f32.mrb[0].mxu0
    %v2498 = vadd.f32 0.0, %v2497
    %2499 = vdwg.mxu0
    %2500 = vmatprep.subr.mxu0 %v2427
    %2501 = vmatpush1.msra.mxu0 %v2424
    %2502 = vmatprep.subr.mxu0 0.0
    %2503 = vmatpush1.msra.mxu0 0.0
    %2504 = vmatprep.subr.mxu0 0.0
    %2505 = vmatpush1.msra.mxu0 0.0
    %2506 = vmatprep.subr.mxu0 0.0
    %2507 = vmatpush1.msra.mxu0 0.0
    %2508 = vmatprep.subr.mxu0 0.0
    %2509 = vmatpush1.msra.mxu0 0.0
    %2510 = vmatprep.subr.mxu0 0.0
    %2511 = vmatpush1.msra.mxu0 0.0
    %2512 = vmatprep.subr.mxu0 0.0
    %2513 = vmatpush1.msra.mxu0 0.0
    %2514 = vmatprep.subr.mxu0 0.0
    %2515 = vmatpush1.msra.mxu0 0.0
    %2516 = vmatprep.subr.mxu0 0.0
    %2517 = vmatpush1.msra.mxu0 0.0
    %2518 = vmatprep.subr.mxu0 0.0
    %2519 = vmatpush1.msra.mxu0 0.0
    %2520 = vmatprep.subr.mxu0 0.0
    %2521 = vmatpush1.msra.mxu0 0.0
    %2522 = vmatprep.subr.mxu0 0.0
    %2523 = vmatpush1.msra.mxu0 0.0
    %2524 = vmatprep.subr.mxu0 0.0
    %2525 = vmatpush1.msra.mxu0 0.0
    %2526 = vmatprep.subr.mxu0 0.0
    %2527 = vmatpush1.msra.mxu0 0.0
    %2528 = vmatprep.subr.mxu0 0.0
    %2529 = vmatpush1.msra.mxu0 0.0
    %2530 = vmatprep.subr.mxu0 0.0
    %2531 = vmatpush1.msra.mxu0 0.0
    %2532 = vmatprep.subr.mxu0 0.0
    %2533 = vmatpush1.msra.mxu0 0.0
    %2534 = vmatprep.subr.mxu0 0.0
    %2535 = vmatpush1.msra.mxu0 0.0
    %2536 = vmatprep.subr.mxu0 0.0
    %2537 = vmatpush1.msra.mxu0 0.0
    %2538 = vmatprep.subr.mxu0 0.0
    %2539 = vmatpush1.msra.mxu0 0.0
    %2540 = vmatprep.subr.mxu0 0.0
    %2541 = vmatpush1.msra.mxu0 0.0
    %2542 = vmatprep.subr.mxu0 0.0
    %2543 = vmatpush1.msra.mxu0 0.0
    %2544 = vmatprep.subr.mxu0 0.0
    %2545 = vmatpush1.msra.mxu0 0.0
    %2546 = vmatprep.subr.mxu0 0.0
    %2547 = vmatpush1.msra.mxu0 0.0
    %2548 = vmatprep.subr.mxu0 0.0
    %2549 = vmatpush1.msra.mxu0 0.0
    %2550 = vmatprep.subr.mxu0 0.0
    %2551 = vmatpush1.msra.mxu0 0.0
    %2552 = vmatprep.subr.mxu0 0.0
    %2553 = vmatpush1.msra.mxu0 0.0
    %2554 = vmatprep.subr.mxu0 0.0
    %2555 = vmatpush1.msra.mxu0 0.0
    %2556 = vmatprep.subr.mxu0 0.0
    %2557 = vmatpush1.msra.mxu0 0.0
    %2558 = vmatprep.subr.mxu0 0.0
    %2559 = vmatpush1.msra.mxu0 0.0
    %2560 = vmatprep.subr.mxu0 0.0
    %2561 = vmatpush1.msra.mxu0 0.0
    %2562 = vmatprep.subr.mxu0 0.0
    %2563 = vmatpush1.msra.mxu0 0.0
    %2564 = vmatprep.mubr.f32.mxu0 0.0
    %2565 = vmatmul.mubr.f32.gmra.mrb[0].mxu0 %v2415
    %v2566 = vpop.f32.mrb[0].mxu0
    %v2567 = vadd.f32 0.0, %v2566
    %v2568 = vpop.f32.mrb[0].mxu0
    %v2569 = vadd.f32 0.0, %v2568
    %2570 = vdwg.mxu0
    %v2571 = vadd.f32 %v2392, %v2496
    %v2572 = vadd.f32 %v2393, %v2498
    %v2573 = vadd.f32 %v2394, %v2567
    %v2574 = vadd.f32 %v2395, %v2569
    %2575 = vrot.lane.b32.xlu0 %v1880, 1
    %v2576 = vpop.permute.xlu0 %2575
    %2577 = vrot.lane.b32.xlu0 %v1881, 1
    %v2578 = vpop.permute.xlu0 %2577
    %2579 = vrot.lane.b32.xlu0 %v1882, 1
    %v2580 = vpop.permute.xlu0 %2579
    %2581 = vrot.lane.b32.xlu0 %v1883, 1
    %v2582 = vpop.permute.xlu0 %2581
    %v2583 = vsel %vm812, %v2580, %v2582
    %v2584 = vsel %vm812, %v2578, %v2580
    %v2585 = vsel %vm812, %v2576, %v2578
    %v2586 = vsel %vm812, %v2582, %v2576
    %v2587 = vmul.f32 %v2586, %v823
    %v2588 = vmul.f32 %v2585, %v827
    %v2589 = vmul.f32 %v2584, %v831
    %v2590 = vmul.f32 %v2583, %v835
    %s2591 = scalar_lea.vmem %s6, 12
    %v2592 = vld [vmem:[%s2591] sm:$0xf]
    %v2594 = vsel %vm86, %v2592, 0
    %v2597 = vsel %vm90, %v2587, 0
    %v2600 = vsel %vm90, %v2588, 0
    %v2603 = vsel %vm90, %v2589, 0
    %v2606 = vsel %vm90, %v2590, 0
    %2608 = vmatprep.subr.mxu0 %v2600
    %2609 = vmatpush1.msra.mxu0 %v2597
    %2610 = vmatprep.subr.mxu0 0.0
    %2611 = vmatpush1.msra.mxu0 0.0
    %2612 = vmatprep.subr.mxu0 0.0
    %2613 = vmatpush1.msra.mxu0 0.0
    %2614 = vmatprep.subr.mxu0 0.0
    %2615 = vmatpush1.msra.mxu0 0.0
    %2616 = vmatprep.subr.mxu0 0.0
    %2617 = vmatpush1.msra.mxu0 0.0
    %2618 = vmatprep.subr.mxu0 0.0
    %2619 = vmatpush1.msra.mxu0 0.0
    %2620 = vmatprep.subr.mxu0 0.0
    %2621 = vmatpush1.msra.mxu0 0.0
    %2622 = vmatprep.subr.mxu0 0.0
    %2623 = vmatpush1.msra.mxu0 0.0
    %2624 = vmatprep.subr.mxu0 0.0
    %2625 = vmatpush1.msra.mxu0 0.0
    %2626 = vmatprep.subr.mxu0 0.0
    %2627 = vmatpush1.msra.mxu0 0.0
    %2628 = vmatprep.subr.mxu0 0.0
    %2629 = vmatpush1.msra.mxu0 0.0
    %2630 = vmatprep.subr.mxu0 0.0
    %2631 = vmatpush1.msra.mxu0 0.0
    %2632 = vmatprep.subr.mxu0 0.0
    %2633 = vmatpush1.msra.mxu0 0.0
    %2634 = vmatprep.subr.mxu0 0.0
    %2635 = vmatpush1.msra.mxu0 0.0
    %2636 = vmatprep.subr.mxu0 0.0
    %2637 = vmatpush1.msra.mxu0 0.0
    %2638 = vmatprep.subr.mxu0 0.0
    %2639 = vmatpush1.msra.mxu0 0.0
    %2640 = vmatprep.subr.mxu0 0.0
    %2641 = vmatpush1.msra.mxu0 0.0
    %2642 = vmatprep.subr.mxu0 0.0
    %2643 = vmatpush1.msra.mxu0 0.0
    %2644 = vmatprep.subr.mxu0 0.0
    %2645 = vmatpush1.msra.mxu0 0.0
    %2646 = vmatprep.subr.mxu0 0.0
    %2647 = vmatpush1.msra.mxu0 0.0
    %2648 = vmatprep.subr.mxu0 0.0
    %2649 = vmatpush1.msra.mxu0 0.0
    %2650 = vmatprep.subr.mxu0 0.0
    %2651 = vmatpush1.msra.mxu0 0.0
    %2652 = vmatprep.subr.mxu0 0.0
    %2653 = vmatpush1.msra.mxu0 0.0
    %2654 = vmatprep.subr.mxu0 0.0
    %2655 = vmatpush1.msra.mxu0 0.0
    %2656 = vmatprep.subr.mxu0 0.0
    %2657 = vmatpush1.msra.mxu0 0.0
    %2658 = vmatprep.subr.mxu0 0.0
    %2659 = vmatpush1.msra.mxu0 0.0
    %2660 = vmatprep.subr.mxu0 0.0
    %2661 = vmatpush1.msra.mxu0 0.0
    %2662 = vmatprep.subr.mxu0 0.0
    %2663 = vmatpush1.msra.mxu0 0.0
    %2664 = vmatprep.subr.mxu0 0.0
    %2665 = vmatpush1.msra.mxu0 0.0
    %2666 = vmatprep.subr.mxu0 0.0
    %2667 = vmatpush1.msra.mxu0 0.0
    %2668 = vmatprep.subr.mxu0 0.0
    %2669 = vmatpush1.msra.mxu0 0.0
    %2670 = vmatprep.subr.mxu0 0.0
    %2671 = vmatpush1.msra.mxu0 0.0
    %2672 = vmatprep.mubr.f32.mxu0 0.0
    %2673 = vmatmul.mubr.f32.gmra.mrb[0].mxu0 %v2594
    %v2674 = vpop.f32.mrb[0].mxu0
    %v2675 = vadd.f32 0.0, %v2674
    %v2676 = vpop.f32.mrb[0].mxu0
    %v2677 = vadd.f32 0.0, %v2676
    %2678 = vdwg.mxu0
    %2679 = vmatprep.subr.mxu0 %v2606
    %2680 = vmatpush1.msra.mxu0 %v2603
    %2681 = vmatprep.subr.mxu0 0.0
    %2682 = vmatpush1.msra.mxu0 0.0
    %2683 = vmatprep.subr.mxu0 0.0
    %2684 = vmatpush1.msra.mxu0 0.0
    %2685 = vmatprep.subr.mxu0 0.0
    %2686 = vmatpush1.msra.mxu0 0.0
    %2687 = vmatprep.subr.mxu0 0.0
    %2688 = vmatpush1.msra.mxu0 0.0
    %2689 = vmatprep.subr.mxu0 0.0
    %2690 = vmatpush1.msra.mxu0 0.0
    %2691 = vmatprep.subr.mxu0 0.0
    %2692 = vmatpush1.msra.mxu0 0.0
    %2693 = vmatprep.subr.mxu0 0.0
    %2694 = vmatpush1.msra.mxu0 0.0
    %2695 = vmatprep.subr.mxu0 0.0
    %2696 = vmatpush1.msra.mxu0 0.0
    %2697 = vmatprep.subr.mxu0 0.0
    %2698 = vmatpush1.msra.mxu0 0.0
    %2699 = vmatprep.subr.mxu0 0.0
    %2700 = vmatpush1.msra.mxu0 0.0
    %2701 = vmatprep.subr.mxu0 0.0
    %2702 = vmatpush1.msra.mxu0 0.0
    %2703 = vmatprep.subr.mxu0 0.0
    %2704 = vmatpush1.msra.mxu0 0.0
    %2705 = vmatprep.subr.mxu0 0.0
    %2706 = vmatpush1.msra.mxu0 0.0
    %2707 = vmatprep.subr.mxu0 0.0
    %2708 = vmatpush1.msra.mxu0 0.0
    %2709 = vmatprep.subr.mxu0 0.0
    %2710 = vmatpush1.msra.mxu0 0.0
    %2711 = vmatprep.subr.mxu0 0.0
    %2712 = vmatpush1.msra.mxu0 0.0
    %2713 = vmatprep.subr.mxu0 0.0
    %2714 = vmatpush1.msra.mxu0 0.0
    %2715 = vmatprep.subr.mxu0 0.0
    %2716 = vmatpush1.msra.mxu0 0.0
    %2717 = vmatprep.subr.mxu0 0.0
    %2718 = vmatpush1.msra.mxu0 0.0
    %2719 = vmatprep.subr.mxu0 0.0
    %2720 = vmatpush1.msra.mxu0 0.0
    %2721 = vmatprep.subr.mxu0 0.0
    %2722 = vmatpush1.msra.mxu0 0.0
    %2723 = vmatprep.subr.mxu0 0.0
    %2724 = vmatpush1.msra.mxu0 0.0
    %2725 = vmatprep.subr.mxu0 0.0
    %2726 = vmatpush1.msra.mxu0 0.0
    %2727 = vmatprep.subr.mxu0 0.0
    %2728 = vmatpush1.msra.mxu0 0.0
    %2729 = vmatprep.subr.mxu0 0.0
    %2730 = vmatpush1.msra.mxu0 0.0
    %2731 = vmatprep.subr.mxu0 0.0
    %2732 = vmatpush1.msra.mxu0 0.0
    %2733 = vmatprep.subr.mxu0 0.0
    %2734 = vmatpush1.msra.mxu0 0.0
    %2735 = vmatprep.subr.mxu0 0.0
    %2736 = vmatpush1.msra.mxu0 0.0
    %2737 = vmatprep.subr.mxu0 0.0
    %2738 = vmatpush1.msra.mxu0 0.0
    %2739 = vmatprep.subr.mxu0 0.0
    %2740 = vmatpush1.msra.mxu0 0.0
    %2741 = vmatprep.subr.mxu0 0.0
    %2742 = vmatpush1.msra.mxu0 0.0
    %2743 = vmatprep.mubr.f32.mxu0 0.0
    %2744 = vmatmul.mubr.f32.gmra.mrb[0].mxu0 %v2594
    %v2745 = vpop.f32.mrb[0].mxu0
    %v2746 = vadd.f32 0.0, %v2745
    %v2747 = vpop.f32.mrb[0].mxu0
    %v2748 = vadd.f32 0.0, %v2747
    %2749 = vdwg.mxu0
    %v2750 = vadd.f32 %v2571, %v2675
    %v2751 = vadd.f32 %v2572, %v2677
    %v2752 = vadd.f32 %v2573, %v2746
    %v2753 = vadd.f32 %v2574, %v2748
    %2754 = vrot.lane.b32.xlu0 %v1880, 127
    %v2755 = vpop.permute.xlu0 %2754
    %2756 = vrot.lane.b32.xlu0 %v1881, 127
    %v2757 = vpop.permute.xlu0 %2756
    %2758 = vrot.lane.b32.xlu0 %v1882, 127
    %v2759 = vpop.permute.xlu0 %2758
    %2760 = vrot.lane.b32.xlu0 %v1883, 127
    %v2761 = vpop.permute.xlu0 %2760
    %v2762 = vsel %vm1015, %v2759, %v2761
    %v2763 = vsel %vm1015, %v2757, %v2759
    %v2764 = vsel %vm1015, %v2755, %v2757
    %v2765 = vsel %vm1015, %v2761, %v2755
    %v2766 = vmul.f32 %v2764, %v1026
    %v2767 = vmul.f32 %v2763, %v1030
    %v2768 = vmul.f32 %v2762, %v1034
    %v2769 = vmul.f32 %v2765, %v1038
    %s2770 = scalar_lea.vmem %s6, 20
    %v2771 = vld [vmem:[%s2770] sm:$0xf]
    %v2773 = vsel %vm86, %v2771, 0
    %v2776 = vsel %vm90, %v2766, 0
    %v2779 = vsel %vm90, %v2767, 0
    %v2782 = vsel %vm90, %v2768, 0
    %v2785 = vsel %vm90, %v2769, 0
    %2787 = vmatprep.subr.mxu0 %v2779
    %2788 = vmatpush1.msra.mxu0 %v2776
    %2789 = vmatprep.subr.mxu0 0.0
    %2790 = vmatpush1.msra.mxu0 0.0
    %2791 = vmatprep.subr.mxu0 0.0
    %2792 = vmatpush1.msra.mxu0 0.0
    %2793 = vmatprep.subr.mxu0 0.0
    %2794 = vmatpush1.msra.mxu0 0.0
    %2795 = vmatprep.subr.mxu0 0.0
    %2796 = vmatpush1.msra.mxu0 0.0
    %2797 = vmatprep.subr.mxu0 0.0
    %2798 = vmatpush1.msra.mxu0 0.0
    %2799 = vmatprep.subr.mxu0 0.0
    %2800 = vmatpush1.msra.mxu0 0.0
    %2801 = vmatprep.subr.mxu0 0.0
    %2802 = vmatpush1.msra.mxu0 0.0
    %2803 = vmatprep.subr.mxu0 0.0
    %2804 = vmatpush1.msra.mxu0 0.0
    %2805 = vmatprep.subr.mxu0 0.0
    %2806 = vmatpush1.msra.mxu0 0.0
    %2807 = vmatprep.subr.mxu0 0.0
    %2808 = vmatpush1.msra.mxu0 0.0
    %2809 = vmatprep.subr.mxu0 0.0
    %2810 = vmatpush1.msra.mxu0 0.0
    %2811 = vmatprep.subr.mxu0 0.0
    %2812 = vmatpush1.msra.mxu0 0.0
    %2813 = vmatprep.subr.mxu0 0.0
    %2814 = vmatpush1.msra.mxu0 0.0
    %2815 = vmatprep.subr.mxu0 0.0
    %2816 = vmatpush1.msra.mxu0 0.0
    %2817 = vmatprep.subr.mxu0 0.0
    %2818 = vmatpush1.msra.mxu0 0.0
    %2819 = vmatprep.subr.mxu0 0.0
    %2820 = vmatpush1.msra.mxu0 0.0
    %2821 = vmatprep.subr.mxu0 0.0
    %2822 = vmatpush1.msra.mxu0 0.0
    %2823 = vmatprep.subr.mxu0 0.0
    %2824 = vmatpush1.msra.mxu0 0.0
    %2825 = vmatprep.subr.mxu0 0.0
    %2826 = vmatpush1.msra.mxu0 0.0
    %2827 = vmatprep.subr.mxu0 0.0
    %2828 = vmatpush1.msra.mxu0 0.0
    %2829 = vmatprep.subr.mxu0 0.0
    %2830 = vmatpush1.msra.mxu0 0.0
    %2831 = vmatprep.subr.mxu0 0.0
    %2832 = vmatpush1.msra.mxu0 0.0
    %2833 = vmatprep.subr.mxu0 0.0
    %2834 = vmatpush1.msra.mxu0 0.0
    %2835 = vmatprep.subr.mxu0 0.0
    %2836 = vmatpush1.msra.mxu0 0.0
    %2837 = vmatprep.subr.mxu0 0.0
    %2838 = vmatpush1.msra.mxu0 0.0
    %2839 = vmatprep.subr.mxu0 0.0
    %2840 = vmatpush1.msra.mxu0 0.0
    %2841 = vmatprep.subr.mxu0 0.0
    %2842 = vmatpush1.msra.mxu0 0.0
    %2843 = vmatprep.subr.mxu0 0.0
    %2844 = vmatpush1.msra.mxu0 0.0
    %2845 = vmatprep.subr.mxu0 0.0
    %2846 = vmatpush1.msra.mxu0 0.0
    %2847 = vmatprep.subr.mxu0 0.0
    %2848 = vmatpush1.msra.mxu0 0.0
    %2849 = vmatprep.subr.mxu0 0.0
    %2850 = vmatpush1.msra.mxu0 0.0
    %2851 = vmatprep.mubr.f32.mxu0 0.0
    %2852 = vmatmul.mubr.f32.gmra.mrb[0].mxu0 %v2773
    %v2853 = vpop.f32.mrb[0].mxu0
    %v2854 = vadd.f32 0.0, %v2853
    %v2855 = vpop.f32.mrb[0].mxu0
    %v2856 = vadd.f32 0.0, %v2855
    %2857 = vdwg.mxu0
    %2858 = vmatprep.subr.mxu0 %v2785
    %2859 = vmatpush1.msra.mxu0 %v2782
    %2860 = vmatprep.subr.mxu0 0.0
    %2861 = vmatpush1.msra.mxu0 0.0
    %2862 = vmatprep.subr.mxu0 0.0
    %2863 = vmatpush1.msra.mxu0 0.0
    %2864 = vmatprep.subr.mxu0 0.0
    %2865 = vmatpush1.msra.mxu0 0.0
    %2866 = vmatprep.subr.mxu0 0.0
    %2867 = vmatpush1.msra.mxu0 0.0
    %2868 = vmatprep.subr.mxu0 0.0
    %2869 = vmatpush1.msra.mxu0 0.0
    %2870 = vmatprep.subr.mxu0 0.0
    %2871 = vmatpush1.msra.mxu0 0.0
    %2872 = vmatprep.subr.mxu0 0.0
    %2873 = vmatpush1.msra.mxu0 0.0
    %2874 = vmatprep.subr.mxu0 0.0
    %2875 = vmatpush1.msra.mxu0 0.0
    %2876 = vmatprep.subr.mxu0 0.0
    %2877 = vmatpush1.msra.mxu0 0.0
    %2878 = vmatprep.subr.mxu0 0.0
    %2879 = vmatpush1.msra.mxu0 0.0
    %2880 = vmatprep.subr.mxu0 0.0
    %2881 = vmatpush1.msra.mxu0 0.0
    %2882 = vmatprep.subr.mxu0 0.0
    %2883 = vmatpush1.msra.mxu0 0.0
    %2884 = vmatprep.subr.mxu0 0.0
    %2885 = vmatpush1.msra.mxu0 0.0
    %2886 = vmatprep.subr.mxu0 0.0
    %2887 = vmatpush1.msra.mxu0 0.0
    %2888 = vmatprep.subr.mxu0 0.0
    %2889 = vmatpush1.msra.mxu0 0.0
    %2890 = vmatprep.subr.mxu0 0.0
    %2891 = vmatpush1.msra.mxu0 0.0
    %2892 = vmatprep.subr.mxu0 0.0
    %2893 = vmatpush1.msra.mxu0 0.0
    %2894 = vmatprep.subr.mxu0 0.0
    %2895 = vmatpush1.msra.mxu0 0.0
    %2896 = vmatprep.subr.mxu0 0.0
    %2897 = vmatpush1.msra.mxu0 0.0
    %2898 = vmatprep.subr.mxu0 0.0
    %2899 = vmatpush1.msra.mxu0 0.0
    %2900 = vmatprep.subr.mxu0 0.0
    %2901 = vmatpush1.msra.mxu0 0.0
    %2902 = vmatprep.subr.mxu0 0.0
    %2903 = vmatpush1.msra.mxu0 0.0
    %2904 = vmatprep.subr.mxu0 0.0
    %2905 = vmatpush1.msra.mxu0 0.0
    %2906 = vmatprep.subr.mxu0 0.0
    %2907 = vmatpush1.msra.mxu0 0.0
    %2908 = vmatprep.subr.mxu0 0.0
    %2909 = vmatpush1.msra.mxu0 0.0
    %2910 = vmatprep.subr.mxu0 0.0
    %2911 = vmatpush1.msra.mxu0 0.0
    %2912 = vmatprep.subr.mxu0 0.0
    %2913 = vmatpush1.msra.mxu0 0.0
    %2914 = vmatprep.subr.mxu0 0.0
    %2915 = vmatpush1.msra.mxu0 0.0
    %2916 = vmatprep.subr.mxu0 0.0
    %2917 = vmatpush1.msra.mxu0 0.0
    %2918 = vmatprep.subr.mxu0 0.0
    %2919 = vmatpush1.msra.mxu0 0.0
    %2920 = vmatprep.subr.mxu0 0.0
    %2921 = vmatpush1.msra.mxu0 0.0
    %2922 = vmatprep.mubr.f32.mxu0 0.0
    %2923 = vmatmul.mubr.f32.gmra.mrb[0].mxu0 %v2773
    %v2924 = vpop.f32.mrb[0].mxu0
    %v2925 = vadd.f32 0.0, %v2924
    %v2926 = vpop.f32.mrb[0].mxu0
    %v2927 = vadd.f32 0.0, %v2926
    %2928 = vdwg.mxu0
    %v2929 = vadd.f32 %v2750, %v2854
    %v2930 = vadd.f32 %v2751, %v2856
    %v2931 = vadd.f32 %v2752, %v2925
    %v2932 = vadd.f32 %v2753, %v2927
    %2933 = vrot.lane.b32.xlu0 %v1880, 113
    %v2934 = vpop.permute.xlu0 %2933
    %2935 = vrot.lane.b32.xlu0 %v1881, 113
    %v2936 = vpop.permute.xlu0 %2935
    %2937 = vrot.lane.b32.xlu0 %v1882, 113
    %v2938 = vpop.permute.xlu0 %2937
    %2939 = vrot.lane.b32.xlu0 %v1883, 113
    %v2940 = vpop.permute.xlu0 %2939
    %v2941 = vsel %vm1218, %v2938, %v2940
    %v2942 = vsel %vm1218, %v2936, %v2938
    %v2943 = vsel %vm1218, %v2934, %v2936
    %v2944 = vsel %vm1218, %v2940, %v2934
    %v2945 = vmul.f32 %v2943, %v1229
    %v2946 = vmul.f32 %v2942, %v1233
    %v2947 = vmul.f32 %v2941, %v1237
    %v2948 = vmul.f32 %v2944, %v1241
    %s2949 = scalar_lea.vmem %s6, 24
    %v2950 = vld [vmem:[%s2949] sm:$0xf]
    %v2952 = vsel %vm86, %v2950, 0
    %v2955 = vsel %vm90, %v2945, 0
    %v2958 = vsel %vm90, %v2946, 0
    %v2961 = vsel %vm90, %v2947, 0
    %v2964 = vsel %vm90, %v2948, 0
    %2966 = vmatprep.subr.mxu0 %v2958
    %2967 = vmatpush1.msra.mxu0 %v2955
    %2968 = vmatprep.subr.mxu0 0.0
    %2969 = vmatpush1.msra.mxu0 0.0
    %2970 = vmatprep.subr.mxu0 0.0
    %2971 = vmatpush1.msra.mxu0 0.0
    %2972 = vmatprep.subr.mxu0 0.0
    %2973 = vmatpush1.msra.mxu0 0.0
    %2974 = vmatprep.subr.mxu0 0.0
    %2975 = vmatpush1.msra.mxu0 0.0
    %2976 = vmatprep.subr.mxu0 0.0
    %2977 = vmatpush1.msra.mxu0 0.0
    %2978 = vmatprep.subr.mxu0 0.0
    %2979 = vmatpush1.msra.mxu0 0.0
    %2980 = vmatprep.subr.mxu0 0.0
    %2981 = vmatpush1.msra.mxu0 0.0
    %2982 = vmatprep.subr.mxu0 0.0
    %2983 = vmatpush1.msra.mxu0 0.0
    %2984 = vmatprep.subr.mxu0 0.0
    %2985 = vmatpush1.msra.mxu0 0.0
    %2986 = vmatprep.subr.mxu0 0.0
    %2987 = vmatpush1.msra.mxu0 0.0
    %2988 = vmatprep.subr.mxu0 0.0
    %2989 = vmatpush1.msra.mxu0 0.0
    %2990 = vmatprep.subr.mxu0 0.0
    %2991 = vmatpush1.msra.mxu0 0.0
    %2992 = vmatprep.subr.mxu0 0.0
    %2993 = vmatpush1.msra.mxu0 0.0
    %2994 = vmatprep.subr.mxu0 0.0
    %2995 = vmatpush1.msra.mxu0 0.0
    %2996 = vmatprep.subr.mxu0 0.0
    %2997 = vmatpush1.msra.mxu0 0.0
    %2998 = vmatprep.subr.mxu0 0.0
    %2999 = vmatpush1.msra.mxu0 0.0
    %3000 = vmatprep.subr.mxu0 0.0
    %3001 = vmatpush1.msra.mxu0 0.0
    %3002 = vmatprep.subr.mxu0 0.0
    %3003 = vmatpush1.msra.mxu0 0.0
    %3004 = vmatprep.subr.mxu0 0.0
    %3005 = vmatpush1.msra.mxu0 0.0
    %3006 = vmatprep.subr.mxu0 0.0
    %3007 = vmatpush1.msra.mxu0 0.0
    %3008 = vmatprep.subr.mxu0 0.0
    %3009 = vmatpush1.msra.mxu0 0.0
    %3010 = vmatprep.subr.mxu0 0.0
    %3011 = vmatpush1.msra.mxu0 0.0
    %3012 = vmatprep.subr.mxu0 0.0
    %3013 = vmatpush1.msra.mxu0 0.0
    %3014 = vmatprep.subr.mxu0 0.0
    %3015 = vmatpush1.msra.mxu0 0.0
    %3016 = vmatprep.subr.mxu0 0.0
    %3017 = vmatpush1.msra.mxu0 0.0
    %3018 = vmatprep.subr.mxu0 0.0
    %3019 = vmatpush1.msra.mxu0 0.0
    %3020 = vmatprep.subr.mxu0 0.0
    %3021 = vmatpush1.msra.mxu0 0.0
    %3022 = vmatprep.subr.mxu0 0.0
    %3023 = vmatpush1.msra.mxu0 0.0
    %3024 = vmatprep.subr.mxu0 0.0
    %3025 = vmatpush1.msra.mxu0 0.0
    %3026 = vmatprep.subr.mxu0 0.0
    %3027 = vmatpush1.msra.mxu0 0.0
    %3028 = vmatprep.subr.mxu0 0.0
    %3029 = vmatpush1.msra.mxu0 0.0
    %3030 = vmatprep.mubr.f32.mxu0 0.0
    %3031 = vmatmul.mubr.f32.gmra.mrb[0].mxu0 %v2952
    %v3032 = vpop.f32.mrb[0].mxu0
    %v3033 = vadd.f32 0.0, %v3032
    %v3034 = vpop.f32.mrb[0].mxu0
    %v3035 = vadd.f32 0.0, %v3034
    %3036 = vdwg.mxu0
    %3037 = vmatprep.subr.mxu0 %v2964
    %3038 = vmatpush1.msra.mxu0 %v2961
    %3039 = vmatprep.subr.mxu0 0.0
    %3040 = vmatpush1.msra.mxu0 0.0
    %3041 = vmatprep.subr.mxu0 0.0
    %3042 = vmatpush1.msra.mxu0 0.0
    %3043 = vmatprep.subr.mxu0 0.0
    %3044 = vmatpush1.msra.mxu0 0.0
    %3045 = vmatprep.subr.mxu0 0.0
    %3046 = vmatpush1.msra.mxu0 0.0
    %3047 = vmatprep.subr.mxu0 0.0
    %3048 = vmatpush1.msra.mxu0 0.0
    %3049 = vmatprep.subr.mxu0 0.0
    %3050 = vmatpush1.msra.mxu0 0.0
    %3051 = vmatprep.subr.mxu0 0.0
    %3052 = vmatpush1.msra.mxu0 0.0
    %3053 = vmatprep.subr.mxu0 0.0
    %3054 = vmatpush1.msra.mxu0 0.0
    %3055 = vmatprep.subr.mxu0 0.0
    %3056 = vmatpush1.msra.mxu0 0.0
    %3057 = vmatprep.subr.mxu0 0.0
    %3058 = vmatpush1.msra.mxu0 0.0
    %3059 = vmatprep.subr.mxu0 0.0
    %3060 = vmatpush1.msra.mxu0 0.0
    %3061 = vmatprep.subr.mxu0 0.0
    %3062 = vmatpush1.msra.mxu0 0.0
    %3063 = vmatprep.subr.mxu0 0.0
    %3064 = vmatpush1.msra.mxu0 0.0
    %3065 = vmatprep.subr.mxu0 0.0
    %3066 = vmatpush1.msra.mxu0 0.0
    %3067 = vmatprep.subr.mxu0 0.0
    %3068 = vmatpush1.msra.mxu0 0.0
    %3069 = vmatprep.subr.mxu0 0.0
    %3070 = vmatpush1.msra.mxu0 0.0
    %3071 = vmatprep.subr.mxu0 0.0
    %3072 = vmatpush1.msra.mxu0 0.0
    %3073 = vmatprep.subr.mxu0 0.0
    %3074 = vmatpush1.msra.mxu0 0.0
    %3075 = vmatprep.subr.mxu0 0.0
    %3076 = vmatpush1.msra.mxu0 0.0
    %3077 = vmatprep.subr.mxu0 0.0
    %3078 = vmatpush1.msra.mxu0 0.0
    %3079 = vmatprep.subr.mxu0 0.0
    %3080 = vmatpush1.msra.mxu0 0.0
    %3081 = vmatprep.subr.mxu0 0.0
    %3082 = vmatpush1.msra.mxu0 0.0
    %3083 = vmatprep.subr.mxu0 0.0
    %3084 = vmatpush1.msra.mxu0 0.0
    %3085 = vmatprep.subr.mxu0 0.0
    %3086 = vmatpush1.msra.mxu0 0.0
    %3087 = vmatprep.subr.mxu0 0.0
    %3088 = vmatpush1.msra.mxu0 0.0
    %3089 = vmatprep.subr.mxu0 0.0
    %3090 = vmatpush1.msra.mxu0 0.0
    %3091 = vmatprep.subr.mxu0 0.0
    %3092 = vmatpush1.msra.mxu0 0.0
    %3093 = vmatprep.subr.mxu0 0.0
    %3094 = vmatpush1.msra.mxu0 0.0
    %3095 = vmatprep.subr.mxu0 0.0
    %3096 = vmatpush1.msra.mxu0 0.0
    %3097 = vmatprep.subr.mxu0 0.0
    %3098 = vmatpush1.msra.mxu0 0.0
    %3099 = vmatprep.subr.mxu0 0.0
    %3100 = vmatpush1.msra.mxu0 0.0
    %3101 = vmatprep.mubr.f32.mxu0 0.0
    %3102 = vmatmul.mubr.f32.gmra.mrb[0].mxu0 %v2952
    %v3103 = vpop.f32.mrb[0].mxu0
    %v3104 = vadd.f32 0.0, %v3103
    %v3105 = vpop.f32.mrb[0].mxu0
    %v3106 = vadd.f32 0.0, %v3105
    %3107 = vdwg.mxu0
    %v3108 = vadd.f32 %v2929, %v3033
    %v3109 = vadd.f32 %v2930, %v3035
    %v3110 = vadd.f32 %v2931, %v3104
    %v3111 = vadd.f32 %v2932, %v3106
    %3112 = vrot.lane.b32.xlu0 %v1880, 112
    %v3113 = vpop.permute.xlu0 %3112
    %3114 = vrot.lane.b32.xlu0 %v1881, 112
    %v3115 = vpop.permute.xlu0 %3114
    %3116 = vrot.lane.b32.xlu0 %v1882, 112
    %v3117 = vpop.permute.xlu0 %3116
    %3118 = vrot.lane.b32.xlu0 %v1883, 112
    %v3119 = vpop.permute.xlu0 %3118
    %v3120 = vsel %vm1421, %v3117, %v3119
    %v3121 = vsel %vm1421, %v3115, %v3117
    %v3122 = vsel %vm1421, %v3113, %v3115
    %v3123 = vsel %vm1421, %v3119, %v3113
    %v3124 = vmul.f32 %v3122, %v1432
    %v3125 = vmul.f32 %v3121, %v1436
    %v3126 = vmul.f32 %v3120, %v1440
    %v3127 = vmul.f32 %v3123, %v1444
    %s3128 = scalar_lea.vmem %s6, 28
    %v3129 = vld [vmem:[%s3128] sm:$0xf]
    %v3131 = vsel %vm86, %v3129, 0
    %v3134 = vsel %vm90, %v3124, 0
    %v3137 = vsel %vm90, %v3125, 0
    %v3140 = vsel %vm90, %v3126, 0
    %v3143 = vsel %vm90, %v3127, 0
    %3145 = vmatprep.subr.mxu0 %v3137
    %3146 = vmatpush1.msra.mxu0 %v3134
    %3147 = vmatprep.subr.mxu0 0.0
    %3148 = vmatpush1.msra.mxu0 0.0
    %3149 = vmatprep.subr.mxu0 0.0
    %3150 = vmatpush1.msra.mxu0 0.0
    %3151 = vmatprep.subr.mxu0 0.0
    %3152 = vmatpush1.msra.mxu0 0.0
    %3153 = vmatprep.subr.mxu0 0.0
    %3154 = vmatpush1.msra.mxu0 0.0
    %3155 = vmatprep.subr.mxu0 0.0
    %3156 = vmatpush1.msra.mxu0 0.0
    %3157 = vmatprep.subr.mxu0 0.0
    %3158 = vmatpush1.msra.mxu0 0.0
    %3159 = vmatprep.subr.mxu0 0.0
    %3160 = vmatpush1.msra.mxu0 0.0
    %3161 = vmatprep.subr.mxu0 0.0
    %3162 = vmatpush1.msra.mxu0 0.0
    %3163 = vmatprep.subr.mxu0 0.0
    %3164 = vmatpush1.msra.mxu0 0.0
    %3165 = vmatprep.subr.mxu0 0.0
    %3166 = vmatpush1.msra.mxu0 0.0
    %3167 = vmatprep.subr.mxu0 0.0
    %3168 = vmatpush1.msra.mxu0 0.0
    %3169 = vmatprep.subr.mxu0 0.0
    %3170 = vmatpush1.msra.mxu0 0.0
    %3171 = vmatprep.subr.mxu0 0.0
    %3172 = vmatpush1.msra.mxu0 0.0
    %3173 = vmatprep.subr.mxu0 0.0
    %3174 = vmatpush1.msra.mxu0 0.0
    %3175 = vmatprep.subr.mxu0 0.0
    %3176 = vmatpush1.msra.mxu0 0.0
    %3177 = vmatprep.subr.mxu0 0.0
    %3178 = vmatpush1.msra.mxu0 0.0
    %3179 = vmatprep.subr.mxu0 0.0
    %3180 = vmatpush1.msra.mxu0 0.0
    %3181 = vmatprep.subr.mxu0 0.0
    %3182 = vmatpush1.msra.mxu0 0.0
    %3183 = vmatprep.subr.mxu0 0.0
    %3184 = vmatpush1.msra.mxu0 0.0
    %3185 = vmatprep.subr.mxu0 0.0
    %3186 = vmatpush1.msra.mxu0 0.0
    %3187 = vmatprep.subr.mxu0 0.0
    %3188 = vmatpush1.msra.mxu0 0.0
    %3189 = vmatprep.subr.mxu0 0.0
    %3190 = vmatpush1.msra.mxu0 0.0
    %3191 = vmatprep.subr.mxu0 0.0
    %3192 = vmatpush1.msra.mxu0 0.0
    %3193 = vmatprep.subr.mxu0 0.0
    %3194 = vmatpush1.msra.mxu0 0.0
    %3195 = vmatprep.subr.mxu0 0.0
    %3196 = vmatpush1.msra.mxu0 0.0
    %3197 = vmatprep.subr.mxu0 0.0
    %3198 = vmatpush1.msra.mxu0 0.0
    %3199 = vmatprep.subr.mxu0 0.0
    %3200 = vmatpush1.msra.mxu0 0.0
    %3201 = vmatprep.subr.mxu0 0.0
    %3202 = vmatpush1.msra.mxu0 0.0
    %3203 = vmatprep.subr.mxu0 0.0
    %3204 = vmatpush1.msra.mxu0 0.0
    %3205 = vmatprep.subr.mxu0 0.0
    %3206 = vmatpush1.msra.mxu0 0.0
    %3207 = vmatprep.subr.mxu0 0.0
    %3208 = vmatpush1.msra.mxu0 0.0
    %3209 = vmatprep.mubr.f32.mxu0 0.0
    %3210 = vmatmul.mubr.f32.gmra.mrb[0].mxu0 %v3131
    %v3211 = vpop.f32.mrb[0].mxu0
    %v3212 = vadd.f32 0.0, %v3211
    %v3213 = vpop.f32.mrb[0].mxu0
    %v3214 = vadd.f32 0.0, %v3213
    %3215 = vdwg.mxu0
    %3216 = vmatprep.subr.mxu0 %v3143
    %3217 = vmatpush1.msra.mxu0 %v3140
    %3218 = vmatprep.subr.mxu0 0.0
    %3219 = vmatpush1.msra.mxu0 0.0
    %3220 = vmatprep.subr.mxu0 0.0
    %3221 = vmatpush1.msra.mxu0 0.0
    %3222 = vmatprep.subr.mxu0 0.0
    %3223 = vmatpush1.msra.mxu0 0.0
    %3224 = vmatprep.subr.mxu0 0.0
    %3225 = vmatpush1.msra.mxu0 0.0
    %3226 = vmatprep.subr.mxu0 0.0
    %3227 = vmatpush1.msra.mxu0 0.0
    %3228 = vmatprep.subr.mxu0 0.0
    %3229 = vmatpush1.msra.mxu0 0.0
    %3230 = vmatprep.subr.mxu0 0.0
    %3231 = vmatpush1.msra.mxu0 0.0
    %3232 = vmatprep.subr.mxu0 0.0
    %3233 = vmatpush1.msra.mxu0 0.0
    %3234 = vmatprep.subr.mxu0 0.0
    %3235 = vmatpush1.msra.mxu0 0.0
    %3236 = vmatprep.subr.mxu0 0.0
    %3237 = vmatpush1.msra.mxu0 0.0
    %3238 = vmatprep.subr.mxu0 0.0
    %3239 = vmatpush1.msra.mxu0 0.0
    %3240 = vmatprep.subr.mxu0 0.0
    %3241 = vmatpush1.msra.mxu0 0.0
    %3242 = vmatprep.subr.mxu0 0.0
    %3243 = vmatpush1.msra.mxu0 0.0
    %3244 = vmatprep.subr.mxu0 0.0
    %3245 = vmatpush1.msra.mxu0 0.0
    %3246 = vmatprep.subr.mxu0 0.0
    %3247 = vmatpush1.msra.mxu0 0.0
    %3248 = vmatprep.subr.mxu0 0.0
    %3249 = vmatpush1.msra.mxu0 0.0
    %3250 = vmatprep.subr.mxu0 0.0
    %3251 = vmatpush1.msra.mxu0 0.0
    %3252 = vmatprep.subr.mxu0 0.0
    %3253 = vmatpush1.msra.mxu0 0.0
    %3254 = vmatprep.subr.mxu0 0.0
    %3255 = vmatpush1.msra.mxu0 0.0
    %3256 = vmatprep.subr.mxu0 0.0
    %3257 = vmatpush1.msra.mxu0 0.0
    %3258 = vmatprep.subr.mxu0 0.0
    %3259 = vmatpush1.msra.mxu0 0.0
    %3260 = vmatprep.subr.mxu0 0.0
    %3261 = vmatpush1.msra.mxu0 0.0
    %3262 = vmatprep.subr.mxu0 0.0
    %3263 = vmatpush1.msra.mxu0 0.0
    %3264 = vmatprep.subr.mxu0 0.0
    %3265 = vmatpush1.msra.mxu0 0.0
    %3266 = vmatprep.subr.mxu0 0.0
    %3267 = vmatpush1.msra.mxu0 0.0
    %3268 = vmatprep.subr.mxu0 0.0
    %3269 = vmatpush1.msra.mxu0 0.0
    %3270 = vmatprep.subr.mxu0 0.0
    %3271 = vmatpush1.msra.mxu0 0.0
    %3272 = vmatprep.subr.mxu0 0.0
    %3273 = vmatpush1.msra.mxu0 0.0
    %3274 = vmatprep.subr.mxu0 0.0
    %3275 = vmatpush1.msra.mxu0 0.0
    %3276 = vmatprep.subr.mxu0 0.0
    %3277 = vmatpush1.msra.mxu0 0.0
    %3278 = vmatprep.subr.mxu0 0.0
    %3279 = vmatpush1.msra.mxu0 0.0
    %3280 = vmatprep.mubr.f32.mxu0 0.0
    %3281 = vmatmul.mubr.f32.gmra.mrb[0].mxu0 %v3131
    %v3282 = vpop.f32.mrb[0].mxu0
    %v3283 = vadd.f32 0.0, %v3282
    %v3284 = vpop.f32.mrb[0].mxu0
    %v3285 = vadd.f32 0.0, %v3284
    %3286 = vdwg.mxu0
    %v3287 = vadd.f32 %v3108, %v3212
    %v3288 = vadd.f32 %v3109, %v3214
    %v3289 = vadd.f32 %v3110, %v3283
    %v3290 = vadd.f32 %v3111, %v3285
    %3291 = vrot.lane.b32.xlu0 %v1880, 111
    %v3292 = vpop.permute.xlu0 %3291
    %3293 = vrot.lane.b32.xlu0 %v1881, 111
    %v3294 = vpop.permute.xlu0 %3293
    %3295 = vrot.lane.b32.xlu0 %v1882, 111
    %v3296 = vpop.permute.xlu0 %3295
    %3297 = vrot.lane.b32.xlu0 %v1883, 111
    %v3298 = vpop.permute.xlu0 %3297
    %v3299 = vsel %vm1624, %v3296, %v3298
    %v3300 = vsel %vm1624, %v3294, %v3296
    %v3301 = vsel %vm1624, %v3292, %v3294
    %v3302 = vsel %vm1624, %v3298, %v3292
    %v3303 = vmul.f32 %v3301, %v1635
    %v3304 = vmul.f32 %v3300, %v1639
    %v3305 = vmul.f32 %v3299, %v1643
    %v3306 = vmul.f32 %v3302, %v1647
    %s3307 = scalar_lea.vmem %s6, 32
    %v3308 = vld [vmem:[%s3307] sm:$0xf]
    %v3310 = vsel %vm86, %v3308, 0
    %v3313 = vsel %vm90, %v3303, 0
    %v3316 = vsel %vm90, %v3304, 0
    %v3319 = vsel %vm90, %v3305, 0
    %v3322 = vsel %vm90, %v3306, 0
    %3324 = vmatprep.subr.mxu0 %v3316
    %3325 = vmatpush1.msra.mxu0 %v3313
    %3326 = vmatprep.subr.mxu0 0.0
    %3327 = vmatpush1.msra.mxu0 0.0
    %3328 = vmatprep.subr.mxu0 0.0
    %3329 = vmatpush1.msra.mxu0 0.0
    %3330 = vmatprep.subr.mxu0 0.0
    %3331 = vmatpush1.msra.mxu0 0.0
    %3332 = vmatprep.subr.mxu0 0.0
    %3333 = vmatpush1.msra.mxu0 0.0
    %3334 = vmatprep.subr.mxu0 0.0
    %3335 = vmatpush1.msra.mxu0 0.0
    %3336 = vmatprep.subr.mxu0 0.0
    %3337 = vmatpush1.msra.mxu0 0.0
    %3338 = vmatprep.subr.mxu0 0.0
    %3339 = vmatpush1.msra.mxu0 0.0
    %3340 = vmatprep.subr.mxu0 0.0
    %3341 = vmatpush1.msra.mxu0 0.0
    %3342 = vmatprep.subr.mxu0 0.0
    %3343 = vmatpush1.msra.mxu0 0.0
    %3344 = vmatprep.subr.mxu0 0.0
    %3345 = vmatpush1.msra.mxu0 0.0
    %3346 = vmatprep.subr.mxu0 0.0
    %3347 = vmatpush1.msra.mxu0 0.0
    %3348 = vmatprep.subr.mxu0 0.0
    %3349 = vmatpush1.msra.mxu0 0.0
    %3350 = vmatprep.subr.mxu0 0.0
    %3351 = vmatpush1.msra.mxu0 0.0
    %3352 = vmatprep.subr.mxu0 0.0
    %3353 = vmatpush1.msra.mxu0 0.0
    %3354 = vmatprep.subr.mxu0 0.0
    %3355 = vmatpush1.msra.mxu0 0.0
    %3356 = vmatprep.subr.mxu0 0.0
    %3357 = vmatpush1.msra.mxu0 0.0
    %3358 = vmatprep.subr.mxu0 0.0
    %3359 = vmatpush1.msra.mxu0 0.0
    %3360 = vmatprep.subr.mxu0 0.0
    %3361 = vmatpush1.msra.mxu0 0.0
    %3362 = vmatprep.subr.mxu0 0.0
    %3363 = vmatpush1.msra.mxu0 0.0
    %3364 = vmatprep.subr.mxu0 0.0
    %3365 = vmatpush1.msra.mxu0 0.0
    %3366 = vmatprep.subr.mxu0 0.0
    %3367 = vmatpush1.msra.mxu0 0.0
    %3368 = vmatprep.subr.mxu0 0.0
    %3369 = vmatpush1.msra.mxu0 0.0
    %3370 = vmatprep.subr.mxu0 0.0
    %3371 = vmatpush1.msra.mxu0 0.0
    %3372 = vmatprep.subr.mxu0 0.0
    %3373 = vmatpush1.msra.mxu0 0.0
    %3374 = vmatprep.subr.mxu0 0.0
    %3375 = vmatpush1.msra.mxu0 0.0
    %3376 = vmatprep.subr.mxu0 0.0
    %3377 = vmatpush1.msra.mxu0 0.0
    %3378 = vmatprep.subr.mxu0 0.0
    %3379 = vmatpush1.msra.mxu0 0.0
    %3380 = vmatprep.subr.mxu0 0.0
    %3381 = vmatpush1.msra.mxu0 0.0
    %3382 = vmatprep.subr.mxu0 0.0
    %3383 = vmatpush1.msra.mxu0 0.0
    %3384 = vmatprep.subr.mxu0 0.0
    %3385 = vmatpush1.msra.mxu0 0.0
    %3386 = vmatprep.subr.mxu0 0.0
    %3387 = vmatpush1.msra.mxu0 0.0
    %3388 = vmatprep.mubr.f32.mxu0 0.0
    %3389 = vmatmul.mubr.f32.gmra.mrb[0].mxu0 %v3310
    %v3390 = vpop.f32.mrb[0].mxu0
    %v3391 = vadd.f32 0.0, %v3390
    %v3392 = vpop.f32.mrb[0].mxu0
    %v3393 = vadd.f32 0.0, %v3392
    %3394 = vdwg.mxu0
    %3395 = vmatprep.subr.mxu0 %v3322
    %3396 = vmatpush1.msra.mxu0 %v3319
    %3397 = vmatprep.subr.mxu0 0.0
    %3398 = vmatpush1.msra.mxu0 0.0
    %3399 = vmatprep.subr.mxu0 0.0
    %3400 = vmatpush1.msra.mxu0 0.0
    %3401 = vmatprep.subr.mxu0 0.0
    %3402 = vmatpush1.msra.mxu0 0.0
    %3403 = vmatprep.subr.mxu0 0.0
    %3404 = vmatpush1.msra.mxu0 0.0
    %3405 = vmatprep.subr.mxu0 0.0
    %3406 = vmatpush1.msra.mxu0 0.0
    %3407 = vmatprep.subr.mxu0 0.0
    %3408 = vmatpush1.msra.mxu0 0.0
    %3409 = vmatprep.subr.mxu0 0.0
    %3410 = vmatpush1.msra.mxu0 0.0
    %3411 = vmatprep.subr.mxu0 0.0
    %3412 = vmatpush1.msra.mxu0 0.0
    %3413 = vmatprep.subr.mxu0 0.0
    %3414 = vmatpush1.msra.mxu0 0.0
    %3415 = vmatprep.subr.mxu0 0.0
    %3416 = vmatpush1.msra.mxu0 0.0
    %3417 = vmatprep.subr.mxu0 0.0
    %3418 = vmatpush1.msra.mxu0 0.0
    %3419 = vmatprep.subr.mxu0 0.0
    %3420 = vmatpush1.msra.mxu0 0.0
    %3421 = vmatprep.subr.mxu0 0.0
    %3422 = vmatpush1.msra.mxu0 0.0
    %3423 = vmatprep.subr.mxu0 0.0
    %3424 = vmatpush1.msra.mxu0 0.0
    %3425 = vmatprep.subr.mxu0 0.0
    %3426 = vmatpush1.msra.mxu0 0.0
    %3427 = vmatprep.subr.mxu0 0.0
    %3428 = vmatpush1.msra.mxu0 0.0
    %3429 = vmatprep.subr.mxu0 0.0
    %3430 = vmatpush1.msra.mxu0 0.0
    %3431 = vmatprep.subr.mxu0 0.0
    %3432 = vmatpush1.msra.mxu0 0.0
    %3433 = vmatprep.subr.mxu0 0.0
    %3434 = vmatpush1.msra.mxu0 0.0
    %3435 = vmatprep.subr.mxu0 0.0
    %3436 = vmatpush1.msra.mxu0 0.0
    %3437 = vmatprep.subr.mxu0 0.0
    %3438 = vmatpush1.msra.mxu0 0.0
    %3439 = vmatprep.subr.mxu0 0.0
    %3440 = vmatpush1.msra.mxu0 0.0
    %3441 = vmatprep.subr.mxu0 0.0
    %3442 = vmatpush1.msra.mxu0 0.0
    %3443 = vmatprep.subr.mxu0 0.0
    %3444 = vmatpush1.msra.mxu0 0.0
    %3445 = vmatprep.subr.mxu0 0.0
    %3446 = vmatpush1.msra.mxu0 0.0
    %3447 = vmatprep.subr.mxu0 0.0
    %3448 = vmatpush1.msra.mxu0 0.0
    %3449 = vmatprep.subr.mxu0 0.0
    %3450 = vmatpush1.msra.mxu0 0.0
    %3451 = vmatprep.subr.mxu0 0.0
    %3452 = vmatpush1.msra.mxu0 0.0
    %3453 = vmatprep.subr.mxu0 0.0
    %3454 = vmatpush1.msra.mxu0 0.0
    %3455 = vmatprep.subr.mxu0 0.0
    %3456 = vmatpush1.msra.mxu0 0.0
    %3457 = vmatprep.subr.mxu0 0.0
    %3458 = vmatpush1.msra.mxu0 0.0
    %3459 = vmatprep.mubr.f32.mxu0 0.0
    %3460 = vmatmul.mubr.f32.gmra.mrb[0].mxu0 %v3310
    %v3461 = vpop.f32.mrb[0].mxu0
    %v3462 = vadd.f32 0.0, %v3461
    %v3463 = vpop.f32.mrb[0].mxu0
    %v3464 = vadd.f32 0.0, %v3463
    %3465 = vdwg.mxu0
    %v3466 = vadd.f32 %v3287, %v3391
    %v3467 = vadd.f32 %v3288, %v3393
    %v3468 = vadd.f32 %v3289, %v3462
    %v3469 = vadd.f32 %v3290, %v3464
    %v3470 = vsel %vm90, %v3466, 0.0
    %v3471 = vsel %vm90, %v3467, 0.0
    %v3472 = vadd.f32 %v3470, %v3471
    %v3473 = vsel %vm90, %v3468, 0.0
    %v3474 = vadd.f32 %v3472, %v3473
    %v3475 = vsel %vm90, %v3469, 0.0
    %v3476 = vadd.f32 %v3474, %v3475
    %3477 = vadd.xlane.f32.xlu0 %v3476
    %v3478 = vpop.xlane.xlu0 %3477
    %v3479 = vmul.f32 %v3466, %v3466
    %v3480 = vmul.f32 %v3467, %v3467
    %v3481 = vmul.f32 %v3468, %v3468
    %v3482 = vmul.f32 %v3469, %v3469
    %v3483 = vsel %vm90, %v3479, 0.0
    %v3484 = vsel %vm90, %v3480, 0.0
    %v3485 = vadd.f32 %v3483, %v3484
    %v3486 = vsel %vm90, %v3481, 0.0
    %v3487 = vadd.f32 %v3485, %v3486
    %v3488 = vsel %vm90, %v3482, 0.0
    %v3489 = vadd.f32 %v3487, %v3488
    %3490 = vadd.xlane.f32.xlu0 %v3489
    %v3491 = vpop.xlane.xlu0 %3490
    %v3492 = vmul.f32 %v3478, 0.001953125
    %v3493 = vmul.f32 %v3491, 0.001953125
    %v3494 = vmul.f32 %v3492, %v3492
    %v3495 = vsub.f32 %v3493, %v3494
    %v3496 = vld [vmem:[%s7] sm:$0xf]
    %v3497 = vadd.f32 %v3495, 0.8
    %v3498 = vrsqrt.pop %v3497
    %v3499 = vmul.f32 %v3496, %v3498
    %v3500 = vld [vmem:[%s8] sm:$0xf]
    %v3501 = vmul.f32 %v3492, %v3499
    %v3502 = vsub.f32 %v3500, %v3501
    %3504 = vset.pattern.permute.xlu0 0
    %3505 = vperm.xlu0 %3504, %v3499
    %v3506 = vpop.permute.xlu0 %3505
    %v3508 = vmul.f32 %v3466, %v3506
    %v3509 = vmul.f32 %v3467, %v3506
    %v3510 = vmul.f32 %v3468, %v3506
    %v3511 = vmul.f32 %v3469, %v3506
    %3513 = vset.pattern.permute.xlu0 0
    %3514 = vperm.xlu0 %3513, %v3502
    %v3515 = vpop.permute.xlu0 %3514
    %v3517 = vadd.f32 %v3508, %v3515
    %v3518 = vadd.f32 %v3509, %v3515
    %v3519 = vadd.f32 %v3510, %v3515
    %v3520 = vadd.f32 %v3511, %v3515
    %v3525 = vcombine.low %v3517, %v3518
    %v3526 = vcombine.low %v3519, %v3520
    %v3529 = vadd.f32 %v34, %v3525
    %v3530 = vadd.f32 %v35, %v3526
    %3531 = vst [vmem:[#allocation3] sm:$0xff] %v3529
    %3532 = vst [vmem:[#allocation3 + $0x8] sm:$0xff] %v3530
    // Predicated region
    $region38: #{tpu_custom_call.1} parent=1 // pred_check
      _
    $region39: #{tpu_custom_call.1} parent=1 // pred_check_branch
      %3534 = sbr.rel (0) target = $region41
    $region40: #{tpu_custom_call.1} parent=1 // pred_region
      %s3536 = ssub.s32 256, 256
      %3537 = vsyncadd [#allocation4], %s3536
      %s3539 = sshll.u32 [#allocation3], 4
      %s3540 = int_to_ptr.vmem [resolvable:$true] %s3539
      %3542 = dma.vmem_to_hbm [thread:$0]  %s3540, 256, %s9, [#allocation4]
    $region41: #{tpu_custom_call.1} parent=1 // pred_fallthru
      _
    // Predicated region
    $region42: #{tpu_custom_call.1} parent=1 // pred_check
      _
    $region43: #{tpu_custom_call.1} parent=1 // pred_check_branch
      %3544 = sbr.rel (0) target = $region45
    $region44: #{tpu_custom_call.1} parent=1 // pred_region
      %3545 = dma.done [#allocation4], 256
    $region45: #{tpu_custom_call.1} parent=1 // pred_fallthru
      _
    %3546 = vsyncpa [#allocation4], 1

</llo_original>
